<compile_context>
chip_gen: v6e
topology: v6e:2x2x1
jax: 0.10.0
libtpu: 0.0.40
codegen_flags: <defaults>
</compile_context>

<pallas_src>
import jax
import jax.numpy as jnp
from jax.experimental import pallas as pl
from jax.experimental.pallas import tpu as pltpu


def _ceil_to(x, m):
    return -(-x // m) * m


def _channel_rows(num_channels_needed, c0, growth, c0_pad, gp):
    """Map real DenseBlock channel index -> padded slab row index."""
    rows = []
    for c in range(num_channels_needed):
        if c < c0:
            rows.append(c)
        else:
            j = (c - c0) // growth
            rows.append(c0_pad + j * gp + (c - c0) % growth)
    return rows


def make_dense_block_kernel(num_convs, c0_pad, gp, n, h, w, lp_pad, eps):
    wp = w + 2
    nl = n * lp_pad
    inv_count = 1.0 / float(n * h * w)

    def kernel(*refs):
        x_ref, imask_ref = refs[0], refs[1]
        layer_refs = refs[2:2 + 4 * num_convs]
        out_ref = refs[2 + 4 * num_convs]                 # (rows_total, nl) slab
        xn_ref, sum_ref, sq_ref = refs[3 + 4 * num_convs:6 + 4 * num_convs]

        imask = imask_ref[...]                            # (1, nl): 1 on interior pixels

        # Input channel block -> slab, plus its cached BN statistics.
        x = x_ref[...]                                    # (c0_pad, nl), zero off-interior
        out_ref[pl.ds(0, c0_pad), :] = x
        sum_ref[pl.ds(0, c0_pad), :] = jnp.sum(x, axis=1, keepdims=True)
        sq_ref[pl.ds(0, c0_pad), :] = jnp.sum(x * x, axis=1, keepdims=True)

        for l in range(num_convs):
            cpad = c0_pad + l * gp
            g_ref, bt_ref, w_ref, b_ref = layer_refs[4 * l:4 * l + 4]

            # ---- BatchNorm2d (batch stats) from cached sum / sum-of-squares ----
            mean = sum_ref[pl.ds(0, cpad), :] * inv_count              # (cpad, 1)
            var = jnp.maximum(
                sq_ref[pl.ds(0, cpad), :] * inv_count - mean * mean, 0.0)
            scale = g_ref[...] * jax.lax.rsqrt(var + eps)              # (cpad, 1)
            shift = bt_ref[...] - mean * scale

            # ---- BN + ReLU; borders forced to exact zero (conv zero padding) ----
            xs = out_ref[pl.ds(0, cpad), :]                            # (cpad, nl)
            xn_ref[pl.ds(0, cpad), :] = (
                jnp.maximum(xs * scale + shift, 0.0) * imask)

            # ---- 3x3 conv: 9 lane-rolled full-row taps accumulated on the MXU ----
            # tap[p] must equal xn[p + d]; pltpu.roll follows jnp.roll semantics
            # (out[i] = x[i - shift]), so shift = (-d) mod nl.  The wrap only
            # touches non-interior lanes, which are masked away below.
            y = jnp.zeros((gp, nl), jnp.float32)
            for t in range(9):
                d = (t // 3 - 1) * wp + (t % 3 - 1)
                tap = xn_ref[pl.ds(0, cpad), :]
                if d != 0:
                    tap = pltpu.roll(tap, shift=(-d) % nl, axis=1)
                y = y + jnp.dot(w_ref[pl.ds(t * gp, gp), :], tap,
                                preferred_element_type=jnp.float32)
            y = (y + b_ref[...]) * imask                               # (gp, nl)

            # ---- dense concat: ONE aligned full-row store of the new block ----
            row0 = c0_pad + l * gp
            out_ref[pl.ds(row0, gp), :] = y
            if l + 1 < num_convs:  # cache stats of the new channels for later layers
                sum_ref[pl.ds(row0, gp), :] = jnp.sum(y, axis=1, keepdims=True)
                sq_ref[pl.ds(row0, gp), :] = jnp.sum(y * y, axis=1, keepdims=True)

    return kernel


def dense_block_forward(x_nchw, params, eps=1e-5):
    """DenseBlock.forward for x in NCHW; returns (N, Ctot, H, W)."""
    x_nchw = x_nchw.astype(jnp.float32)
    n, c0, h, w = x_nchw.shape
    num_convs = len(params)
    growth = params[0][3].shape[0]
    hp, wp = h + 2, w + 2
    lp = hp * wp
    lp_pad = _ceil_to(lp, 128)           # lane-align each padded image (324 -> 384)
    nl = n * lp_pad
    c0_pad = _ceil_to(c0, 8)             # sublane-align the input channel block
    gp = _ceil_to(growth, 8)             # sublane-align each appended block
    rows_total = c0_pad + num_convs * gp
    ctot = c0 + num_convs * growth

    # Channels -> 8-aligned sublane blocks; (batch, 128-padded padded-spatial) -> lanes.
    xp = jnp.pad(x_nchw, ((0, 0), (0, 0), (1, 1), (1, 1)))
    x2 = jnp.transpose(xp, (1, 0, 2, 3)).reshape(c0, n, lp)
    x2 = jnp.pad(x2, ((0, c0_pad - c0), (0, 0), (0, lp_pad - lp))).reshape(c0_pad, nl)

    # Interior-pixel mask over the padded/flattened/lane-padded layout.
    m1 = jnp.zeros((hp, wp), jnp.float32).at[1:h + 1, 1:w + 1].set(1.0).reshape(lp)
    m1 = jnp.pad(m1, (0, lp_pad - lp))
    imask = jnp.tile(m1, (n,)).reshape(1, nl)

    inputs = [x2, imask]
    in_specs = [pl.BlockSpec((c0_pad, nl), lambda i: (0, 0)),
                pl.BlockSpec((1, nl), lambda i: (0, 0))]

    for idx, (gamma, beta, wk, b) in enumerate(params):
        c_l = c0 + idx * growth
        cpad_l = c0_pad + idx * gp
        rows_idx = jnp.array(_channel_rows(c_l, c0, growth, c0_pad, gp), jnp.int32)

        gpad = jnp.zeros((cpad_l,), jnp.float32).at[rows_idx].set(
            gamma.astype(jnp.float32)).reshape(cpad_l, 1)
        bpad = jnp.zeros((cpad_l,), jnp.float32).at[rows_idx].set(
            beta.astype(jnp.float32)).reshape(cpad_l, 1)

        # w[kh, kw, cin, cout] -> per-tap (cout, slab_row) blocks, zero on pad rows.
        wt = jnp.transpose(wk.astype(jnp.float32), (0, 1, 3, 2)).reshape(9, growth, c_l)
        w_big = jnp.zeros((9, gp, cpad_l), jnp.float32).at[:, :growth, rows_idx].set(
            wt).reshape(9 * gp, cpad_l)

        bias = jnp.zeros((gp, 1), jnp.float32).at[:growth, 0].set(
            b.astype(jnp.float32))

        inputs += [gpad, bpad, w_big, bias]
        in_specs += [pl.BlockSpec((cpad_l, 1), lambda i: (0, 0)),
                     pl.BlockSpec((cpad_l, 1), lambda i: (0, 0)),
                     pl.BlockSpec((9 * gp, cpad_l), lambda i: (0, 0)),
                     pl.BlockSpec((gp, 1), lambda i: (0, 0))]

    kernel = make_dense_block_kernel(num_convs, c0_pad, gp, n, h, w, lp_pad, eps)

    out2 = pl.pallas_call(
        kernel,
        out_shape=jax.ShapeDtypeStruct((rows_total, nl), jnp.float32),
        grid_spec=pltpu.PrefetchScalarGridSpec(
            num_scalar_prefetch=0,
            grid=(1,),
            in_specs=in_specs,
            out_specs=pl.BlockSpec((rows_total, nl), lambda i: (0, 0)),
            scratch_shapes=[
                # BN+ReLU activation staging (largest layer's padded channel count).
                pltpu.VMEM((c0_pad + (num_convs - 1) * gp, nl), jnp.float32),
                pltpu.VMEM((rows_total, 1), jnp.float32),   # cached per-channel sum
                pltpu.VMEM((rows_total, 1), jnp.float32),   # cached per-channel sum(x^2)
            ]),
        compiler_params=pltpu.CompilerParams(
            dimension_semantics=("arbitrary",)),
    )(*inputs)

    # Un-pad: drop lane padding, pad borders and padded channel rows.
    out = out2.reshape(rows_total, n, lp_pad)[:, :, :lp]
    out = out.reshape(rows_total, n, hp, wp)[:, :, 1:h + 1, 1:w + 1]
    real_rows = jnp.array(_channel_rows(ctot, c0, growth, c0_pad, gp), jnp.int32)
    out = out[real_rows]                                   # (ctot, n, h, w)
    return jnp.transpose(out, (1, 0, 2, 3))


def init_dense_block_params(key, num_convs, input_channels, num_channels):
    """Deterministic params matching nn.BatchNorm2d / nn.Conv2d shapes (HWIO)."""
    params = []
    for i in range(num_convs):
        cin = input_channels + i * num_channels
        key, k1, k2, k3, k4 = jax.random.split(key, 5)
        gamma = 1.0 + 0.1 * jax.random.normal(k1, (cin,), jnp.float32)
        beta = 0.1 * jax.random.normal(k2, (cin,), jnp.float32)
        w = 0.1 * jax.random.normal(k3, (3, 3, cin, num_channels), jnp.float32)
        b = 0.1 * jax.random.normal(k4, (num_channels,), jnp.float32)
        params.append((gamma, beta, w, b))
    return params


def dense_block_reference(x_nchw, params, eps=1e-5):
    """Pure-JAX reference (lax.conv) for correctness checking."""
    x = x_nchw
    for gamma, beta, w, b in params:
        mean = jnp.mean(x, axis=(0, 2, 3), keepdims=True)
        var = jnp.mean(jnp.square(x - mean), axis=(0, 2, 3), keepdims=True)
        xn = (x - mean) / jnp.sqrt(var + eps) * gamma[None, :, None, None] \
             + beta[None, :, None, None]
        xr = jnp.maximum(xn, 0.0)
        y = jax.lax.conv_general_dilated(
            xr, w, window_strides=(1, 1), padding="SAME",
            dimension_numbers=("NCHW", "HWIO", "NCHW")) + b[None, :, None, None]
        x = jnp.concatenate([x, y], axis=1)
    return x


if __name__ == "__main__":
    # DenseBlock(num_convs=2, input_channels=4, num_channels=8), input (2,4,16,16) NCHW.
    num_convs, input_channels, num_channels = 2, 4, 8
    N, H, W = 2, 16, 16

    key = jax.random.PRNGKey(0)
    key, kx = jax.random.split(key)
    x_nchw = jax.random.normal(kx, (N, input_channels, H, W), jnp.float32)

    params = init_dense_block_params(key, num_convs, input_channels, num_channels)

    out = jax.block_until_ready(dense_block_forward(x_nchw, params))

    expected_channels = input_channels + num_convs * num_channels
    assert out.shape == (N, expected_channels, H, W), out.shape

    ref = jax.block_until_ready(dense_block_reference(x_nchw, params))
    assert jnp.allclose(out, ref, atol=1e-3, rtol=1e-3), (
        float(jnp.max(jnp.abs(out - ref))))

    print("KERNEL_OK")
</pallas_src>

<mosaic_0001>
module attributes {stable_mosaic.version = 11 : i64} {
  func.func @kernel(%arg0: i32, %arg1: memref<8x768xf32, #tpu.memory_space<vmem>>, %arg2: memref<1x768xf32, #tpu.memory_space<vmem>>, %arg3: memref<8x1xf32, #tpu.memory_space<vmem>>, %arg4: memref<8x1xf32, #tpu.memory_space<vmem>>, %arg5: memref<72x8xf32, #tpu.memory_space<vmem>>, %arg6: memref<8x1xf32, #tpu.memory_space<vmem>>, %arg7: memref<16x1xf32, #tpu.memory_space<vmem>>, %arg8: memref<16x1xf32, #tpu.memory_space<vmem>>, %arg9: memref<72x16xf32, #tpu.memory_space<vmem>>, %arg10: memref<8x1xf32, #tpu.memory_space<vmem>>, %arg11: memref<24x768xf32, #tpu.memory_space<vmem>>, %arg12: memref<16x768xf32, #tpu.memory_space<vmem>>, %arg13: memref<24x1xf32, #tpu.memory_space<vmem>>, %arg14: memref<24x1xf32, #tpu.memory_space<vmem>>) attributes {dimension_semantics = [#tpu.dimension_semantics<arbitrary>], iteration_bounds = array<i64: 1>, scalar_prefetch = 0 : i64, scratch_operands = 3 : i64, tpu.core_type = #tpu.core_type<tc>, window_params = [{pipeline_mode = #tpu.pipeline_mode<synchronous>, transform_indices = @transform_0, window_bounds = array<i64: 8, 768>}, {pipeline_mode = #tpu.pipeline_mode<synchronous>, transform_indices = @transform_1, window_bounds = array<i64: 1, 768>}, {pipeline_mode = #tpu.pipeline_mode<synchronous>, transform_indices = @transform_2, window_bounds = array<i64: 8, 1>}, {pipeline_mode = #tpu.pipeline_mode<synchronous>, transform_indices = @transform_3, window_bounds = array<i64: 8, 1>}, {pipeline_mode = #tpu.pipeline_mode<synchronous>, transform_indices = @transform_4, window_bounds = array<i64: 72, 8>}, {pipeline_mode = #tpu.pipeline_mode<synchronous>, transform_indices = @transform_5, window_bounds = array<i64: 8, 1>}, {pipeline_mode = #tpu.pipeline_mode<synchronous>, transform_indices = @transform_6, window_bounds = array<i64: 16, 1>}, {pipeline_mode = #tpu.pipeline_mode<synchronous>, transform_indices = @transform_7, window_bounds = array<i64: 16, 1>}, {pipeline_mode = #tpu.pipeline_mode<synchronous>, transform_indices = @transform_8, window_bounds = array<i64: 72, 16>}, {pipeline_mode = #tpu.pipeline_mode<synchronous>, transform_indices = @transform_9, window_bounds = array<i64: 8, 1>}, {pipeline_mode = #tpu.pipeline_mode<synchronous>, transform_indices = @transform_10, window_bounds = array<i64: 24, 768>}]} {
    %c0 = arith.constant 0 : index
    %c0_0 = arith.constant 0 : index
    %0 = vector.load %arg2[%c0, %c0_0] : memref<1x768xf32, #tpu.memory_space<vmem>>, vector<1x768xf32>
    %c0_1 = arith.constant 0 : index
    %c0_2 = arith.constant 0 : index
    %1 = vector.load %arg1[%c0_1, %c0_2] : memref<8x768xf32, #tpu.memory_space<vmem>>, vector<8x768xf32>
    %c0_3 = arith.constant 0 : index
    %c0_4 = arith.constant 0 : index
    %2 = vector.load %arg11[%c0_3, %c0_4] : memref<24x768xf32, #tpu.memory_space<vmem>>, vector<8x768xf32>
    tpu.vector_store %arg11[%c0_3, %c0_4], %1 {strides = array<i32>} : memref<24x768xf32, #tpu.memory_space<vmem>>, vector<8x768xf32>,
    %cst = arith.constant dense<0.000000e+00> : vector<8xf32>
    %3 = vector.multi_reduction <add>, %1, %cst [1] : vector<8x768xf32> to vector<8xf32>
    %4 = vector.shape_cast %3 : vector<8xf32> to vector<8x1xf32>
    %c0_5 = arith.constant 0 : index
    %c0_6 = arith.constant 0 : index
    %5 = vector.load %arg13[%c0_5, %c0_6] : memref<24x1xf32, #tpu.memory_space<vmem>>, vector<8x1xf32>
    tpu.vector_store %arg13[%c0_5, %c0_6], %4 {strides = array<i32>} : memref<24x1xf32, #tpu.memory_space<vmem>>, vector<8x1xf32>,
    %6 = arith.mulf %1, %1 : vector<8x768xf32>
    %cst_7 = arith.constant dense<0.000000e+00> : vector<8xf32>
    %7 = vector.multi_reduction <add>, %6, %cst_7 [1] : vector<8x768xf32> to vector<8xf32>
    %8 = vector.shape_cast %7 : vector<8xf32> to vector<8x1xf32>
    %c0_8 = arith.constant 0 : index
    %c0_9 = arith.constant 0 : index
    %9 = vector.load %arg14[%c0_8, %c0_9] : memref<24x1xf32, #tpu.memory_space<vmem>>, vector<8x1xf32>
    tpu.vector_store %arg14[%c0_8, %c0_9], %8 {strides = array<i32>} : memref<24x1xf32, #tpu.memory_space<vmem>>, vector<8x1xf32>,
    %c0_10 = arith.constant 0 : index
    %c0_11 = arith.constant 0 : index
    %10 = vector.load %arg13[%c0_10, %c0_11] : memref<24x1xf32, #tpu.memory_space<vmem>>, vector<8x1xf32>
    %cst_12 = arith.constant 0.001953125 : f32
    %11 = vector.broadcast %cst_12 : f32 to vector<8x1xf32>
    %12 = arith.mulf %10, %11 : vector<8x1xf32>
    %c0_13 = arith.constant 0 : index
    %c0_14 = arith.constant 0 : index
    %13 = vector.load %arg14[%c0_13, %c0_14] : memref<24x1xf32, #tpu.memory_space<vmem>>, vector<8x1xf32>
    %cst_15 = arith.constant 0.001953125 : f32
    %14 = vector.broadcast %cst_15 : f32 to vector<8x1xf32>
    %15 = arith.mulf %13, %14 : vector<8x1xf32>
    %16 = arith.mulf %12, %12 : vector<8x1xf32>
    %17 = arith.subf %15, %16 : vector<8x1xf32>
    %cst_16 = arith.constant 0.000000e+00 : f32
    %18 = vector.broadcast %cst_16 : f32 to vector<8x1xf32>
    %19 = arith.maximumf %17, %18 : vector<8x1xf32>
    %c0_17 = arith.constant 0 : index
    %c0_18 = arith.constant 0 : index
    %20 = vector.load %arg3[%c0_17, %c0_18] : memref<8x1xf32, #tpu.memory_space<vmem>>, vector<8x1xf32>
    %cst_19 = arith.constant 9.99999974E-6 : f32
    %21 = vector.broadcast %cst_19 : f32 to vector<8x1xf32>
    %22 = arith.addf %19, %21 : vector<8x1xf32>
    %23 = math.rsqrt %22 : vector<8x1xf32>
    %24 = arith.mulf %20, %23 : vector<8x1xf32>
    %c0_20 = arith.constant 0 : index
    %c0_21 = arith.constant 0 : index
    %25 = vector.load %arg4[%c0_20, %c0_21] : memref<8x1xf32, #tpu.memory_space<vmem>>, vector<8x1xf32>
    %26 = arith.mulf %12, %24 : vector<8x1xf32>
    %27 = arith.subf %25, %26 : vector<8x1xf32>
    %c0_22 = arith.constant 0 : index
    %c0_23 = arith.constant 0 : index
    %28 = vector.load %arg11[%c0_22, %c0_23] : memref<24x768xf32, #tpu.memory_space<vmem>>, vector<8x768xf32>
    %29 = vector.broadcast %24 : vector<8x1xf32> to vector<8x768xf32>
    %30 = arith.mulf %28, %29 : vector<8x768xf32>
    %31 = vector.broadcast %27 : vector<8x1xf32> to vector<8x768xf32>
    %32 = arith.addf %30, %31 : vector<8x768xf32>
    %cst_24 = arith.constant 0.000000e+00 : f32
    %33 = vector.broadcast %cst_24 : f32 to vector<8x768xf32>
    %34 = arith.maximumf %32, %33 : vector<8x768xf32>
    %35 = vector.broadcast %0 : vector<1x768xf32> to vector<8x768xf32>
    %36 = arith.mulf %34, %35 : vector<8x768xf32>
    %c0_25 = arith.constant 0 : index
    %c0_26 = arith.constant 0 : index
    %37 = vector.load %arg12[%c0_25, %c0_26] : memref<16x768xf32, #tpu.memory_space<vmem>>, vector<8x768xf32>
    tpu.vector_store %arg12[%c0_25, %c0_26], %36 {strides = array<i32>} : memref<16x768xf32, #tpu.memory_space<vmem>>, vector<8x768xf32>,
    %cst_27 = arith.constant 0.000000e+00 : f32
    %38 = vector.broadcast %cst_27 : f32 to vector<8x768xf32>
    %c0_28 = arith.constant 0 : index
    %c0_29 = arith.constant 0 : index
    %39 = vector.load %arg12[%c0_28, %c0_29] : memref<16x768xf32, #tpu.memory_space<vmem>>, vector<8x768xf32>
    %c19_i32 = arith.constant 19 : i32
    %40 = tpu.dynamic_rotate %39 by %c19_i32 dim 1 : vector<8x768xf32>, i32 -> vector<8x768xf32>
    %c0_30 = arith.constant 0 : index
    %c0_31 = arith.constant 0 : index
    %41 = vector.load %arg5[%c0_30, %c0_31] : memref<72x8xf32, #tpu.memory_space<vmem>>, vector<8x8xf32>
    %cst_32 = arith.constant dense<0.000000e+00> : vector<8x768xf32>
    %42 = tpu.matmul %41, %40, %cst_32 {dimension_numbers = #tpu.dot_dimension_numbers<[1], [0], [0], [1], [0, 0, 1, 1], [], []>} : vector<8x8xf32>, vector<8x768xf32>, vector<8x768xf32> -> vector<8x768xf32>
    %43 = arith.addf %38, %42 : vector<8x768xf32>
    %c0_33 = arith.constant 0 : index
    %c0_34 = arith.constant 0 : index
    %44 = vector.load %arg12[%c0_33, %c0_34] : memref<16x768xf32, #tpu.memory_space<vmem>>, vector<8x768xf32>
    %c18_i32 = arith.constant 18 : i32
    %45 = tpu.dynamic_rotate %44 by %c18_i32 dim 1 : vector<8x768xf32>, i32 -> vector<8x768xf32>
    %c8 = arith.constant 8 : index
    %c0_35 = arith.constant 0 : index
    %46 = vector.load %arg5[%c8, %c0_35] : memref<72x8xf32, #tpu.memory_space<vmem>>, vector<8x8xf32>
    %cst_36 = arith.constant dense<0.000000e+00> : vector<8x768xf32>
    %47 = tpu.matmul %46, %45, %cst_36 {dimension_numbers = #tpu.dot_dimension_numbers<[1], [0], [0], [1], [0, 0, 1, 1], [], []>} : vector<8x8xf32>, vector<8x768xf32>, vector<8x768xf32> -> vector<8x768xf32>
    %48 = arith.addf %43, %47 : vector<8x768xf32>
    %c0_37 = arith.constant 0 : index
    %c0_38 = arith.constant 0 : index
    %49 = vector.load %arg12[%c0_37, %c0_38] : memref<16x768xf32, #tpu.memory_space<vmem>>, vector<8x768xf32>
    %c17_i32 = arith.constant 17 : i32
    %50 = tpu.dynamic_rotate %49 by %c17_i32 dim 1 : vector<8x768xf32>, i32 -> vector<8x768xf32>
    %c16 = arith.constant 16 : index
    %c0_39 = arith.constant 0 : index
    %51 = vector.load %arg5[%c16, %c0_39] : memref<72x8xf32, #tpu.memory_space<vmem>>, vector<8x8xf32>
    %cst_40 = arith.constant dense<0.000000e+00> : vector<8x768xf32>
    %52 = tpu.matmul %51, %50, %cst_40 {dimension_numbers = #tpu.dot_dimension_numbers<[1], [0], [0], [1], [0, 0, 1, 1], [], []>} : vector<8x8xf32>, vector<8x768xf32>, vector<8x768xf32> -> vector<8x768xf32>
    %53 = arith.addf %48, %52 : vector<8x768xf32>
    %c0_41 = arith.constant 0 : index
    %c0_42 = arith.constant 0 : index
    %54 = vector.load %arg12[%c0_41, %c0_42] : memref<16x768xf32, #tpu.memory_space<vmem>>, vector<8x768xf32>
    %c1_i32 = arith.constant 1 : i32
    %55 = tpu.dynamic_rotate %54 by %c1_i32 dim 1 : vector<8x768xf32>, i32 -> vector<8x768xf32>
    %c24 = arith.constant 24 : index
    %c0_43 = arith.constant 0 : index
    %56 = vector.load %arg5[%c24, %c0_43] : memref<72x8xf32, #tpu.memory_space<vmem>>, vector<8x8xf32>
    %cst_44 = arith.constant dense<0.000000e+00> : vector<8x768xf32>
    %57 = tpu.matmul %56, %55, %cst_44 {dimension_numbers = #tpu.dot_dimension_numbers<[1], [0], [0], [1], [0, 0, 1, 1], [], []>} : vector<8x8xf32>, vector<8x768xf32>, vector<8x768xf32> -> vector<8x768xf32>
    %58 = arith.addf %53, %57 : vector<8x768xf32>
    %c0_45 = arith.constant 0 : index
    %c0_46 = arith.constant 0 : index
    %59 = vector.load %arg12[%c0_45, %c0_46] : memref<16x768xf32, #tpu.memory_space<vmem>>, vector<8x768xf32>
    %c32 = arith.constant 32 : index
    %c0_47 = arith.constant 0 : index
    %60 = vector.load %arg5[%c32, %c0_47] : memref<72x8xf32, #tpu.memory_space<vmem>>, vector<8x8xf32>
    %cst_48 = arith.constant dense<0.000000e+00> : vector<8x768xf32>
    %61 = tpu.matmul %60, %59, %cst_48 {dimension_numbers = #tpu.dot_dimension_numbers<[1], [0], [0], [1], [0, 0, 1, 1], [], []>} : vector<8x8xf32>, vector<8x768xf32>, vector<8x768xf32> -> vector<8x768xf32>
    %62 = arith.addf %58, %61 : vector<8x768xf32>
    %c0_49 = arith.constant 0 : index
    %c0_50 = arith.constant 0 : index
    %63 = vector.load %arg12[%c0_49, %c0_50] : memref<16x768xf32, #tpu.memory_space<vmem>>, vector<8x768xf32>
    %c767_i32 = arith.constant 767 : i32
    %64 = tpu.dynamic_rotate %63 by %c767_i32 dim 1 : vector<8x768xf32>, i32 -> vector<8x768xf32>
    %c40 = arith.constant 40 : index
    %c0_51 = arith.constant 0 : index
    %65 = vector.load %arg5[%c40, %c0_51] : memref<72x8xf32, #tpu.memory_space<vmem>>, vector<8x8xf32>
    %cst_52 = arith.constant dense<0.000000e+00> : vector<8x768xf32>
    %66 = tpu.matmul %65, %64, %cst_52 {dimension_numbers = #tpu.dot_dimension_numbers<[1], [0], [0], [1], [0, 0, 1, 1], [], []>} : vector<8x8xf32>, vector<8x768xf32>, vector<8x768xf32> -> vector<8x768xf32>
    %67 = arith.addf %62, %66 : vector<8x768xf32>
    %c0_53 = arith.constant 0 : index
    %c0_54 = arith.constant 0 : index
    %68 = vector.load %arg12[%c0_53, %c0_54] : memref<16x768xf32, #tpu.memory_space<vmem>>, vector<8x768xf32>
    %c751_i32 = arith.constant 751 : i32
    %69 = tpu.dynamic_rotate %68 by %c751_i32 dim 1 : vector<8x768xf32>, i32 -> vector<8x768xf32>
    %c48 = arith.constant 48 : index
    %c0_55 = arith.constant 0 : index
    %70 = vector.load %arg5[%c48, %c0_55] : memref<72x8xf32, #tpu.memory_space<vmem>>, vector<8x8xf32>
    %cst_56 = arith.constant dense<0.000000e+00> : vector<8x768xf32>
    %71 = tpu.matmul %70, %69, %cst_56 {dimension_numbers = #tpu.dot_dimension_numbers<[1], [0], [0], [1], [0, 0, 1, 1], [], []>} : vector<8x8xf32>, vector<8x768xf32>, vector<8x768xf32> -> vector<8x768xf32>
    %72 = arith.addf %67, %71 : vector<8x768xf32>
    %c0_57 = arith.constant 0 : index
    %c0_58 = arith.constant 0 : index
    %73 = vector.load %arg12[%c0_57, %c0_58] : memref<16x768xf32, #tpu.memory_space<vmem>>, vector<8x768xf32>
    %c750_i32 = arith.constant 750 : i32
    %74 = tpu.dynamic_rotate %73 by %c750_i32 dim 1 : vector<8x768xf32>, i32 -> vector<8x768xf32>
    %c56 = arith.constant 56 : index
    %c0_59 = arith.constant 0 : index
    %75 = vector.load %arg5[%c56, %c0_59] : memref<72x8xf32, #tpu.memory_space<vmem>>, vector<8x8xf32>
    %cst_60 = arith.constant dense<0.000000e+00> : vector<8x768xf32>
    %76 = tpu.matmul %75, %74, %cst_60 {dimension_numbers = #tpu.dot_dimension_numbers<[1], [0], [0], [1], [0, 0, 1, 1], [], []>} : vector<8x8xf32>, vector<8x768xf32>, vector<8x768xf32> -> vector<8x768xf32>
    %77 = arith.addf %72, %76 : vector<8x768xf32>
    %c0_61 = arith.constant 0 : index
    %c0_62 = arith.constant 0 : index
    %78 = vector.load %arg12[%c0_61, %c0_62] : memref<16x768xf32, #tpu.memory_space<vmem>>, vector<8x768xf32>
    %c749_i32 = arith.constant 749 : i32
    %79 = tpu.dynamic_rotate %78 by %c749_i32 dim 1 : vector<8x768xf32>, i32 -> vector<8x768xf32>
    %c64 = arith.constant 64 : index
    %c0_63 = arith.constant 0 : index
    %80 = vector.load %arg5[%c64, %c0_63] : memref<72x8xf32, #tpu.memory_space<vmem>>, vector<8x8xf32>
    %cst_64 = arith.constant dense<0.000000e+00> : vector<8x768xf32>
    %81 = tpu.matmul %80, %79, %cst_64 {dimension_numbers = #tpu.dot_dimension_numbers<[1], [0], [0], [1], [0, 0, 1, 1], [], []>} : vector<8x8xf32>, vector<8x768xf32>, vector<8x768xf32> -> vector<8x768xf32>
    %82 = arith.addf %77, %81 : vector<8x768xf32>
    %c0_65 = arith.constant 0 : index
    %c0_66 = arith.constant 0 : index
    %83 = vector.load %arg6[%c0_65, %c0_66] : memref<8x1xf32, #tpu.memory_space<vmem>>, vector<8x1xf32>
    %84 = vector.broadcast %83 : vector<8x1xf32> to vector<8x768xf32>
    %85 = arith.addf %82, %84 : vector<8x768xf32>
    %86 = vector.broadcast %0 : vector<1x768xf32> to vector<8x768xf32>
    %87 = arith.mulf %85, %86 : vector<8x768xf32>
    %c8_67 = arith.constant 8 : index
    %c0_68 = arith.constant 0 : index
    %88 = vector.load %arg11[%c8_67, %c0_68] : memref<24x768xf32, #tpu.memory_space<vmem>>, vector<8x768xf32>
    tpu.vector_store %arg11[%c8_67, %c0_68], %87 {strides = array<i32>} : memref<24x768xf32, #tpu.memory_space<vmem>>, vector<8x768xf32>,
    %cst_69 = arith.constant dense<0.000000e+00> : vector<8xf32>
    %89 = vector.multi_reduction <add>, %87, %cst_69 [1] : vector<8x768xf32> to vector<8xf32>
    %90 = vector.shape_cast %89 : vector<8xf32> to vector<8x1xf32>
    %c8_70 = arith.constant 8 : index
    %c0_71 = arith.constant 0 : index
    %91 = vector.load %arg13[%c8_70, %c0_71] : memref<24x1xf32, #tpu.memory_space<vmem>>, vector<8x1xf32>
    tpu.vector_store %arg13[%c8_70, %c0_71], %90 {strides = array<i32>} : memref<24x1xf32, #tpu.memory_space<vmem>>, vector<8x1xf32>,
    %92 = arith.mulf %87, %87 : vector<8x768xf32>
    %cst_72 = arith.constant dense<0.000000e+00> : vector<8xf32>
    %93 = vector.multi_reduction <add>, %92, %cst_72 [1] : vector<8x768xf32> to vector<8xf32>
    %94 = vector.shape_cast %93 : vector<8xf32> to vector<8x1xf32>
    %c8_73 = arith.constant 8 : index
    %c0_74 = arith.constant 0 : index
    %95 = vector.load %arg14[%c8_73, %c0_74] : memref<24x1xf32, #tpu.memory_space<vmem>>, vector<8x1xf32>
    tpu.vector_store %arg14[%c8_73, %c0_74], %94 {strides = array<i32>} : memref<24x1xf32, #tpu.memory_space<vmem>>, vector<8x1xf32>,
    %c0_75 = arith.constant 0 : index
    %c0_76 = arith.constant 0 : index
    %96 = vector.load %arg13[%c0_75, %c0_76] : memref<24x1xf32, #tpu.memory_space<vmem>>, vector<16x1xf32>
    %cst_77 = arith.constant 0.001953125 : f32
    %97 = vector.broadcast %cst_77 : f32 to vector<16x1xf32>
    %98 = arith.mulf %96, %97 : vector<16x1xf32>
    %c0_78 = arith.constant 0 : index
    %c0_79 = arith.constant 0 : index
    %99 = vector.load %arg14[%c0_78, %c0_79] : memref<24x1xf32, #tpu.memory_space<vmem>>, vector<16x1xf32>
    %cst_80 = arith.constant 0.001953125 : f32
    %100 = vector.broadcast %cst_80 : f32 to vector<16x1xf32>
    %101 = arith.mulf %99, %100 : vector<16x1xf32>
    %102 = arith.mulf %98, %98 : vector<16x1xf32>
    %103 = arith.subf %101, %102 : vector<16x1xf32>
    %cst_81 = arith.constant 0.000000e+00 : f32
    %104 = vector.broadcast %cst_81 : f32 to vector<16x1xf32>
    %105 = arith.maximumf %103, %104 : vector<16x1xf32>
    %c0_82 = arith.constant 0 : index
    %c0_83 = arith.constant 0 : index
    %106 = vector.load %arg7[%c0_82, %c0_83] : memref<16x1xf32, #tpu.memory_space<vmem>>, vector<16x1xf32>
    %cst_84 = arith.constant 9.99999974E-6 : f32
    %107 = vector.broadcast %cst_84 : f32 to vector<16x1xf32>
    %108 = arith.addf %105, %107 : vector<16x1xf32>
    %109 = math.rsqrt %108 : vector<16x1xf32>
    %110 = arith.mulf %106, %109 : vector<16x1xf32>
    %c0_85 = arith.constant 0 : index
    %c0_86 = arith.constant 0 : index
    %111 = vector.load %arg8[%c0_85, %c0_86] : memref<16x1xf32, #tpu.memory_space<vmem>>, vector<16x1xf32>
    %112 = arith.mulf %98, %110 : vector<16x1xf32>
    %113 = arith.subf %111, %112 : vector<16x1xf32>
    %c0_87 = arith.constant 0 : index
    %c0_88 = arith.constant 0 : index
    %114 = vector.load %arg11[%c0_87, %c0_88] : memref<24x768xf32, #tpu.memory_space<vmem>>, vector<16x768xf32>
    %115 = vector.broadcast %110 : vector<16x1xf32> to vector<16x768xf32>
    %116 = arith.mulf %114, %115 : vector<16x768xf32>
    %117 = vector.broadcast %113 : vector<16x1xf32> to vector<16x768xf32>
    %118 = arith.addf %116, %117 : vector<16x768xf32>
    %cst_89 = arith.constant 0.000000e+00 : f32
    %119 = vector.broadcast %cst_89 : f32 to vector<16x768xf32>
    %120 = arith.maximumf %118, %119 : vector<16x768xf32>
    %121 = vector.broadcast %0 : vector<1x768xf32> to vector<16x768xf32>
    %122 = arith.mulf %120, %121 : vector<16x768xf32>
    %c0_90 = arith.constant 0 : index
    %c0_91 = arith.constant 0 : index
    %123 = vector.load %arg12[%c0_90, %c0_91] : memref<16x768xf32, #tpu.memory_space<vmem>>, vector<16x768xf32>
    tpu.vector_store %arg12[%c0_90, %c0_91], %122 {strides = array<i32>} : memref<16x768xf32, #tpu.memory_space<vmem>>, vector<16x768xf32>,
    %cst_92 = arith.constant 0.000000e+00 : f32
    %124 = vector.broadcast %cst_92 : f32 to vector<8x768xf32>
    %c0_93 = arith.constant 0 : index
    %c0_94 = arith.constant 0 : index
    %125 = vector.load %arg12[%c0_93, %c0_94] : memref<16x768xf32, #tpu.memory_space<vmem>>, vector<16x768xf32>
    %c19_i32_95 = arith.constant 19 : i32
    %126 = tpu.dynamic_rotate %125 by %c19_i32_95 dim 1 : vector<16x768xf32>, i32 -> vector<16x768xf32>
    %c0_96 = arith.constant 0 : index
    %c0_97 = arith.constant 0 : index
    %127 = vector.load %arg9[%c0_96, %c0_97] : memref<72x16xf32, #tpu.memory_space<vmem>>, vector<8x16xf32>
    %cst_98 = arith.constant dense<0.000000e+00> : vector<8x768xf32>
    %128 = tpu.matmul %127, %126, %cst_98 {dimension_numbers = #tpu.dot_dimension_numbers<[1], [0], [0], [1], [0, 0, 1, 1], [], []>} : vector<8x16xf32>, vector<16x768xf32>, vector<8x768xf32> -> vector<8x768xf32>
    %129 = arith.addf %124, %128 : vector<8x768xf32>
    %c0_99 = arith.constant 0 : index
    %c0_100 = arith.constant 0 : index
    %130 = vector.load %arg12[%c0_99, %c0_100] : memref<16x768xf32, #tpu.memory_space<vmem>>, vector<16x768xf32>
    %c18_i32_101 = arith.constant 18 : i32
    %131 = tpu.dynamic_rotate %130 by %c18_i32_101 dim 1 : vector<16x768xf32>, i32 -> vector<16x768xf32>
    %c8_102 = arith.constant 8 : index
    %c0_103 = arith.constant 0 : index
    %132 = vector.load %arg9[%c8_102, %c0_103] : memref<72x16xf32, #tpu.memory_space<vmem>>, vector<8x16xf32>
    %cst_104 = arith.constant dense<0.000000e+00> : vector<8x768xf32>
    %133 = tpu.matmul %132, %131, %cst_104 {dimension_numbers = #tpu.dot_dimension_numbers<[1], [0], [0], [1], [0, 0, 1, 1], [], []>} : vector<8x16xf32>, vector<16x768xf32>, vector<8x768xf32> -> vector<8x768xf32>
    %134 = arith.addf %129, %133 : vector<8x768xf32>
    %c0_105 = arith.constant 0 : index
    %c0_106 = arith.constant 0 : index
    %135 = vector.load %arg12[%c0_105, %c0_106] : memref<16x768xf32, #tpu.memory_space<vmem>>, vector<16x768xf32>
    %c17_i32_107 = arith.constant 17 : i32
    %136 = tpu.dynamic_rotate %135 by %c17_i32_107 dim 1 : vector<16x768xf32>, i32 -> vector<16x768xf32>
    %c16_108 = arith.constant 16 : index
    %c0_109 = arith.constant 0 : index
    %137 = vector.load %arg9[%c16_108, %c0_109] : memref<72x16xf32, #tpu.memory_space<vmem>>, vector<8x16xf32>
    %cst_110 = arith.constant dense<0.000000e+00> : vector<8x768xf32>
    %138 = tpu.matmul %137, %136, %cst_110 {dimension_numbers = #tpu.dot_dimension_numbers<[1], [0], [0], [1], [0, 0, 1, 1], [], []>} : vector<8x16xf32>, vector<16x768xf32>, vector<8x768xf32> -> vector<8x768xf32>
    %139 = arith.addf %134, %138 : vector<8x768xf32>
    %c0_111 = arith.constant 0 : index
    %c0_112 = arith.constant 0 : index
    %140 = vector.load %arg12[%c0_111, %c0_112] : memref<16x768xf32, #tpu.memory_space<vmem>>, vector<16x768xf32>
    %c1_i32_113 = arith.constant 1 : i32
    %141 = tpu.dynamic_rotate %140 by %c1_i32_113 dim 1 : vector<16x768xf32>, i32 -> vector<16x768xf32>
    %c24_114 = arith.constant 24 : index
    %c0_115 = arith.constant 0 : index
    %142 = vector.load %arg9[%c24_114, %c0_115] : memref<72x16xf32, #tpu.memory_space<vmem>>, vector<8x16xf32>
    %cst_116 = arith.constant dense<0.000000e+00> : vector<8x768xf32>
    %143 = tpu.matmul %142, %141, %cst_116 {dimension_numbers = #tpu.dot_dimension_numbers<[1], [0], [0], [1], [0, 0, 1, 1], [], []>} : vector<8x16xf32>, vector<16x768xf32>, vector<8x768xf32> -> vector<8x768xf32>
    %144 = arith.addf %139, %143 : vector<8x768xf32>
    %c0_117 = arith.constant 0 : index
    %c0_118 = arith.constant 0 : index
    %145 = vector.load %arg12[%c0_117, %c0_118] : memref<16x768xf32, #tpu.memory_space<vmem>>, vector<16x768xf32>
    %c32_119 = arith.constant 32 : index
    %c0_120 = arith.constant 0 : index
    %146 = vector.load %arg9[%c32_119, %c0_120] : memref<72x16xf32, #tpu.memory_space<vmem>>, vector<8x16xf32>
    %cst_121 = arith.constant dense<0.000000e+00> : vector<8x768xf32>
    %147 = tpu.matmul %146, %145, %cst_121 {dimension_numbers = #tpu.dot_dimension_numbers<[1], [0], [0], [1], [0, 0, 1, 1], [], []>} : vector<8x16xf32>, vector<16x768xf32>, vector<8x768xf32> -> vector<8x768xf32>
    %148 = arith.addf %144, %147 : vector<8x768xf32>
    %c0_122 = arith.constant 0 : index
    %c0_123 = arith.constant 0 : index
    %149 = vector.load %arg12[%c0_122, %c0_123] : memref<16x768xf32, #tpu.memory_space<vmem>>, vector<16x768xf32>
    %c767_i32_124 = arith.constant 767 : i32
    %150 = tpu.dynamic_rotate %149 by %c767_i32_124 dim 1 : vector<16x768xf32>, i32 -> vector<16x768xf32>
    %c40_125 = arith.constant 40 : index
    %c0_126 = arith.constant 0 : index
    %151 = vector.load %arg9[%c40_125, %c0_126] : memref<72x16xf32, #tpu.memory_space<vmem>>, vector<8x16xf32>
    %cst_127 = arith.constant dense<0.000000e+00> : vector<8x768xf32>
    %152 = tpu.matmul %151, %150, %cst_127 {dimension_numbers = #tpu.dot_dimension_numbers<[1], [0], [0], [1], [0, 0, 1, 1], [], []>} : vector<8x16xf32>, vector<16x768xf32>, vector<8x768xf32> -> vector<8x768xf32>
    %153 = arith.addf %148, %152 : vector<8x768xf32>
    %c0_128 = arith.constant 0 : index
    %c0_129 = arith.constant 0 : index
    %154 = vector.load %arg12[%c0_128, %c0_129] : memref<16x768xf32, #tpu.memory_space<vmem>>, vector<16x768xf32>
    %c751_i32_130 = arith.constant 751 : i32
    %155 = tpu.dynamic_rotate %154 by %c751_i32_130 dim 1 : vector<16x768xf32>, i32 -> vector<16x768xf32>
    %c48_131 = arith.constant 48 : index
    %c0_132 = arith.constant 0 : index
    %156 = vector.load %arg9[%c48_131, %c0_132] : memref<72x16xf32, #tpu.memory_space<vmem>>, vector<8x16xf32>
    %cst_133 = arith.constant dense<0.000000e+00> : vector<8x768xf32>
    %157 = tpu.matmul %156, %155, %cst_133 {dimension_numbers = #tpu.dot_dimension_numbers<[1], [0], [0], [1], [0, 0, 1, 1], [], []>} : vector<8x16xf32>, vector<16x768xf32>, vector<8x768xf32> -> vector<8x768xf32>
    %158 = arith.addf %153, %157 : vector<8x768xf32>
    %c0_134 = arith.constant 0 : index
    %c0_135 = arith.constant 0 : index
    %159 = vector.load %arg12[%c0_134, %c0_135] : memref<16x768xf32, #tpu.memory_space<vmem>>, vector<16x768xf32>
    %c750_i32_136 = arith.constant 750 : i32
    %160 = tpu.dynamic_rotate %159 by %c750_i32_136 dim 1 : vector<16x768xf32>, i32 -> vector<16x768xf32>
    %c56_137 = arith.constant 56 : index
    %c0_138 = arith.constant 0 : index
    %161 = vector.load %arg9[%c56_137, %c0_138] : memref<72x16xf32, #tpu.memory_space<vmem>>, vector<8x16xf32>
    %cst_139 = arith.constant dense<0.000000e+00> : vector<8x768xf32>
    %162 = tpu.matmul %161, %160, %cst_139 {dimension_numbers = #tpu.dot_dimension_numbers<[1], [0], [0], [1], [0, 0, 1, 1], [], []>} : vector<8x16xf32>, vector<16x768xf32>, vector<8x768xf32> -> vector<8x768xf32>
    %163 = arith.addf %158, %162 : vector<8x768xf32>
    %c0_140 = arith.constant 0 : index
    %c0_141 = arith.constant 0 : index
    %164 = vector.load %arg12[%c0_140, %c0_141] : memref<16x768xf32, #tpu.memory_space<vmem>>, vector<16x768xf32>
    %c749_i32_142 = arith.constant 749 : i32
    %165 = tpu.dynamic_rotate %164 by %c749_i32_142 dim 1 : vector<16x768xf32>, i32 -> vector<16x768xf32>
    %c64_143 = arith.constant 64 : index
    %c0_144 = arith.constant 0 : index
    %166 = vector.load %arg9[%c64_143, %c0_144] : memref<72x16xf32, #tpu.memory_space<vmem>>, vector<8x16xf32>
    %cst_145 = arith.constant dense<0.000000e+00> : vector<8x768xf32>
    %167 = tpu.matmul %166, %165, %cst_145 {dimension_numbers = #tpu.dot_dimension_numbers<[1], [0], [0], [1], [0, 0, 1, 1], [], []>} : vector<8x16xf32>, vector<16x768xf32>, vector<8x768xf32> -> vector<8x768xf32>
    %168 = arith.addf %163, %167 : vector<8x768xf32>
    %c0_146 = arith.constant 0 : index
    %c0_147 = arith.constant 0 : index
    %169 = vector.load %arg10[%c0_146, %c0_147] : memref<8x1xf32, #tpu.memory_space<vmem>>, vector<8x1xf32>
    %170 = vector.broadcast %169 : vector<8x1xf32> to vector<8x768xf32>
    %171 = arith.addf %168, %170 : vector<8x768xf32>
    %172 = vector.broadcast %0 : vector<1x768xf32> to vector<8x768xf32>
    %173 = arith.mulf %171, %172 : vector<8x768xf32>
    %c16_148 = arith.constant 16 : index
    %c0_149 = arith.constant 0 : index
    %174 = vector.load %arg11[%c16_148, %c0_149] : memref<24x768xf32, #tpu.memory_space<vmem>>, vector<8x768xf32>
    tpu.vector_store %arg11[%c16_148, %c0_149], %173 {strides = array<i32>} : memref<24x768xf32, #tpu.memory_space<vmem>>, vector<8x768xf32>,
    return
  }
  func.func @transform_0(%arg0: i32) -> (i32, i32) {
    %c0_i32 = arith.constant 0 : i32
    %c0_i32_0 = arith.constant 0 : i32
    %c0_i32_1 = arith.constant 0 : i32
    return %c0_i32, %c0_i32_0 : i32, i32
  }
  func.func @transform_1(%arg0: i32) -> (i32, i32) {
    %c0_i32 = arith.constant 0 : i32
    %c0_i32_0 = arith.constant 0 : i32
    %c0_i32_1 = arith.constant 0 : i32
    return %c0_i32, %c0_i32_0 : i32, i32
  }
  func.func @transform_2(%arg0: i32) -> (i32, i32) {
    %c0_i32 = arith.constant 0 : i32
    %c0_i32_0 = arith.constant 0 : i32
    %c0_i32_1 = arith.constant 0 : i32
    return %c0_i32, %c0_i32_0 : i32, i32
  }
  func.func @transform_3(%arg0: i32) -> (i32, i32) {
    %c0_i32 = arith.constant 0 : i32
    %c0_i32_0 = arith.constant 0 : i32
    %c0_i32_1 = arith.constant 0 : i32
    return %c0_i32, %c0_i32_0 : i32, i32
  }
  func.func @transform_4(%arg0: i32) -> (i32, i32) {
    %c0_i32 = arith.constant 0 : i32
    %c0_i32_0 = arith.constant 0 : i32
    %c0_i32_1 = arith.constant 0 : i32
    return %c0_i32, %c0_i32_0 : i32, i32
  }
  func.func @transform_5(%arg0: i32) -> (i32, i32) {
    %c0_i32 = arith.constant 0 : i32
    %c0_i32_0 = arith.constant 0 : i32
    %c0_i32_1 = arith.constant 0 : i32
    return %c0_i32, %c0_i32_0 : i32, i32
  }
  func.func @transform_6(%arg0: i32) -> (i32, i32) {
    %c0_i32 = arith.constant 0 : i32
    %c0_i32_0 = arith.constant 0 : i32
    %c0_i32_1 = arith.constant 0 : i32
    return %c0_i32, %c0_i32_0 : i32, i32
  }
  func.func @transform_7(%arg0: i32) -> (i32, i32) {
    %c0_i32 = arith.constant 0 : i32
    %c0_i32_0 = arith.constant 0 : i32
    %c0_i32_1 = arith.constant 0 : i32
    return %c0_i32, %c0_i32_0 : i32, i32
  }
  func.func @transform_8(%arg0: i32) -> (i32, i32) {
    %c0_i32 = arith.constant 0 : i32
    %c0_i32_0 = arith.constant 0 : i32
    %c0_i32_1 = arith.constant 0 : i32
    return %c0_i32, %c0_i32_0 : i32, i32
  }
  func.func @transform_9(%arg0: i32) -> (i32, i32) {
    %c0_i32 = arith.constant 0 : i32
    %c0_i32_0 = arith.constant 0 : i32
    %c0_i32_1 = arith.constant 0 : i32
    return %c0_i32, %c0_i32_0 : i32, i32
  }
  func.func @transform_10(%arg0: i32) -> (i32, i32) {
    %c0_i32 = arith.constant 0 : i32
    %c0_i32_0 = arith.constant 0 : i32
    %c0_i32_1 = arith.constant 0 : i32
    return %c0_i32, %c0_i32_0 : i32, i32
  }
}

</mosaic_0001>

<llo_original>
// kernel: tpu_custom_call.1
$region0: #{tpu_custom_call.1}
  #allocation0 [shape = 'u32[]', space=smem, size = 0x4, offset = 0x4, fixed_abs, tag = 'smem constant byte address 0x4 - core index']
  #allocation1 [shape = 'u32[144,128]{1,0:T(1,128)}', space=vmem, size = 0x12000, scoped, tag = 'internal scratch']
  #allocation2 [shape = 'f32[16,768]{1,0:T(8,128)}', space=vmem, size = 0xc000, scoped, tag = 'scratch operand']
  #allocation3 [shape = 'f32[24,1]{1,0:T(8,128)}', space=vmem, size = 0x3000, scoped, tag = 'scratch operand']
  #allocation4 [shape = 'f32[24,1]{1,0:T(8,128)}', space=vmem, size = 0x3000, scoped, tag = 'scratch operand']
  %s0 = inlined_call_operand.vmem [shape: f32[8,768], index: 0, kind: input, shape index: {}]
  %s1 = inlined_call_operand.vmem [shape: f32[1,768], index: 1, kind: input, shape index: {}]
  %s2 = inlined_call_operand.vmem [shape: f32[8,1], index: 2, kind: input, shape index: {}]
  %s3 = inlined_call_operand.vmem [shape: f32[8,1], index: 3, kind: input, shape index: {}]
  %s4 = inlined_call_operand.vmem [shape: f32[72,8], index: 4, kind: input, shape index: {}]
  %s5 = inlined_call_operand.vmem [shape: f32[8,1], index: 5, kind: input, shape index: {}]
  %s6 = inlined_call_operand.vmem [shape: f32[16,1], index: 6, kind: input, shape index: {}]
  %s7 = inlined_call_operand.vmem [shape: f32[16,1], index: 7, kind: input, shape index: {}]
  %s8 = inlined_call_operand.vmem [shape: f32[72,16], index: 8, kind: input, shape index: {}]
  %s9 = inlined_call_operand.vmem [shape: f32[8,1], index: 9, kind: input, shape index: {}]
  %s10 = inlined_call_operand.hbm [shape: f32[24,768], index: 10, kind: output, shape index: {}]
  %s11 = sld [smem:[#allocation0]]
  $region50: #{tpu_custom_call.1} parent=0
    _
  %s13 = ssub.s32 1, %s11
  %s14 = scalar_select 0, %s13, %s11
  $region1: #{tpu_custom_call.1} parent=0
    #allocation5 [shape = 'u8[73728]{0}', space=vmem, size = 0x12000, scoped, tag = 'output window, operand 0, single buffered']
    #allocation6 [shape = 's32[1]{0}', space=sflag, size = 0x4, scoped, tag = 'scoped memory for tpu_custom_call.1']
    %15 = vsyncpa [#allocation6], 0
    // Predicated region
    $region2: #{tpu_custom_call.1} parent=1 // pred_check
      _
    $region3: #{tpu_custom_call.1} parent=1 // pred_check_branch
      %17 = sbr.rel (0) target = $region5
    $region4: #{tpu_custom_call.1} parent=1 // pred_region
      _
    $region5: #{tpu_custom_call.1} parent=1 // pred_fallthru
      _
    // Predicated region
    $region6: #{tpu_custom_call.1} parent=1 // pred_check
      _
    $region7: #{tpu_custom_call.1} parent=1 // pred_check_branch
      %19 = sbr.rel (0) target = $region9
    $region8: #{tpu_custom_call.1} parent=1 // pred_region
      _
    $region9: #{tpu_custom_call.1} parent=1 // pred_fallthru
      _
    // Predicated region
    $region10: #{tpu_custom_call.1} parent=1 // pred_check
      _
    $region11: #{tpu_custom_call.1} parent=1 // pred_check_branch
      %21 = sbr.rel (0) target = $region13
    $region12: #{tpu_custom_call.1} parent=1 // pred_region
      _
    $region13: #{tpu_custom_call.1} parent=1 // pred_fallthru
      _
    // Predicated region
    $region14: #{tpu_custom_call.1} parent=1 // pred_check
      _
    $region15: #{tpu_custom_call.1} parent=1 // pred_check_branch
      %23 = sbr.rel (0) target = $region17
    $region16: #{tpu_custom_call.1} parent=1 // pred_region
      _
    $region17: #{tpu_custom_call.1} parent=1 // pred_fallthru
      _
    // Predicated region
    $region18: #{tpu_custom_call.1} parent=1 // pred_check
      _
    $region19: #{tpu_custom_call.1} parent=1 // pred_check_branch
      %25 = sbr.rel (0) target = $region21
    $region20: #{tpu_custom_call.1} parent=1 // pred_region
      _
    $region21: #{tpu_custom_call.1} parent=1 // pred_fallthru
      _
    // Predicated region
    $region22: #{tpu_custom_call.1} parent=1 // pred_check
      _
    $region23: #{tpu_custom_call.1} parent=1 // pred_check_branch
      %27 = sbr.rel (0) target = $region25
    $region24: #{tpu_custom_call.1} parent=1 // pred_region
      _
    $region25: #{tpu_custom_call.1} parent=1 // pred_fallthru
      _
    // Predicated region
    $region26: #{tpu_custom_call.1} parent=1 // pred_check
      _
    $region27: #{tpu_custom_call.1} parent=1 // pred_check_branch
      %29 = sbr.rel (0) target = $region29
    $region28: #{tpu_custom_call.1} parent=1 // pred_region
      _
    $region29: #{tpu_custom_call.1} parent=1 // pred_fallthru
      _
    // Predicated region
    $region30: #{tpu_custom_call.1} parent=1 // pred_check
      _
    $region31: #{tpu_custom_call.1} parent=1 // pred_check_branch
      %31 = sbr.rel (0) target = $region33
    $region32: #{tpu_custom_call.1} parent=1 // pred_region
      _
    $region33: #{tpu_custom_call.1} parent=1 // pred_fallthru
      _
    // Predicated region
    $region34: #{tpu_custom_call.1} parent=1 // pred_check
      _
    $region35: #{tpu_custom_call.1} parent=1 // pred_check_branch
      %33 = sbr.rel (0) target = $region37
    $region36: #{tpu_custom_call.1} parent=1 // pred_region
      _
    $region37: #{tpu_custom_call.1} parent=1 // pred_fallthru
      _
    // Predicated region
    $region38: #{tpu_custom_call.1} parent=1 // pred_check
      _
    $region39: #{tpu_custom_call.1} parent=1 // pred_check_branch
      %35 = sbr.rel (0) target = $region41
    $region40: #{tpu_custom_call.1} parent=1 // pred_region
      _
    $region41: #{tpu_custom_call.1} parent=1 // pred_fallthru
      _
    %v36 = vld [vmem:[%s1] sm:$0x3f]
    %v37 = vld [vmem:[%s0] sm:$0xff]
    %v38 = vld [vmem:[%s0 + $0x8] sm:$0xff]
    %v39 = vld [vmem:[%s0 + $0x10] sm:$0xff]
    %v40 = vld [vmem:[%s0 + $0x18] sm:$0xff]
    %v41 = vld [vmem:[%s0 + $0x20] sm:$0xff]
    %v42 = vld [vmem:[%s0 + $0x28] sm:$0xff]
    %43 = vst [vmem:[#allocation5] sm:$0xff] %v37
    %44 = vst [vmem:[#allocation5 + $0x8] sm:$0xff] %v38
    %45 = vst [vmem:[#allocation5 + $0x10] sm:$0xff] %v39
    %46 = vst [vmem:[#allocation5 + $0x18] sm:$0xff] %v40
    %47 = vst [vmem:[#allocation5 + $0x20] sm:$0xff] %v41
    %48 = vst [vmem:[#allocation5 + $0x28] sm:$0xff] %v42
    %v49 = vadd.f32 %v37, %v38
    %v50 = vadd.f32 %v49, %v39
    %v51 = vadd.f32 %v50, %v40
    %v52 = vadd.f32 %v51, %v41
    %v53 = vadd.f32 %v52, %v42
    %54 = vadd.xlane.f32.xlu0 %v53
    %v55 = vpop.xlane.xlu0 %54
    %vm56 = vcmask 7168
    %57 = vst.msk [vmem:[#allocation3] sm:$0xff] %vm56, %v55
    %v58 = vmul.f32 %v37, %v37
    %v59 = vmul.f32 %v38, %v38
    %v60 = vmul.f32 %v39, %v39
    %v61 = vmul.f32 %v40, %v40
    %v62 = vmul.f32 %v41, %v41
    %v63 = vmul.f32 %v42, %v42
    %v64 = vadd.f32 %v58, %v59
    %v65 = vadd.f32 %v64, %v60
    %v66 = vadd.f32 %v65, %v61
    %v67 = vadd.f32 %v66, %v62
    %v68 = vadd.f32 %v67, %v63
    %69 = vadd.xlane.f32.xlu0 %v68
    %v70 = vpop.xlane.xlu0 %69
    %71 = vst.msk [vmem:[#allocation4] sm:$0xff] %vm56, %v70
    %v72 = vld [vmem:[#allocation3] sm:$0xff]
    %v73 = vmul.f32 %v72, 0.001953125
    %v74 = vld [vmem:[#allocation4] sm:$0xff]
    %v75 = vmul.f32 %v74, 0.001953125
    %v76 = vmul.f32 %v73, %v73
    %v77 = vsub.f32 %v75, %v76
    %v78 = vmax.f32 %v77, 0.0
    %v79 = vld [vmem:[%s2] sm:$0xff]
    %v80 = vadd.f32 %v78, 1e-05
    %v81 = vrsqrt.pop %v80
    %v82 = vmul.f32 %v79, %v81
    %v83 = vld [vmem:[%s3] sm:$0xff]
    %v84 = vmul.f32 %v73, %v82
    %v85 = vsub.f32 %v83, %v84
    %v86 = vld [vmem:[#allocation5] sm:$0xff]
    %v87 = vld [vmem:[#allocation5 + $0x8] sm:$0xff]
    %v88 = vld [vmem:[#allocation5 + $0x10] sm:$0xff]
    %v89 = vld [vmem:[#allocation5 + $0x18] sm:$0xff]
    %v90 = vld [vmem:[#allocation5 + $0x20] sm:$0xff]
    %v91 = vld [vmem:[#allocation5 + $0x28] sm:$0xff]
    %93 = vset.pattern.permute.xlu0 0
    %94 = vperm.xlu0 %93, %v82
    %v95 = vpop.permute.xlu0 %94
    %v97 = vmul.f32 %v86, %v95
    %v98 = vmul.f32 %v87, %v95
    %v99 = vmul.f32 %v88, %v95
    %v100 = vmul.f32 %v89, %v95
    %v101 = vmul.f32 %v90, %v95
    %v102 = vmul.f32 %v91, %v95
    %104 = vset.pattern.permute.xlu0 0
    %105 = vperm.xlu0 %104, %v85
    %v106 = vpop.permute.xlu0 %105
    %v108 = vadd.f32 %v97, %v106
    %v109 = vadd.f32 %v98, %v106
    %v110 = vadd.f32 %v99, %v106
    %v111 = vadd.f32 %v100, %v106
    %v112 = vadd.f32 %v101, %v106
    %v113 = vadd.f32 %v102, %v106
    %v114 = vmax.f32 %v108, 0.0
    %v115 = vmax.f32 %v109, 0.0
    %v116 = vmax.f32 %v110, 0.0
    %v117 = vmax.f32 %v111, 0.0
    %v118 = vmax.f32 %v112, 0.0
    %v119 = vmax.f32 %v113, 0.0
    %v121 = vlaneseq
    %v122 = vshrl.u32 %v121, 7
    %v123 = vsub.s32 0, %v122
    %v124 = vrot.slane %v36, %v123
    %v125 = vlaneseq
    %v126 = vshrl.u32 %v125, 7
    %v127 = vsub.s32 1, %v126
    %v128 = vrot.slane %v36, %v127
    %v129 = vlaneseq
    %v130 = vshrl.u32 %v129, 7
    %v131 = vsub.s32 2, %v130
    %v132 = vrot.slane %v36, %v131
    %v133 = vlaneseq
    %v134 = vshrl.u32 %v133, 7
    %v135 = vsub.s32 3, %v134
    %v136 = vrot.slane %v36, %v135
    %v137 = vlaneseq
    %v138 = vshrl.u32 %v137, 7
    %v139 = vsub.s32 4, %v138
    %v140 = vrot.slane %v36, %v139
    %v141 = vlaneseq
    %v142 = vshrl.u32 %v141, 7
    %v143 = vsub.s32 5, %v142
    %v144 = vrot.slane %v36, %v143
    %v151 = vmul.f32 %v114, %v124
    %v152 = vmul.f32 %v115, %v128
    %v153 = vmul.f32 %v116, %v132
    %v154 = vmul.f32 %v117, %v136
    %v155 = vmul.f32 %v118, %v140
    %v156 = vmul.f32 %v119, %v144
    %157 = vst [vmem:[#allocation2] sm:$0xff] %v151
    %158 = vst [vmem:[#allocation2 + $0x8] sm:$0xff] %v152
    %159 = vst [vmem:[#allocation2 + $0x10] sm:$0xff] %v153
    %160 = vst [vmem:[#allocation2 + $0x18] sm:$0xff] %v154
    %161 = vst [vmem:[#allocation2 + $0x20] sm:$0xff] %v155
    %162 = vst [vmem:[#allocation2 + $0x28] sm:$0xff] %v156
    %v163 = vld [vmem:[#allocation2] sm:$0xff]
    %v164 = vld [vmem:[#allocation2 + $0x8] sm:$0xff]
    %v165 = vld [vmem:[#allocation2 + $0x10] sm:$0xff]
    %v166 = vld [vmem:[#allocation2 + $0x18] sm:$0xff]
    %v167 = vld [vmem:[#allocation2 + $0x20] sm:$0xff]
    %v168 = vld [vmem:[#allocation2 + $0x28] sm:$0xff]
    %169 = vrot.lane.b32.xlu0 %v163, 19
    %v170 = vpop.permute.xlu0 %169
    %171 = vrot.lane.b32.xlu0 %v164, 19
    %v172 = vpop.permute.xlu0 %171
    %173 = vrot.lane.b32.xlu0 %v165, 19
    %v174 = vpop.permute.xlu0 %173
    %175 = vrot.lane.b32.xlu0 %v166, 19
    %v176 = vpop.permute.xlu0 %175
    %177 = vrot.lane.b32.xlu0 %v167, 19
    %v178 = vpop.permute.xlu0 %177
    %179 = vrot.lane.b32.xlu0 %v168, 19
    %v180 = vpop.permute.xlu0 %179
    %v181 = vlaneseq
    %v182 = vand.u32 %v181, 127
    %vm183 = vcmp.lt.s32.totalorder %v182, 19
    %v184 = vsel %vm183, %v178, %v180
    %v185 = vsel %vm183, %v176, %v178
    %v186 = vsel %vm183, %v174, %v176
    %v187 = vsel %vm183, %v172, %v174
    %v188 = vsel %vm183, %v170, %v172
    %v189 = vsel %vm183, %v180, %v170
    %v190 = vld [vmem:[%s4] sm:$0xff]
    %191 = vrot.lane.b32.xlu0 %v163, 18
    %v192 = vpop.permute.xlu0 %191
    %193 = vrot.lane.b32.xlu0 %v164, 18
    %v194 = vpop.permute.xlu0 %193
    %195 = vrot.lane.b32.xlu0 %v165, 18
    %v196 = vpop.permute.xlu0 %195
    %197 = vrot.lane.b32.xlu0 %v166, 18
    %v198 = vpop.permute.xlu0 %197
    %199 = vrot.lane.b32.xlu0 %v167, 18
    %v200 = vpop.permute.xlu0 %199
    %201 = vrot.lane.b32.xlu0 %v168, 18
    %v202 = vpop.permute.xlu0 %201
    %vm203 = vcmp.lt.s32.totalorder %v182, 18
    %v204 = vsel %vm203, %v200, %v202
    %v205 = vsel %vm203, %v198, %v200
    %v206 = vsel %vm203, %v196, %v198
    %v207 = vsel %vm203, %v194, %v196
    %v208 = vsel %vm203, %v192, %v194
    %v209 = vsel %vm203, %v202, %v192
    %v210 = vld [vmem:[%s4 + $0x8] sm:$0xff]
    %vm211 = vcmask 64512
    %v213 = vsel %vm211, %v210, 0
    %215 = vmatprep.subr.mxu0 0.0
    %216 = vmatpush1.msra.mxu0 0.0
    %217 = vmatprep.subr.mxu0 0.0
    %218 = vmatpush1.msra.mxu0 0.0
    %219 = vmatprep.subr.mxu0 0.0
    %220 = vmatpush1.msra.mxu0 0.0
    %221 = vmatprep.subr.mxu0 0.0
    %222 = vmatpush1.msra.mxu0 0.0
    %223 = vmatprep.subr.mxu0 0.0
    %224 = vmatpush1.msra.mxu0 0.0
    %225 = vmatprep.subr.mxu0 0.0
    %226 = vmatpush1.msra.mxu0 0.0
    %227 = vmatprep.subr.mxu0 0.0
    %228 = vmatpush1.msra.mxu0 0.0
    %229 = vmatprep.subr.mxu0 0.0
    %230 = vmatpush1.msra.mxu0 0.0
    %231 = vmatprep.subr.mxu0 0.0
    %232 = vmatpush1.msra.mxu0 0.0
    %233 = vmatprep.subr.mxu0 0.0
    %234 = vmatpush1.msra.mxu0 0.0
    %235 = vmatprep.subr.mxu0 0.0
    %236 = vmatpush1.msra.mxu0 0.0
    %237 = vmatprep.subr.mxu0 0.0
    %238 = vmatpush1.msra.mxu0 0.0
    %239 = vmatprep.subr.mxu0 0.0
    %240 = vmatpush1.msra.mxu0 0.0
    %241 = vmatprep.subr.mxu0 0.0
    %242 = vmatpush1.msra.mxu0 0.0
    %243 = vmatprep.subr.mxu0 0.0
    %244 = vmatpush1.msra.mxu0 0.0
    %245 = vmatprep.subr.mxu0 %v208
    %246 = vmatpush1.msra.mxu0 %v209
    %247 = vmatprep.subr.mxu0 0.0
    %248 = vmatpush2.msra.mxu0 0.0
    %249 = vmatprep.subr.mxu0 0.0
    %250 = vmatpush2.msra.mxu0 0.0
    %251 = vmatprep.subr.mxu0 0.0
    %252 = vmatpush2.msra.mxu0 0.0
    %253 = vmatprep.subr.mxu0 0.0
    %254 = vmatpush2.msra.mxu0 0.0
    %255 = vmatprep.subr.mxu0 0.0
    %256 = vmatpush2.msra.mxu0 0.0
    %257 = vmatprep.subr.mxu0 0.0
    %258 = vmatpush2.msra.mxu0 0.0
    %259 = vmatprep.subr.mxu0 0.0
    %260 = vmatpush2.msra.mxu0 0.0
    %261 = vmatprep.subr.mxu0 0.0
    %262 = vmatpush2.msra.mxu0 0.0
    %263 = vmatprep.subr.mxu0 0.0
    %264 = vmatpush2.msra.mxu0 0.0
    %265 = vmatprep.subr.mxu0 0.0
    %266 = vmatpush2.msra.mxu0 0.0
    %267 = vmatprep.subr.mxu0 0.0
    %268 = vmatpush2.msra.mxu0 0.0
    %269 = vmatprep.subr.mxu0 0.0
    %270 = vmatpush2.msra.mxu0 0.0
    %271 = vmatprep.subr.mxu0 0.0
    %272 = vmatpush2.msra.mxu0 0.0
    %273 = vmatprep.subr.mxu0 0.0
    %274 = vmatpush2.msra.mxu0 0.0
    %275 = vmatprep.subr.mxu0 0.0
    %276 = vmatpush2.msra.mxu0 0.0
    %277 = vmatprep.subr.mxu0 0.0
    %278 = vmatpush2.msra.mxu0 0.0
    %279 = vmatprep.mubr.f32.mxu0 0.0
    %280 = vmatmul.mubr.f32.gmra.mxu0 %v213
    %v281 = vpop.f32.mrf.mxu0
    %v282 = vadd.f32 0.0, %v281
    %v283 = vpop.f32.mrf.mxu0
    %v284 = vadd.f32 0.0, %v283
    %285 = vdwg.mxu0
    %286 = vmatprep.subr.mxu0 0.0
    %287 = vmatpush1.msra.mxu0 0.0
    %288 = vmatprep.subr.mxu0 0.0
    %289 = vmatpush1.msra.mxu0 0.0
    %290 = vmatprep.subr.mxu0 0.0
    %291 = vmatpush1.msra.mxu0 0.0
    %292 = vmatprep.subr.mxu0 0.0
    %293 = vmatpush1.msra.mxu0 0.0
    %294 = vmatprep.subr.mxu0 0.0
    %295 = vmatpush1.msra.mxu0 0.0
    %296 = vmatprep.subr.mxu0 0.0
    %297 = vmatpush1.msra.mxu0 0.0
    %298 = vmatprep.subr.mxu0 0.0
    %299 = vmatpush1.msra.mxu0 0.0
    %300 = vmatprep.subr.mxu0 0.0
    %301 = vmatpush1.msra.mxu0 0.0
    %302 = vmatprep.subr.mxu0 0.0
    %303 = vmatpush1.msra.mxu0 0.0
    %304 = vmatprep.subr.mxu0 0.0
    %305 = vmatpush1.msra.mxu0 0.0
    %306 = vmatprep.subr.mxu0 0.0
    %307 = vmatpush1.msra.mxu0 0.0
    %308 = vmatprep.subr.mxu0 0.0
    %309 = vmatpush1.msra.mxu0 0.0
    %310 = vmatprep.subr.mxu0 0.0
    %311 = vmatpush1.msra.mxu0 0.0
    %312 = vmatprep.subr.mxu0 0.0
    %313 = vmatpush1.msra.mxu0 0.0
    %314 = vmatprep.subr.mxu0 0.0
    %315 = vmatpush1.msra.mxu0 0.0
    %316 = vmatprep.subr.mxu0 %v206
    %317 = vmatpush1.msra.mxu0 %v207
    %318 = vmatprep.subr.mxu0 0.0
    %319 = vmatpush2.msra.mxu0 0.0
    %320 = vmatprep.subr.mxu0 0.0
    %321 = vmatpush2.msra.mxu0 0.0
    %322 = vmatprep.subr.mxu0 0.0
    %323 = vmatpush2.msra.mxu0 0.0
    %324 = vmatprep.subr.mxu0 0.0
    %325 = vmatpush2.msra.mxu0 0.0
    %326 = vmatprep.subr.mxu0 0.0
    %327 = vmatpush2.msra.mxu0 0.0
    %328 = vmatprep.subr.mxu0 0.0
    %329 = vmatpush2.msra.mxu0 0.0
    %330 = vmatprep.subr.mxu0 0.0
    %331 = vmatpush2.msra.mxu0 0.0
    %332 = vmatprep.subr.mxu0 0.0
    %333 = vmatpush2.msra.mxu0 0.0
    %334 = vmatprep.subr.mxu0 0.0
    %335 = vmatpush2.msra.mxu0 0.0
    %336 = vmatprep.subr.mxu0 0.0
    %337 = vmatpush2.msra.mxu0 0.0
    %338 = vmatprep.subr.mxu0 0.0
    %339 = vmatpush2.msra.mxu0 0.0
    %340 = vmatprep.subr.mxu0 0.0
    %341 = vmatpush2.msra.mxu0 0.0
    %342 = vmatprep.subr.mxu0 0.0
    %343 = vmatpush2.msra.mxu0 0.0
    %344 = vmatprep.subr.mxu0 0.0
    %345 = vmatpush2.msra.mxu0 0.0
    %346 = vmatprep.subr.mxu0 0.0
    %347 = vmatpush2.msra.mxu0 0.0
    %348 = vmatprep.subr.mxu0 0.0
    %349 = vmatpush2.msra.mxu0 0.0
    %350 = vmatprep.mubr.f32.mxu0 0.0
    %351 = vmatmul.mubr.f32.gmra.mxu0 %v213
    %v352 = vpop.f32.mrf.mxu0
    %v353 = vadd.f32 0.0, %v352
    %v354 = vpop.f32.mrf.mxu0
    %v355 = vadd.f32 0.0, %v354
    %356 = vdwg.mxu0
    %357 = vmatprep.subr.mxu0 0.0
    %358 = vmatpush1.msra.mxu0 0.0
    %359 = vmatprep.subr.mxu0 0.0
    %360 = vmatpush1.msra.mxu0 0.0
    %361 = vmatprep.subr.mxu0 0.0
    %362 = vmatpush1.msra.mxu0 0.0
    %363 = vmatprep.subr.mxu0 0.0
    %364 = vmatpush1.msra.mxu0 0.0
    %365 = vmatprep.subr.mxu0 0.0
    %366 = vmatpush1.msra.mxu0 0.0
    %367 = vmatprep.subr.mxu0 0.0
    %368 = vmatpush1.msra.mxu0 0.0
    %369 = vmatprep.subr.mxu0 0.0
    %370 = vmatpush1.msra.mxu0 0.0
    %371 = vmatprep.subr.mxu0 0.0
    %372 = vmatpush1.msra.mxu0 0.0
    %373 = vmatprep.subr.mxu0 0.0
    %374 = vmatpush1.msra.mxu0 0.0
    %375 = vmatprep.subr.mxu0 0.0
    %376 = vmatpush1.msra.mxu0 0.0
    %377 = vmatprep.subr.mxu0 0.0
    %378 = vmatpush1.msra.mxu0 0.0
    %379 = vmatprep.subr.mxu0 0.0
    %380 = vmatpush1.msra.mxu0 0.0
    %381 = vmatprep.subr.mxu0 0.0
    %382 = vmatpush1.msra.mxu0 0.0
    %383 = vmatprep.subr.mxu0 0.0
    %384 = vmatpush1.msra.mxu0 0.0
    %385 = vmatprep.subr.mxu0 0.0
    %386 = vmatpush1.msra.mxu0 0.0
    %387 = vmatprep.subr.mxu0 %v204
    %388 = vmatpush1.msra.mxu0 %v205
    %389 = vmatprep.subr.mxu0 0.0
    %390 = vmatpush2.msra.mxu0 0.0
    %391 = vmatprep.subr.mxu0 0.0
    %392 = vmatpush2.msra.mxu0 0.0
    %393 = vmatprep.subr.mxu0 0.0
    %394 = vmatpush2.msra.mxu0 0.0
    %395 = vmatprep.subr.mxu0 0.0
    %396 = vmatpush2.msra.mxu0 0.0
    %397 = vmatprep.subr.mxu0 0.0
    %398 = vmatpush2.msra.mxu0 0.0
    %399 = vmatprep.subr.mxu0 0.0
    %400 = vmatpush2.msra.mxu0 0.0
    %401 = vmatprep.subr.mxu0 0.0
    %402 = vmatpush2.msra.mxu0 0.0
    %403 = vmatprep.subr.mxu0 0.0
    %404 = vmatpush2.msra.mxu0 0.0
    %405 = vmatprep.subr.mxu0 0.0
    %406 = vmatpush2.msra.mxu0 0.0
    %407 = vmatprep.subr.mxu0 0.0
    %408 = vmatpush2.msra.mxu0 0.0
    %409 = vmatprep.subr.mxu0 0.0
    %410 = vmatpush2.msra.mxu0 0.0
    %411 = vmatprep.subr.mxu0 0.0
    %412 = vmatpush2.msra.mxu0 0.0
    %413 = vmatprep.subr.mxu0 0.0
    %414 = vmatpush2.msra.mxu0 0.0
    %415 = vmatprep.subr.mxu0 0.0
    %416 = vmatpush2.msra.mxu0 0.0
    %417 = vmatprep.subr.mxu0 0.0
    %418 = vmatpush2.msra.mxu0 0.0
    %419 = vmatprep.subr.mxu0 0.0
    %420 = vmatpush2.msra.mxu0 0.0
    %421 = vmatprep.mubr.f32.mxu0 0.0
    %422 = vmatmul.mubr.f32.gmra.mxu0 %v213
    %v423 = vpop.f32.mrf.mxu0
    %v424 = vadd.f32 0.0, %v423
    %v425 = vpop.f32.mrf.mxu0
    %v426 = vadd.f32 0.0, %v425
    %427 = vdwg.mxu0
    %v429 = vsel %vm211, %v190, 0
    %431 = vmatprep.subr.mxu0 0.0
    %432 = vmatpush1.msra.mxu0 0.0
    %433 = vmatprep.subr.mxu0 0.0
    %434 = vmatpush1.msra.mxu0 0.0
    %435 = vmatprep.subr.mxu0 0.0
    %436 = vmatpush1.msra.mxu0 0.0
    %437 = vmatprep.subr.mxu0 0.0
    %438 = vmatpush1.msra.mxu0 0.0
    %439 = vmatprep.subr.mxu0 0.0
    %440 = vmatpush1.msra.mxu0 0.0
    %441 = vmatprep.subr.mxu0 0.0
    %442 = vmatpush1.msra.mxu0 0.0
    %443 = vmatprep.subr.mxu0 0.0
    %444 = vmatpush1.msra.mxu0 0.0
    %445 = vmatprep.subr.mxu0 0.0
    %446 = vmatpush1.msra.mxu0 0.0
    %447 = vmatprep.subr.mxu0 0.0
    %448 = vmatpush1.msra.mxu0 0.0
    %449 = vmatprep.subr.mxu0 0.0
    %450 = vmatpush1.msra.mxu0 0.0
    %451 = vmatprep.subr.mxu0 0.0
    %452 = vmatpush1.msra.mxu0 0.0
    %453 = vmatprep.subr.mxu0 0.0
    %454 = vmatpush1.msra.mxu0 0.0
    %455 = vmatprep.subr.mxu0 0.0
    %456 = vmatpush1.msra.mxu0 0.0
    %457 = vmatprep.subr.mxu0 0.0
    %458 = vmatpush1.msra.mxu0 0.0
    %459 = vmatprep.subr.mxu0 0.0
    %460 = vmatpush1.msra.mxu0 0.0
    %461 = vmatprep.subr.mxu0 %v188
    %462 = vmatpush1.msra.mxu0 %v189
    %463 = vmatprep.subr.mxu0 0.0
    %464 = vmatpush2.msra.mxu0 0.0
    %465 = vmatprep.subr.mxu0 0.0
    %466 = vmatpush2.msra.mxu0 0.0
    %467 = vmatprep.subr.mxu0 0.0
    %468 = vmatpush2.msra.mxu0 0.0
    %469 = vmatprep.subr.mxu0 0.0
    %470 = vmatpush2.msra.mxu0 0.0
    %471 = vmatprep.subr.mxu0 0.0
    %472 = vmatpush2.msra.mxu0 0.0
    %473 = vmatprep.subr.mxu0 0.0
    %474 = vmatpush2.msra.mxu0 0.0
    %475 = vmatprep.subr.mxu0 0.0
    %476 = vmatpush2.msra.mxu0 0.0
    %477 = vmatprep.subr.mxu0 0.0
    %478 = vmatpush2.msra.mxu0 0.0
    %479 = vmatprep.subr.mxu0 0.0
    %480 = vmatpush2.msra.mxu0 0.0
    %481 = vmatprep.subr.mxu0 0.0
    %482 = vmatpush2.msra.mxu0 0.0
    %483 = vmatprep.subr.mxu0 0.0
    %484 = vmatpush2.msra.mxu0 0.0
    %485 = vmatprep.subr.mxu0 0.0
    %486 = vmatpush2.msra.mxu0 0.0
    %487 = vmatprep.subr.mxu0 0.0
    %488 = vmatpush2.msra.mxu0 0.0
    %489 = vmatprep.subr.mxu0 0.0
    %490 = vmatpush2.msra.mxu0 0.0
    %491 = vmatprep.subr.mxu0 0.0
    %492 = vmatpush2.msra.mxu0 0.0
    %493 = vmatprep.subr.mxu0 0.0
    %494 = vmatpush2.msra.mxu0 0.0
    %495 = vmatprep.mubr.f32.mxu0 0.0
    %496 = vmatmul.mubr.f32.gmra.mxu0 %v429
    %v497 = vpop.f32.mrf.mxu0
    %v498 = vadd.f32 %v282, %v497
    %v499 = vpop.f32.mrf.mxu0
    %v500 = vadd.f32 %v284, %v499
    %501 = vdwg.mxu0
    %502 = vmatprep.subr.mxu0 0.0
    %503 = vmatpush1.msra.mxu0 0.0
    %504 = vmatprep.subr.mxu0 0.0
    %505 = vmatpush1.msra.mxu0 0.0
    %506 = vmatprep.subr.mxu0 0.0
    %507 = vmatpush1.msra.mxu0 0.0
    %508 = vmatprep.subr.mxu0 0.0
    %509 = vmatpush1.msra.mxu0 0.0
    %510 = vmatprep.subr.mxu0 0.0
    %511 = vmatpush1.msra.mxu0 0.0
    %512 = vmatprep.subr.mxu0 0.0
    %513 = vmatpush1.msra.mxu0 0.0
    %514 = vmatprep.subr.mxu0 0.0
    %515 = vmatpush1.msra.mxu0 0.0
    %516 = vmatprep.subr.mxu0 0.0
    %517 = vmatpush1.msra.mxu0 0.0
    %518 = vmatprep.subr.mxu0 0.0
    %519 = vmatpush1.msra.mxu0 0.0
    %520 = vmatprep.subr.mxu0 0.0
    %521 = vmatpush1.msra.mxu0 0.0
    %522 = vmatprep.subr.mxu0 0.0
    %523 = vmatpush1.msra.mxu0 0.0
    %524 = vmatprep.subr.mxu0 0.0
    %525 = vmatpush1.msra.mxu0 0.0
    %526 = vmatprep.subr.mxu0 0.0
    %527 = vmatpush1.msra.mxu0 0.0
    %528 = vmatprep.subr.mxu0 0.0
    %529 = vmatpush1.msra.mxu0 0.0
    %530 = vmatprep.subr.mxu0 0.0
    %531 = vmatpush1.msra.mxu0 0.0
    %532 = vmatprep.subr.mxu0 %v186
    %533 = vmatpush1.msra.mxu0 %v187
    %534 = vmatprep.subr.mxu0 0.0
    %535 = vmatpush2.msra.mxu0 0.0
    %536 = vmatprep.subr.mxu0 0.0
    %537 = vmatpush2.msra.mxu0 0.0
    %538 = vmatprep.subr.mxu0 0.0
    %539 = vmatpush2.msra.mxu0 0.0
    %540 = vmatprep.subr.mxu0 0.0
    %541 = vmatpush2.msra.mxu0 0.0
    %542 = vmatprep.subr.mxu0 0.0
    %543 = vmatpush2.msra.mxu0 0.0
    %544 = vmatprep.subr.mxu0 0.0
    %545 = vmatpush2.msra.mxu0 0.0
    %546 = vmatprep.subr.mxu0 0.0
    %547 = vmatpush2.msra.mxu0 0.0
    %548 = vmatprep.subr.mxu0 0.0
    %549 = vmatpush2.msra.mxu0 0.0
    %550 = vmatprep.subr.mxu0 0.0
    %551 = vmatpush2.msra.mxu0 0.0
    %552 = vmatprep.subr.mxu0 0.0
    %553 = vmatpush2.msra.mxu0 0.0
    %554 = vmatprep.subr.mxu0 0.0
    %555 = vmatpush2.msra.mxu0 0.0
    %556 = vmatprep.subr.mxu0 0.0
    %557 = vmatpush2.msra.mxu0 0.0
    %558 = vmatprep.subr.mxu0 0.0
    %559 = vmatpush2.msra.mxu0 0.0
    %560 = vmatprep.subr.mxu0 0.0
    %561 = vmatpush2.msra.mxu0 0.0
    %562 = vmatprep.subr.mxu0 0.0
    %563 = vmatpush2.msra.mxu0 0.0
    %564 = vmatprep.subr.mxu0 0.0
    %565 = vmatpush2.msra.mxu0 0.0
    %566 = vmatprep.mubr.f32.mxu0 0.0
    %567 = vmatmul.mubr.f32.gmra.mxu0 %v429
    %v568 = vpop.f32.mrf.mxu0
    %v569 = vadd.f32 %v353, %v568
    %v570 = vpop.f32.mrf.mxu0
    %v571 = vadd.f32 %v355, %v570
    %572 = vdwg.mxu0
    %573 = vmatprep.subr.mxu0 0.0
    %574 = vmatpush1.msra.mxu0 0.0
    %575 = vmatprep.subr.mxu0 0.0
    %576 = vmatpush1.msra.mxu0 0.0
    %577 = vmatprep.subr.mxu0 0.0
    %578 = vmatpush1.msra.mxu0 0.0
    %579 = vmatprep.subr.mxu0 0.0
    %580 = vmatpush1.msra.mxu0 0.0
    %581 = vmatprep.subr.mxu0 0.0
    %582 = vmatpush1.msra.mxu0 0.0
    %583 = vmatprep.subr.mxu0 0.0
    %584 = vmatpush1.msra.mxu0 0.0
    %585 = vmatprep.subr.mxu0 0.0
    %586 = vmatpush1.msra.mxu0 0.0
    %587 = vmatprep.subr.mxu0 0.0
    %588 = vmatpush1.msra.mxu0 0.0
    %589 = vmatprep.subr.mxu0 0.0
    %590 = vmatpush1.msra.mxu0 0.0
    %591 = vmatprep.subr.mxu0 0.0
    %592 = vmatpush1.msra.mxu0 0.0
    %593 = vmatprep.subr.mxu0 0.0
    %594 = vmatpush1.msra.mxu0 0.0
    %595 = vmatprep.subr.mxu0 0.0
    %596 = vmatpush1.msra.mxu0 0.0
    %597 = vmatprep.subr.mxu0 0.0
    %598 = vmatpush1.msra.mxu0 0.0
    %599 = vmatprep.subr.mxu0 0.0
    %600 = vmatpush1.msra.mxu0 0.0
    %601 = vmatprep.subr.mxu0 0.0
    %602 = vmatpush1.msra.mxu0 0.0
    %603 = vmatprep.subr.mxu0 %v184
    %604 = vmatpush1.msra.mxu0 %v185
    %605 = vmatprep.subr.mxu0 0.0
    %606 = vmatpush2.msra.mxu0 0.0
    %607 = vmatprep.subr.mxu0 0.0
    %608 = vmatpush2.msra.mxu0 0.0
    %609 = vmatprep.subr.mxu0 0.0
    %610 = vmatpush2.msra.mxu0 0.0
    %611 = vmatprep.subr.mxu0 0.0
    %612 = vmatpush2.msra.mxu0 0.0
    %613 = vmatprep.subr.mxu0 0.0
    %614 = vmatpush2.msra.mxu0 0.0
    %615 = vmatprep.subr.mxu0 0.0
    %616 = vmatpush2.msra.mxu0 0.0
    %617 = vmatprep.subr.mxu0 0.0
    %618 = vmatpush2.msra.mxu0 0.0
    %619 = vmatprep.subr.mxu0 0.0
    %620 = vmatpush2.msra.mxu0 0.0
    %621 = vmatprep.subr.mxu0 0.0
    %622 = vmatpush2.msra.mxu0 0.0
    %623 = vmatprep.subr.mxu0 0.0
    %624 = vmatpush2.msra.mxu0 0.0
    %625 = vmatprep.subr.mxu0 0.0
    %626 = vmatpush2.msra.mxu0 0.0
    %627 = vmatprep.subr.mxu0 0.0
    %628 = vmatpush2.msra.mxu0 0.0
    %629 = vmatprep.subr.mxu0 0.0
    %630 = vmatpush2.msra.mxu0 0.0
    %631 = vmatprep.subr.mxu0 0.0
    %632 = vmatpush2.msra.mxu0 0.0
    %633 = vmatprep.subr.mxu0 0.0
    %634 = vmatpush2.msra.mxu0 0.0
    %635 = vmatprep.subr.mxu0 0.0
    %636 = vmatpush2.msra.mxu0 0.0
    %637 = vmatprep.mubr.f32.mxu0 0.0
    %638 = vmatmul.mubr.f32.gmra.mxu0 %v429
    %v639 = vpop.f32.mrf.mxu0
    %v640 = vadd.f32 %v424, %v639
    %v641 = vpop.f32.mrf.mxu0
    %v642 = vadd.f32 %v426, %v641
    %643 = vdwg.mxu0
    %644 = vrot.lane.b32.xlu0 %v163, 17
    %v645 = vpop.permute.xlu0 %644
    %646 = vrot.lane.b32.xlu0 %v164, 17
    %v647 = vpop.permute.xlu0 %646
    %648 = vrot.lane.b32.xlu0 %v165, 17
    %v649 = vpop.permute.xlu0 %648
    %650 = vrot.lane.b32.xlu0 %v166, 17
    %v651 = vpop.permute.xlu0 %650
    %652 = vrot.lane.b32.xlu0 %v167, 17
    %v653 = vpop.permute.xlu0 %652
    %654 = vrot.lane.b32.xlu0 %v168, 17
    %v655 = vpop.permute.xlu0 %654
    %vm656 = vcmp.lt.s32.totalorder %v182, 17
    %v657 = vsel %vm656, %v653, %v655
    %v658 = vsel %vm656, %v651, %v653
    %v659 = vsel %vm656, %v649, %v651
    %v660 = vsel %vm656, %v647, %v649
    %v661 = vsel %vm656, %v645, %v647
    %v662 = vsel %vm656, %v655, %v645
    %v663 = vld [vmem:[%s4 + $0x10] sm:$0xff]
    %v665 = vsel %vm211, %v663, 0
    %667 = vmatprep.subr.mxu0 0.0
    %668 = vmatpush1.msra.mxu0 0.0
    %669 = vmatprep.subr.mxu0 0.0
    %670 = vmatpush1.msra.mxu0 0.0
    %671 = vmatprep.subr.mxu0 0.0
    %672 = vmatpush1.msra.mxu0 0.0
    %673 = vmatprep.subr.mxu0 0.0
    %674 = vmatpush1.msra.mxu0 0.0
    %675 = vmatprep.subr.mxu0 0.0
    %676 = vmatpush1.msra.mxu0 0.0
    %677 = vmatprep.subr.mxu0 0.0
    %678 = vmatpush1.msra.mxu0 0.0
    %679 = vmatprep.subr.mxu0 0.0
    %680 = vmatpush1.msra.mxu0 0.0
    %681 = vmatprep.subr.mxu0 0.0
    %682 = vmatpush1.msra.mxu0 0.0
    %683 = vmatprep.subr.mxu0 0.0
    %684 = vmatpush1.msra.mxu0 0.0
    %685 = vmatprep.subr.mxu0 0.0
    %686 = vmatpush1.msra.mxu0 0.0
    %687 = vmatprep.subr.mxu0 0.0
    %688 = vmatpush1.msra.mxu0 0.0
    %689 = vmatprep.subr.mxu0 0.0
    %690 = vmatpush1.msra.mxu0 0.0
    %691 = vmatprep.subr.mxu0 0.0
    %692 = vmatpush1.msra.mxu0 0.0
    %693 = vmatprep.subr.mxu0 0.0
    %694 = vmatpush1.msra.mxu0 0.0
    %695 = vmatprep.subr.mxu0 0.0
    %696 = vmatpush1.msra.mxu0 0.0
    %697 = vmatprep.subr.mxu0 %v661
    %698 = vmatpush1.msra.mxu0 %v662
    %699 = vmatprep.subr.mxu0 0.0
    %700 = vmatpush2.msra.mxu0 0.0
    %701 = vmatprep.subr.mxu0 0.0
    %702 = vmatpush2.msra.mxu0 0.0
    %703 = vmatprep.subr.mxu0 0.0
    %704 = vmatpush2.msra.mxu0 0.0
    %705 = vmatprep.subr.mxu0 0.0
    %706 = vmatpush2.msra.mxu0 0.0
    %707 = vmatprep.subr.mxu0 0.0
    %708 = vmatpush2.msra.mxu0 0.0
    %709 = vmatprep.subr.mxu0 0.0
    %710 = vmatpush2.msra.mxu0 0.0
    %711 = vmatprep.subr.mxu0 0.0
    %712 = vmatpush2.msra.mxu0 0.0
    %713 = vmatprep.subr.mxu0 0.0
    %714 = vmatpush2.msra.mxu0 0.0
    %715 = vmatprep.subr.mxu0 0.0
    %716 = vmatpush2.msra.mxu0 0.0
    %717 = vmatprep.subr.mxu0 0.0
    %718 = vmatpush2.msra.mxu0 0.0
    %719 = vmatprep.subr.mxu0 0.0
    %720 = vmatpush2.msra.mxu0 0.0
    %721 = vmatprep.subr.mxu0 0.0
    %722 = vmatpush2.msra.mxu0 0.0
    %723 = vmatprep.subr.mxu0 0.0
    %724 = vmatpush2.msra.mxu0 0.0
    %725 = vmatprep.subr.mxu0 0.0
    %726 = vmatpush2.msra.mxu0 0.0
    %727 = vmatprep.subr.mxu0 0.0
    %728 = vmatpush2.msra.mxu0 0.0
    %729 = vmatprep.subr.mxu0 0.0
    %730 = vmatpush2.msra.mxu0 0.0
    %731 = vmatprep.mubr.f32.mxu0 0.0
    %732 = vmatmul.mubr.f32.gmra.mxu0 %v665
    %v733 = vpop.f32.mrf.mxu0
    %v734 = vadd.f32 0.0, %v733
    %v735 = vpop.f32.mrf.mxu0
    %v736 = vadd.f32 0.0, %v735
    %737 = vdwg.mxu0
    %738 = vmatprep.subr.mxu0 0.0
    %739 = vmatpush1.msra.mxu0 0.0
    %740 = vmatprep.subr.mxu0 0.0
    %741 = vmatpush1.msra.mxu0 0.0
    %742 = vmatprep.subr.mxu0 0.0
    %743 = vmatpush1.msra.mxu0 0.0
    %744 = vmatprep.subr.mxu0 0.0
    %745 = vmatpush1.msra.mxu0 0.0
    %746 = vmatprep.subr.mxu0 0.0
    %747 = vmatpush1.msra.mxu0 0.0
    %748 = vmatprep.subr.mxu0 0.0
    %749 = vmatpush1.msra.mxu0 0.0
    %750 = vmatprep.subr.mxu0 0.0
    %751 = vmatpush1.msra.mxu0 0.0
    %752 = vmatprep.subr.mxu0 0.0
    %753 = vmatpush1.msra.mxu0 0.0
    %754 = vmatprep.subr.mxu0 0.0
    %755 = vmatpush1.msra.mxu0 0.0
    %756 = vmatprep.subr.mxu0 0.0
    %757 = vmatpush1.msra.mxu0 0.0
    %758 = vmatprep.subr.mxu0 0.0
    %759 = vmatpush1.msra.mxu0 0.0
    %760 = vmatprep.subr.mxu0 0.0
    %761 = vmatpush1.msra.mxu0 0.0
    %762 = vmatprep.subr.mxu0 0.0
    %763 = vmatpush1.msra.mxu0 0.0
    %764 = vmatprep.subr.mxu0 0.0
    %765 = vmatpush1.msra.mxu0 0.0
    %766 = vmatprep.subr.mxu0 0.0
    %767 = vmatpush1.msra.mxu0 0.0
    %768 = vmatprep.subr.mxu0 %v659
    %769 = vmatpush1.msra.mxu0 %v660
    %770 = vmatprep.subr.mxu0 0.0
    %771 = vmatpush2.msra.mxu0 0.0
    %772 = vmatprep.subr.mxu0 0.0
    %773 = vmatpush2.msra.mxu0 0.0
    %774 = vmatprep.subr.mxu0 0.0
    %775 = vmatpush2.msra.mxu0 0.0
    %776 = vmatprep.subr.mxu0 0.0
    %777 = vmatpush2.msra.mxu0 0.0
    %778 = vmatprep.subr.mxu0 0.0
    %779 = vmatpush2.msra.mxu0 0.0
    %780 = vmatprep.subr.mxu0 0.0
    %781 = vmatpush2.msra.mxu0 0.0
    %782 = vmatprep.subr.mxu0 0.0
    %783 = vmatpush2.msra.mxu0 0.0
    %784 = vmatprep.subr.mxu0 0.0
    %785 = vmatpush2.msra.mxu0 0.0
    %786 = vmatprep.subr.mxu0 0.0
    %787 = vmatpush2.msra.mxu0 0.0
    %788 = vmatprep.subr.mxu0 0.0
    %789 = vmatpush2.msra.mxu0 0.0
    %790 = vmatprep.subr.mxu0 0.0
    %791 = vmatpush2.msra.mxu0 0.0
    %792 = vmatprep.subr.mxu0 0.0
    %793 = vmatpush2.msra.mxu0 0.0
    %794 = vmatprep.subr.mxu0 0.0
    %795 = vmatpush2.msra.mxu0 0.0
    %796 = vmatprep.subr.mxu0 0.0
    %797 = vmatpush2.msra.mxu0 0.0
    %798 = vmatprep.subr.mxu0 0.0
    %799 = vmatpush2.msra.mxu0 0.0
    %800 = vmatprep.subr.mxu0 0.0
    %801 = vmatpush2.msra.mxu0 0.0
    %802 = vmatprep.mubr.f32.mxu0 0.0
    %803 = vmatmul.mubr.f32.gmra.mxu0 %v665
    %v804 = vpop.f32.mrf.mxu0
    %v805 = vadd.f32 0.0, %v804
    %v806 = vpop.f32.mrf.mxu0
    %v807 = vadd.f32 0.0, %v806
    %808 = vdwg.mxu0
    %809 = vmatprep.subr.mxu0 0.0
    %810 = vmatpush1.msra.mxu0 0.0
    %811 = vmatprep.subr.mxu0 0.0
    %812 = vmatpush1.msra.mxu0 0.0
    %813 = vmatprep.subr.mxu0 0.0
    %814 = vmatpush1.msra.mxu0 0.0
    %815 = vmatprep.subr.mxu0 0.0
    %816 = vmatpush1.msra.mxu0 0.0
    %817 = vmatprep.subr.mxu0 0.0
    %818 = vmatpush1.msra.mxu0 0.0
    %819 = vmatprep.subr.mxu0 0.0
    %820 = vmatpush1.msra.mxu0 0.0
    %821 = vmatprep.subr.mxu0 0.0
    %822 = vmatpush1.msra.mxu0 0.0
    %823 = vmatprep.subr.mxu0 0.0
    %824 = vmatpush1.msra.mxu0 0.0
    %825 = vmatprep.subr.mxu0 0.0
    %826 = vmatpush1.msra.mxu0 0.0
    %827 = vmatprep.subr.mxu0 0.0
    %828 = vmatpush1.msra.mxu0 0.0
    %829 = vmatprep.subr.mxu0 0.0
    %830 = vmatpush1.msra.mxu0 0.0
    %831 = vmatprep.subr.mxu0 0.0
    %832 = vmatpush1.msra.mxu0 0.0
    %833 = vmatprep.subr.mxu0 0.0
    %834 = vmatpush1.msra.mxu0 0.0
    %835 = vmatprep.subr.mxu0 0.0
    %836 = vmatpush1.msra.mxu0 0.0
    %837 = vmatprep.subr.mxu0 0.0
    %838 = vmatpush1.msra.mxu0 0.0
    %839 = vmatprep.subr.mxu0 %v657
    %840 = vmatpush1.msra.mxu0 %v658
    %841 = vmatprep.subr.mxu0 0.0
    %842 = vmatpush2.msra.mxu0 0.0
    %843 = vmatprep.subr.mxu0 0.0
    %844 = vmatpush2.msra.mxu0 0.0
    %845 = vmatprep.subr.mxu0 0.0
    %846 = vmatpush2.msra.mxu0 0.0
    %847 = vmatprep.subr.mxu0 0.0
    %848 = vmatpush2.msra.mxu0 0.0
    %849 = vmatprep.subr.mxu0 0.0
    %850 = vmatpush2.msra.mxu0 0.0
    %851 = vmatprep.subr.mxu0 0.0
    %852 = vmatpush2.msra.mxu0 0.0
    %853 = vmatprep.subr.mxu0 0.0
    %854 = vmatpush2.msra.mxu0 0.0
    %855 = vmatprep.subr.mxu0 0.0
    %856 = vmatpush2.msra.mxu0 0.0
    %857 = vmatprep.subr.mxu0 0.0
    %858 = vmatpush2.msra.mxu0 0.0
    %859 = vmatprep.subr.mxu0 0.0
    %860 = vmatpush2.msra.mxu0 0.0
    %861 = vmatprep.subr.mxu0 0.0
    %862 = vmatpush2.msra.mxu0 0.0
    %863 = vmatprep.subr.mxu0 0.0
    %864 = vmatpush2.msra.mxu0 0.0
    %865 = vmatprep.subr.mxu0 0.0
    %866 = vmatpush2.msra.mxu0 0.0
    %867 = vmatprep.subr.mxu0 0.0
    %868 = vmatpush2.msra.mxu0 0.0
    %869 = vmatprep.subr.mxu0 0.0
    %870 = vmatpush2.msra.mxu0 0.0
    %871 = vmatprep.subr.mxu0 0.0
    %872 = vmatpush2.msra.mxu0 0.0
    %873 = vmatprep.mubr.f32.mxu0 0.0
    %874 = vmatmul.mubr.f32.gmra.mxu0 %v665
    %v875 = vpop.f32.mrf.mxu0
    %v876 = vadd.f32 0.0, %v875
    %v877 = vpop.f32.mrf.mxu0
    %v878 = vadd.f32 0.0, %v877
    %879 = vdwg.mxu0
    %v880 = vadd.f32 %v498, %v734
    %v881 = vadd.f32 %v500, %v736
    %v882 = vadd.f32 %v569, %v805
    %v883 = vadd.f32 %v571, %v807
    %v884 = vadd.f32 %v640, %v876
    %v885 = vadd.f32 %v642, %v878
    %886 = vrot.lane.b32.xlu0 %v163, 1
    %v887 = vpop.permute.xlu0 %886
    %888 = vrot.lane.b32.xlu0 %v164, 1
    %v889 = vpop.permute.xlu0 %888
    %890 = vrot.lane.b32.xlu0 %v165, 1
    %v891 = vpop.permute.xlu0 %890
    %892 = vrot.lane.b32.xlu0 %v166, 1
    %v893 = vpop.permute.xlu0 %892
    %894 = vrot.lane.b32.xlu0 %v167, 1
    %v895 = vpop.permute.xlu0 %894
    %896 = vrot.lane.b32.xlu0 %v168, 1
    %v897 = vpop.permute.xlu0 %896
    %vm898 = vcmp.lt.s32.totalorder %v182, 1
    %v899 = vsel %vm898, %v895, %v897
    %v900 = vsel %vm898, %v893, %v895
    %v901 = vsel %vm898, %v891, %v893
    %v902 = vsel %vm898, %v889, %v891
    %v903 = vsel %vm898, %v887, %v889
    %v904 = vsel %vm898, %v897, %v887
    %v905 = vld [vmem:[%s4 + $0x18] sm:$0xff]
    %v907 = vsel %vm211, %v905, 0
    %909 = vmatprep.subr.mxu0 0.0
    %910 = vmatpush1.msra.mxu0 0.0
    %911 = vmatprep.subr.mxu0 0.0
    %912 = vmatpush1.msra.mxu0 0.0
    %913 = vmatprep.subr.mxu0 0.0
    %914 = vmatpush1.msra.mxu0 0.0
    %915 = vmatprep.subr.mxu0 0.0
    %916 = vmatpush1.msra.mxu0 0.0
    %917 = vmatprep.subr.mxu0 0.0
    %918 = vmatpush1.msra.mxu0 0.0
    %919 = vmatprep.subr.mxu0 0.0
    %920 = vmatpush1.msra.mxu0 0.0
    %921 = vmatprep.subr.mxu0 0.0
    %922 = vmatpush1.msra.mxu0 0.0
    %923 = vmatprep.subr.mxu0 0.0
    %924 = vmatpush1.msra.mxu0 0.0
    %925 = vmatprep.subr.mxu0 0.0
    %926 = vmatpush1.msra.mxu0 0.0
    %927 = vmatprep.subr.mxu0 0.0
    %928 = vmatpush1.msra.mxu0 0.0
    %929 = vmatprep.subr.mxu0 0.0
    %930 = vmatpush1.msra.mxu0 0.0
    %931 = vmatprep.subr.mxu0 0.0
    %932 = vmatpush1.msra.mxu0 0.0
    %933 = vmatprep.subr.mxu0 0.0
    %934 = vmatpush1.msra.mxu0 0.0
    %935 = vmatprep.subr.mxu0 0.0
    %936 = vmatpush1.msra.mxu0 0.0
    %937 = vmatprep.subr.mxu0 0.0
    %938 = vmatpush1.msra.mxu0 0.0
    %939 = vmatprep.subr.mxu0 %v903
    %940 = vmatpush1.msra.mxu0 %v904
    %941 = vmatprep.subr.mxu0 0.0
    %942 = vmatpush2.msra.mxu0 0.0
    %943 = vmatprep.subr.mxu0 0.0
    %944 = vmatpush2.msra.mxu0 0.0
    %945 = vmatprep.subr.mxu0 0.0
    %946 = vmatpush2.msra.mxu0 0.0
    %947 = vmatprep.subr.mxu0 0.0
    %948 = vmatpush2.msra.mxu0 0.0
    %949 = vmatprep.subr.mxu0 0.0
    %950 = vmatpush2.msra.mxu0 0.0
    %951 = vmatprep.subr.mxu0 0.0
    %952 = vmatpush2.msra.mxu0 0.0
    %953 = vmatprep.subr.mxu0 0.0
    %954 = vmatpush2.msra.mxu0 0.0
    %955 = vmatprep.subr.mxu0 0.0
    %956 = vmatpush2.msra.mxu0 0.0
    %957 = vmatprep.subr.mxu0 0.0
    %958 = vmatpush2.msra.mxu0 0.0
    %959 = vmatprep.subr.mxu0 0.0
    %960 = vmatpush2.msra.mxu0 0.0
    %961 = vmatprep.subr.mxu0 0.0
    %962 = vmatpush2.msra.mxu0 0.0
    %963 = vmatprep.subr.mxu0 0.0
    %964 = vmatpush2.msra.mxu0 0.0
    %965 = vmatprep.subr.mxu0 0.0
    %966 = vmatpush2.msra.mxu0 0.0
    %967 = vmatprep.subr.mxu0 0.0
    %968 = vmatpush2.msra.mxu0 0.0
    %969 = vmatprep.subr.mxu0 0.0
    %970 = vmatpush2.msra.mxu0 0.0
    %971 = vmatprep.subr.mxu0 0.0
    %972 = vmatpush2.msra.mxu0 0.0
    %973 = vmatprep.mubr.f32.mxu0 0.0
    %974 = vmatmul.mubr.f32.gmra.mxu0 %v907
    %v975 = vpop.f32.mrf.mxu0
    %v976 = vadd.f32 0.0, %v975
    %v977 = vpop.f32.mrf.mxu0
    %v978 = vadd.f32 0.0, %v977
    %979 = vdwg.mxu0
    %980 = vmatprep.subr.mxu0 0.0
    %981 = vmatpush1.msra.mxu0 0.0
    %982 = vmatprep.subr.mxu0 0.0
    %983 = vmatpush1.msra.mxu0 0.0
    %984 = vmatprep.subr.mxu0 0.0
    %985 = vmatpush1.msra.mxu0 0.0
    %986 = vmatprep.subr.mxu0 0.0
    %987 = vmatpush1.msra.mxu0 0.0
    %988 = vmatprep.subr.mxu0 0.0
    %989 = vmatpush1.msra.mxu0 0.0
    %990 = vmatprep.subr.mxu0 0.0
    %991 = vmatpush1.msra.mxu0 0.0
    %992 = vmatprep.subr.mxu0 0.0
    %993 = vmatpush1.msra.mxu0 0.0
    %994 = vmatprep.subr.mxu0 0.0
    %995 = vmatpush1.msra.mxu0 0.0
    %996 = vmatprep.subr.mxu0 0.0
    %997 = vmatpush1.msra.mxu0 0.0
    %998 = vmatprep.subr.mxu0 0.0
    %999 = vmatpush1.msra.mxu0 0.0
    %1000 = vmatprep.subr.mxu0 0.0
    %1001 = vmatpush1.msra.mxu0 0.0
    %1002 = vmatprep.subr.mxu0 0.0
    %1003 = vmatpush1.msra.mxu0 0.0
    %1004 = vmatprep.subr.mxu0 0.0
    %1005 = vmatpush1.msra.mxu0 0.0
    %1006 = vmatprep.subr.mxu0 0.0
    %1007 = vmatpush1.msra.mxu0 0.0
    %1008 = vmatprep.subr.mxu0 0.0
    %1009 = vmatpush1.msra.mxu0 0.0
    %1010 = vmatprep.subr.mxu0 %v901
    %1011 = vmatpush1.msra.mxu0 %v902
    %1012 = vmatprep.subr.mxu0 0.0
    %1013 = vmatpush2.msra.mxu0 0.0
    %1014 = vmatprep.subr.mxu0 0.0
    %1015 = vmatpush2.msra.mxu0 0.0
    %1016 = vmatprep.subr.mxu0 0.0
    %1017 = vmatpush2.msra.mxu0 0.0
    %1018 = vmatprep.subr.mxu0 0.0
    %1019 = vmatpush2.msra.mxu0 0.0
    %1020 = vmatprep.subr.mxu0 0.0
    %1021 = vmatpush2.msra.mxu0 0.0
    %1022 = vmatprep.subr.mxu0 0.0
    %1023 = vmatpush2.msra.mxu0 0.0
    %1024 = vmatprep.subr.mxu0 0.0
    %1025 = vmatpush2.msra.mxu0 0.0
    %1026 = vmatprep.subr.mxu0 0.0
    %1027 = vmatpush2.msra.mxu0 0.0
    %1028 = vmatprep.subr.mxu0 0.0
    %1029 = vmatpush2.msra.mxu0 0.0
    %1030 = vmatprep.subr.mxu0 0.0
    %1031 = vmatpush2.msra.mxu0 0.0
    %1032 = vmatprep.subr.mxu0 0.0
    %1033 = vmatpush2.msra.mxu0 0.0
    %1034 = vmatprep.subr.mxu0 0.0
    %1035 = vmatpush2.msra.mxu0 0.0
    %1036 = vmatprep.subr.mxu0 0.0
    %1037 = vmatpush2.msra.mxu0 0.0
    %1038 = vmatprep.subr.mxu0 0.0
    %1039 = vmatpush2.msra.mxu0 0.0
    %1040 = vmatprep.subr.mxu0 0.0
    %1041 = vmatpush2.msra.mxu0 0.0
    %1042 = vmatprep.subr.mxu0 0.0
    %1043 = vmatpush2.msra.mxu0 0.0
    %1044 = vmatprep.mubr.f32.mxu0 0.0
    %1045 = vmatmul.mubr.f32.gmra.mxu0 %v907
    %v1046 = vpop.f32.mrf.mxu0
    %v1047 = vadd.f32 0.0, %v1046
    %v1048 = vpop.f32.mrf.mxu0
    %v1049 = vadd.f32 0.0, %v1048
    %1050 = vdwg.mxu0
    %1051 = vmatprep.subr.mxu0 0.0
    %1052 = vmatpush1.msra.mxu0 0.0
    %1053 = vmatprep.subr.mxu0 0.0
    %1054 = vmatpush1.msra.mxu0 0.0
    %1055 = vmatprep.subr.mxu0 0.0
    %1056 = vmatpush1.msra.mxu0 0.0
    %1057 = vmatprep.subr.mxu0 0.0
    %1058 = vmatpush1.msra.mxu0 0.0
    %1059 = vmatprep.subr.mxu0 0.0
    %1060 = vmatpush1.msra.mxu0 0.0
    %1061 = vmatprep.subr.mxu0 0.0
    %1062 = vmatpush1.msra.mxu0 0.0
    %1063 = vmatprep.subr.mxu0 0.0
    %1064 = vmatpush1.msra.mxu0 0.0
    %1065 = vmatprep.subr.mxu0 0.0
    %1066 = vmatpush1.msra.mxu0 0.0
    %1067 = vmatprep.subr.mxu0 0.0
    %1068 = vmatpush1.msra.mxu0 0.0
    %1069 = vmatprep.subr.mxu0 0.0
    %1070 = vmatpush1.msra.mxu0 0.0
    %1071 = vmatprep.subr.mxu0 0.0
    %1072 = vmatpush1.msra.mxu0 0.0
    %1073 = vmatprep.subr.mxu0 0.0
    %1074 = vmatpush1.msra.mxu0 0.0
    %1075 = vmatprep.subr.mxu0 0.0
    %1076 = vmatpush1.msra.mxu0 0.0
    %1077 = vmatprep.subr.mxu0 0.0
    %1078 = vmatpush1.msra.mxu0 0.0
    %1079 = vmatprep.subr.mxu0 0.0
    %1080 = vmatpush1.msra.mxu0 0.0
    %1081 = vmatprep.subr.mxu0 %v899
    %1082 = vmatpush1.msra.mxu0 %v900
    %1083 = vmatprep.subr.mxu0 0.0
    %1084 = vmatpush2.msra.mxu0 0.0
    %1085 = vmatprep.subr.mxu0 0.0
    %1086 = vmatpush2.msra.mxu0 0.0
    %1087 = vmatprep.subr.mxu0 0.0
    %1088 = vmatpush2.msra.mxu0 0.0
    %1089 = vmatprep.subr.mxu0 0.0
    %1090 = vmatpush2.msra.mxu0 0.0
    %1091 = vmatprep.subr.mxu0 0.0
    %1092 = vmatpush2.msra.mxu0 0.0
    %1093 = vmatprep.subr.mxu0 0.0
    %1094 = vmatpush2.msra.mxu0 0.0
    %1095 = vmatprep.subr.mxu0 0.0
    %1096 = vmatpush2.msra.mxu0 0.0
    %1097 = vmatprep.subr.mxu0 0.0
    %1098 = vmatpush2.msra.mxu0 0.0
    %1099 = vmatprep.subr.mxu0 0.0
    %1100 = vmatpush2.msra.mxu0 0.0
    %1101 = vmatprep.subr.mxu0 0.0
    %1102 = vmatpush2.msra.mxu0 0.0
    %1103 = vmatprep.subr.mxu0 0.0
    %1104 = vmatpush2.msra.mxu0 0.0
    %1105 = vmatprep.subr.mxu0 0.0
    %1106 = vmatpush2.msra.mxu0 0.0
    %1107 = vmatprep.subr.mxu0 0.0
    %1108 = vmatpush2.msra.mxu0 0.0
    %1109 = vmatprep.subr.mxu0 0.0
    %1110 = vmatpush2.msra.mxu0 0.0
    %1111 = vmatprep.subr.mxu0 0.0
    %1112 = vmatpush2.msra.mxu0 0.0
    %1113 = vmatprep.subr.mxu0 0.0
    %1114 = vmatpush2.msra.mxu0 0.0
    %1115 = vmatprep.mubr.f32.mxu0 0.0
    %1116 = vmatmul.mubr.f32.gmra.mxu0 %v907
    %v1117 = vpop.f32.mrf.mxu0
    %v1118 = vadd.f32 0.0, %v1117
    %v1119 = vpop.f32.mrf.mxu0
    %v1120 = vadd.f32 0.0, %v1119
    %1121 = vdwg.mxu0
    %v1122 = vadd.f32 %v880, %v976
    %v1123 = vadd.f32 %v881, %v978
    %v1124 = vadd.f32 %v882, %v1047
    %v1125 = vadd.f32 %v883, %v1049
    %v1126 = vadd.f32 %v884, %v1118
    %v1127 = vadd.f32 %v885, %v1120
    %v1128 = vld [vmem:[%s4 + $0x20] sm:$0xff]
    %v1130 = vsel %vm211, %v1128, 0
    %1132 = vmatprep.subr.mxu0 0.0
    %1133 = vmatpush1.msra.mxu0 0.0
    %1134 = vmatprep.subr.mxu0 0.0
    %1135 = vmatpush1.msra.mxu0 0.0
    %1136 = vmatprep.subr.mxu0 0.0
    %1137 = vmatpush1.msra.mxu0 0.0
    %1138 = vmatprep.subr.mxu0 0.0
    %1139 = vmatpush1.msra.mxu0 0.0
    %1140 = vmatprep.subr.mxu0 0.0
    %1141 = vmatpush1.msra.mxu0 0.0
    %1142 = vmatprep.subr.mxu0 0.0
    %1143 = vmatpush1.msra.mxu0 0.0
    %1144 = vmatprep.subr.mxu0 0.0
    %1145 = vmatpush1.msra.mxu0 0.0
    %1146 = vmatprep.subr.mxu0 0.0
    %1147 = vmatpush1.msra.mxu0 0.0
    %1148 = vmatprep.subr.mxu0 0.0
    %1149 = vmatpush1.msra.mxu0 0.0
    %1150 = vmatprep.subr.mxu0 0.0
    %1151 = vmatpush1.msra.mxu0 0.0
    %1152 = vmatprep.subr.mxu0 0.0
    %1153 = vmatpush1.msra.mxu0 0.0
    %1154 = vmatprep.subr.mxu0 0.0
    %1155 = vmatpush1.msra.mxu0 0.0
    %1156 = vmatprep.subr.mxu0 0.0
    %1157 = vmatpush1.msra.mxu0 0.0
    %1158 = vmatprep.subr.mxu0 0.0
    %1159 = vmatpush1.msra.mxu0 0.0
    %1160 = vmatprep.subr.mxu0 0.0
    %1161 = vmatpush1.msra.mxu0 0.0
    %1162 = vmatprep.subr.mxu0 %v164
    %1163 = vmatpush1.msra.mxu0 %v163
    %1164 = vmatprep.subr.mxu0 0.0
    %1165 = vmatpush2.msra.mxu0 0.0
    %1166 = vmatprep.subr.mxu0 0.0
    %1167 = vmatpush2.msra.mxu0 0.0
    %1168 = vmatprep.subr.mxu0 0.0
    %1169 = vmatpush2.msra.mxu0 0.0
    %1170 = vmatprep.subr.mxu0 0.0
    %1171 = vmatpush2.msra.mxu0 0.0
    %1172 = vmatprep.subr.mxu0 0.0
    %1173 = vmatpush2.msra.mxu0 0.0
    %1174 = vmatprep.subr.mxu0 0.0
    %1175 = vmatpush2.msra.mxu0 0.0
    %1176 = vmatprep.subr.mxu0 0.0
    %1177 = vmatpush2.msra.mxu0 0.0
    %1178 = vmatprep.subr.mxu0 0.0
    %1179 = vmatpush2.msra.mxu0 0.0
    %1180 = vmatprep.subr.mxu0 0.0
    %1181 = vmatpush2.msra.mxu0 0.0
    %1182 = vmatprep.subr.mxu0 0.0
    %1183 = vmatpush2.msra.mxu0 0.0
    %1184 = vmatprep.subr.mxu0 0.0
    %1185 = vmatpush2.msra.mxu0 0.0
    %1186 = vmatprep.subr.mxu0 0.0
    %1187 = vmatpush2.msra.mxu0 0.0
    %1188 = vmatprep.subr.mxu0 0.0
    %1189 = vmatpush2.msra.mxu0 0.0
    %1190 = vmatprep.subr.mxu0 0.0
    %1191 = vmatpush2.msra.mxu0 0.0
    %1192 = vmatprep.subr.mxu0 0.0
    %1193 = vmatpush2.msra.mxu0 0.0
    %1194 = vmatprep.subr.mxu0 0.0
    %1195 = vmatpush2.msra.mxu0 0.0
    %1196 = vmatprep.mubr.f32.mxu0 0.0
    %1197 = vmatmul.mubr.f32.gmra.mxu0 %v1130
    %v1198 = vpop.f32.mrf.mxu0
    %v1199 = vadd.f32 0.0, %v1198
    %v1200 = vpop.f32.mrf.mxu0
    %v1201 = vadd.f32 0.0, %v1200
    %1202 = vdwg.mxu0
    %1203 = vmatprep.subr.mxu0 0.0
    %1204 = vmatpush1.msra.mxu0 0.0
    %1205 = vmatprep.subr.mxu0 0.0
    %1206 = vmatpush1.msra.mxu0 0.0
    %1207 = vmatprep.subr.mxu0 0.0
    %1208 = vmatpush1.msra.mxu0 0.0
    %1209 = vmatprep.subr.mxu0 0.0
    %1210 = vmatpush1.msra.mxu0 0.0
    %1211 = vmatprep.subr.mxu0 0.0
    %1212 = vmatpush1.msra.mxu0 0.0
    %1213 = vmatprep.subr.mxu0 0.0
    %1214 = vmatpush1.msra.mxu0 0.0
    %1215 = vmatprep.subr.mxu0 0.0
    %1216 = vmatpush1.msra.mxu0 0.0
    %1217 = vmatprep.subr.mxu0 0.0
    %1218 = vmatpush1.msra.mxu0 0.0
    %1219 = vmatprep.subr.mxu0 0.0
    %1220 = vmatpush1.msra.mxu0 0.0
    %1221 = vmatprep.subr.mxu0 0.0
    %1222 = vmatpush1.msra.mxu0 0.0
    %1223 = vmatprep.subr.mxu0 0.0
    %1224 = vmatpush1.msra.mxu0 0.0
    %1225 = vmatprep.subr.mxu0 0.0
    %1226 = vmatpush1.msra.mxu0 0.0
    %1227 = vmatprep.subr.mxu0 0.0
    %1228 = vmatpush1.msra.mxu0 0.0
    %1229 = vmatprep.subr.mxu0 0.0
    %1230 = vmatpush1.msra.mxu0 0.0
    %1231 = vmatprep.subr.mxu0 0.0
    %1232 = vmatpush1.msra.mxu0 0.0
    %1233 = vmatprep.subr.mxu0 %v166
    %1234 = vmatpush1.msra.mxu0 %v165
    %1235 = vmatprep.subr.mxu0 0.0
    %1236 = vmatpush2.msra.mxu0 0.0
    %1237 = vmatprep.subr.mxu0 0.0
    %1238 = vmatpush2.msra.mxu0 0.0
    %1239 = vmatprep.subr.mxu0 0.0
    %1240 = vmatpush2.msra.mxu0 0.0
    %1241 = vmatprep.subr.mxu0 0.0
    %1242 = vmatpush2.msra.mxu0 0.0
    %1243 = vmatprep.subr.mxu0 0.0
    %1244 = vmatpush2.msra.mxu0 0.0
    %1245 = vmatprep.subr.mxu0 0.0
    %1246 = vmatpush2.msra.mxu0 0.0
    %1247 = vmatprep.subr.mxu0 0.0
    %1248 = vmatpush2.msra.mxu0 0.0
    %1249 = vmatprep.subr.mxu0 0.0
    %1250 = vmatpush2.msra.mxu0 0.0
    %1251 = vmatprep.subr.mxu0 0.0
    %1252 = vmatpush2.msra.mxu0 0.0
    %1253 = vmatprep.subr.mxu0 0.0
    %1254 = vmatpush2.msra.mxu0 0.0
    %1255 = vmatprep.subr.mxu0 0.0
    %1256 = vmatpush2.msra.mxu0 0.0
    %1257 = vmatprep.subr.mxu0 0.0
    %1258 = vmatpush2.msra.mxu0 0.0
    %1259 = vmatprep.subr.mxu0 0.0
    %1260 = vmatpush2.msra.mxu0 0.0
    %1261 = vmatprep.subr.mxu0 0.0
    %1262 = vmatpush2.msra.mxu0 0.0
    %1263 = vmatprep.subr.mxu0 0.0
    %1264 = vmatpush2.msra.mxu0 0.0
    %1265 = vmatprep.subr.mxu0 0.0
    %1266 = vmatpush2.msra.mxu0 0.0
    %1267 = vmatprep.mubr.f32.mxu0 0.0
    %1268 = vmatmul.mubr.f32.gmra.mxu0 %v1130
    %v1269 = vpop.f32.mrf.mxu0
    %v1270 = vadd.f32 0.0, %v1269
    %v1271 = vpop.f32.mrf.mxu0
    %v1272 = vadd.f32 0.0, %v1271
    %1273 = vdwg.mxu0
    %1274 = vmatprep.subr.mxu0 0.0
    %1275 = vmatpush1.msra.mxu0 0.0
    %1276 = vmatprep.subr.mxu0 0.0
    %1277 = vmatpush1.msra.mxu0 0.0
    %1278 = vmatprep.subr.mxu0 0.0
    %1279 = vmatpush1.msra.mxu0 0.0
    %1280 = vmatprep.subr.mxu0 0.0
    %1281 = vmatpush1.msra.mxu0 0.0
    %1282 = vmatprep.subr.mxu0 0.0
    %1283 = vmatpush1.msra.mxu0 0.0
    %1284 = vmatprep.subr.mxu0 0.0
    %1285 = vmatpush1.msra.mxu0 0.0
    %1286 = vmatprep.subr.mxu0 0.0
    %1287 = vmatpush1.msra.mxu0 0.0
    %1288 = vmatprep.subr.mxu0 0.0
    %1289 = vmatpush1.msra.mxu0 0.0
    %1290 = vmatprep.subr.mxu0 0.0
    %1291 = vmatpush1.msra.mxu0 0.0
    %1292 = vmatprep.subr.mxu0 0.0
    %1293 = vmatpush1.msra.mxu0 0.0
    %1294 = vmatprep.subr.mxu0 0.0
    %1295 = vmatpush1.msra.mxu0 0.0
    %1296 = vmatprep.subr.mxu0 0.0
    %1297 = vmatpush1.msra.mxu0 0.0
    %1298 = vmatprep.subr.mxu0 0.0
    %1299 = vmatpush1.msra.mxu0 0.0
    %1300 = vmatprep.subr.mxu0 0.0
    %1301 = vmatpush1.msra.mxu0 0.0
    %1302 = vmatprep.subr.mxu0 0.0
    %1303 = vmatpush1.msra.mxu0 0.0
    %1304 = vmatprep.subr.mxu0 %v168
    %1305 = vmatpush1.msra.mxu0 %v167
    %1306 = vmatprep.subr.mxu0 0.0
    %1307 = vmatpush2.msra.mxu0 0.0
    %1308 = vmatprep.subr.mxu0 0.0
    %1309 = vmatpush2.msra.mxu0 0.0
    %1310 = vmatprep.subr.mxu0 0.0
    %1311 = vmatpush2.msra.mxu0 0.0
    %1312 = vmatprep.subr.mxu0 0.0
    %1313 = vmatpush2.msra.mxu0 0.0
    %1314 = vmatprep.subr.mxu0 0.0
    %1315 = vmatpush2.msra.mxu0 0.0
    %1316 = vmatprep.subr.mxu0 0.0
    %1317 = vmatpush2.msra.mxu0 0.0
    %1318 = vmatprep.subr.mxu0 0.0
    %1319 = vmatpush2.msra.mxu0 0.0
    %1320 = vmatprep.subr.mxu0 0.0
    %1321 = vmatpush2.msra.mxu0 0.0
    %1322 = vmatprep.subr.mxu0 0.0
    %1323 = vmatpush2.msra.mxu0 0.0
    %1324 = vmatprep.subr.mxu0 0.0
    %1325 = vmatpush2.msra.mxu0 0.0
    %1326 = vmatprep.subr.mxu0 0.0
    %1327 = vmatpush2.msra.mxu0 0.0
    %1328 = vmatprep.subr.mxu0 0.0
    %1329 = vmatpush2.msra.mxu0 0.0
    %1330 = vmatprep.subr.mxu0 0.0
    %1331 = vmatpush2.msra.mxu0 0.0
    %1332 = vmatprep.subr.mxu0 0.0
    %1333 = vmatpush2.msra.mxu0 0.0
    %1334 = vmatprep.subr.mxu0 0.0
    %1335 = vmatpush2.msra.mxu0 0.0
    %1336 = vmatprep.subr.mxu0 0.0
    %1337 = vmatpush2.msra.mxu0 0.0
    %1338 = vmatprep.mubr.f32.mxu0 0.0
    %1339 = vmatmul.mubr.f32.gmra.mxu0 %v1130
    %v1340 = vpop.f32.mrf.mxu0
    %v1341 = vadd.f32 0.0, %v1340
    %v1342 = vpop.f32.mrf.mxu0
    %v1343 = vadd.f32 0.0, %v1342
    %1344 = vdwg.mxu0
    %v1345 = vadd.f32 %v1122, %v1199
    %v1346 = vadd.f32 %v1123, %v1201
    %v1347 = vadd.f32 %v1124, %v1270
    %v1348 = vadd.f32 %v1125, %v1272
    %v1349 = vadd.f32 %v1126, %v1341
    %v1350 = vadd.f32 %v1127, %v1343
    %1351 = vrot.lane.b32.xlu0 %v163, 127
    %v1352 = vpop.permute.xlu0 %1351
    %1353 = vrot.lane.b32.xlu0 %v164, 127
    %v1354 = vpop.permute.xlu0 %1353
    %1355 = vrot.lane.b32.xlu0 %v165, 127
    %v1356 = vpop.permute.xlu0 %1355
    %1357 = vrot.lane.b32.xlu0 %v166, 127
    %v1358 = vpop.permute.xlu0 %1357
    %1359 = vrot.lane.b32.xlu0 %v167, 127
    %v1360 = vpop.permute.xlu0 %1359
    %1361 = vrot.lane.b32.xlu0 %v168, 127
    %v1362 = vpop.permute.xlu0 %1361
    %vm1363 = vcmp.lt.s32.totalorder %v182, 127
    %v1364 = vsel %vm1363, %v1360, %v1362
    %v1365 = vsel %vm1363, %v1358, %v1360
    %v1366 = vsel %vm1363, %v1356, %v1358
    %v1367 = vsel %vm1363, %v1354, %v1356
    %v1368 = vsel %vm1363, %v1352, %v1354
    %v1369 = vsel %vm1363, %v1362, %v1352
    %v1370 = vld [vmem:[%s4 + $0x28] sm:$0xff]
    %v1372 = vsel %vm211, %v1370, 0
    %1374 = vmatprep.subr.mxu0 0.0
    %1375 = vmatpush1.msra.mxu0 0.0
    %1376 = vmatprep.subr.mxu0 0.0
    %1377 = vmatpush1.msra.mxu0 0.0
    %1378 = vmatprep.subr.mxu0 0.0
    %1379 = vmatpush1.msra.mxu0 0.0
    %1380 = vmatprep.subr.mxu0 0.0
    %1381 = vmatpush1.msra.mxu0 0.0
    %1382 = vmatprep.subr.mxu0 0.0
    %1383 = vmatpush1.msra.mxu0 0.0
    %1384 = vmatprep.subr.mxu0 0.0
    %1385 = vmatpush1.msra.mxu0 0.0
    %1386 = vmatprep.subr.mxu0 0.0
    %1387 = vmatpush1.msra.mxu0 0.0
    %1388 = vmatprep.subr.mxu0 0.0
    %1389 = vmatpush1.msra.mxu0 0.0
    %1390 = vmatprep.subr.mxu0 0.0
    %1391 = vmatpush1.msra.mxu0 0.0
    %1392 = vmatprep.subr.mxu0 0.0
    %1393 = vmatpush1.msra.mxu0 0.0
    %1394 = vmatprep.subr.mxu0 0.0
    %1395 = vmatpush1.msra.mxu0 0.0
    %1396 = vmatprep.subr.mxu0 0.0
    %1397 = vmatpush1.msra.mxu0 0.0
    %1398 = vmatprep.subr.mxu0 0.0
    %1399 = vmatpush1.msra.mxu0 0.0
    %1400 = vmatprep.subr.mxu0 0.0
    %1401 = vmatpush1.msra.mxu0 0.0
    %1402 = vmatprep.subr.mxu0 0.0
    %1403 = vmatpush1.msra.mxu0 0.0
    %1404 = vmatprep.subr.mxu0 %v1367
    %1405 = vmatpush1.msra.mxu0 %v1368
    %1406 = vmatprep.subr.mxu0 0.0
    %1407 = vmatpush2.msra.mxu0 0.0
    %1408 = vmatprep.subr.mxu0 0.0
    %1409 = vmatpush2.msra.mxu0 0.0
    %1410 = vmatprep.subr.mxu0 0.0
    %1411 = vmatpush2.msra.mxu0 0.0
    %1412 = vmatprep.subr.mxu0 0.0
    %1413 = vmatpush2.msra.mxu0 0.0
    %1414 = vmatprep.subr.mxu0 0.0
    %1415 = vmatpush2.msra.mxu0 0.0
    %1416 = vmatprep.subr.mxu0 0.0
    %1417 = vmatpush2.msra.mxu0 0.0
    %1418 = vmatprep.subr.mxu0 0.0
    %1419 = vmatpush2.msra.mxu0 0.0
    %1420 = vmatprep.subr.mxu0 0.0
    %1421 = vmatpush2.msra.mxu0 0.0
    %1422 = vmatprep.subr.mxu0 0.0
    %1423 = vmatpush2.msra.mxu0 0.0
    %1424 = vmatprep.subr.mxu0 0.0
    %1425 = vmatpush2.msra.mxu0 0.0
    %1426 = vmatprep.subr.mxu0 0.0
    %1427 = vmatpush2.msra.mxu0 0.0
    %1428 = vmatprep.subr.mxu0 0.0
    %1429 = vmatpush2.msra.mxu0 0.0
    %1430 = vmatprep.subr.mxu0 0.0
    %1431 = vmatpush2.msra.mxu0 0.0
    %1432 = vmatprep.subr.mxu0 0.0
    %1433 = vmatpush2.msra.mxu0 0.0
    %1434 = vmatprep.subr.mxu0 0.0
    %1435 = vmatpush2.msra.mxu0 0.0
    %1436 = vmatprep.subr.mxu0 0.0
    %1437 = vmatpush2.msra.mxu0 0.0
    %1438 = vmatprep.mubr.f32.mxu0 0.0
    %1439 = vmatmul.mubr.f32.gmra.mxu0 %v1372
    %v1440 = vpop.f32.mrf.mxu0
    %v1441 = vadd.f32 0.0, %v1440
    %v1442 = vpop.f32.mrf.mxu0
    %v1443 = vadd.f32 0.0, %v1442
    %1444 = vdwg.mxu0
    %1445 = vmatprep.subr.mxu0 0.0
    %1446 = vmatpush1.msra.mxu0 0.0
    %1447 = vmatprep.subr.mxu0 0.0
    %1448 = vmatpush1.msra.mxu0 0.0
    %1449 = vmatprep.subr.mxu0 0.0
    %1450 = vmatpush1.msra.mxu0 0.0
    %1451 = vmatprep.subr.mxu0 0.0
    %1452 = vmatpush1.msra.mxu0 0.0
    %1453 = vmatprep.subr.mxu0 0.0
    %1454 = vmatpush1.msra.mxu0 0.0
    %1455 = vmatprep.subr.mxu0 0.0
    %1456 = vmatpush1.msra.mxu0 0.0
    %1457 = vmatprep.subr.mxu0 0.0
    %1458 = vmatpush1.msra.mxu0 0.0
    %1459 = vmatprep.subr.mxu0 0.0
    %1460 = vmatpush1.msra.mxu0 0.0
    %1461 = vmatprep.subr.mxu0 0.0
    %1462 = vmatpush1.msra.mxu0 0.0
    %1463 = vmatprep.subr.mxu0 0.0
    %1464 = vmatpush1.msra.mxu0 0.0
    %1465 = vmatprep.subr.mxu0 0.0
    %1466 = vmatpush1.msra.mxu0 0.0
    %1467 = vmatprep.subr.mxu0 0.0
    %1468 = vmatpush1.msra.mxu0 0.0
    %1469 = vmatprep.subr.mxu0 0.0
    %1470 = vmatpush1.msra.mxu0 0.0
    %1471 = vmatprep.subr.mxu0 0.0
    %1472 = vmatpush1.msra.mxu0 0.0
    %1473 = vmatprep.subr.mxu0 0.0
    %1474 = vmatpush1.msra.mxu0 0.0
    %1475 = vmatprep.subr.mxu0 %v1365
    %1476 = vmatpush1.msra.mxu0 %v1366
    %1477 = vmatprep.subr.mxu0 0.0
    %1478 = vmatpush2.msra.mxu0 0.0
    %1479 = vmatprep.subr.mxu0 0.0
    %1480 = vmatpush2.msra.mxu0 0.0
    %1481 = vmatprep.subr.mxu0 0.0
    %1482 = vmatpush2.msra.mxu0 0.0
    %1483 = vmatprep.subr.mxu0 0.0
    %1484 = vmatpush2.msra.mxu0 0.0
    %1485 = vmatprep.subr.mxu0 0.0
    %1486 = vmatpush2.msra.mxu0 0.0
    %1487 = vmatprep.subr.mxu0 0.0
    %1488 = vmatpush2.msra.mxu0 0.0
    %1489 = vmatprep.subr.mxu0 0.0
    %1490 = vmatpush2.msra.mxu0 0.0
    %1491 = vmatprep.subr.mxu0 0.0
    %1492 = vmatpush2.msra.mxu0 0.0
    %1493 = vmatprep.subr.mxu0 0.0
    %1494 = vmatpush2.msra.mxu0 0.0
    %1495 = vmatprep.subr.mxu0 0.0
    %1496 = vmatpush2.msra.mxu0 0.0
    %1497 = vmatprep.subr.mxu0 0.0
    %1498 = vmatpush2.msra.mxu0 0.0
    %1499 = vmatprep.subr.mxu0 0.0
    %1500 = vmatpush2.msra.mxu0 0.0
    %1501 = vmatprep.subr.mxu0 0.0
    %1502 = vmatpush2.msra.mxu0 0.0
    %1503 = vmatprep.subr.mxu0 0.0
    %1504 = vmatpush2.msra.mxu0 0.0
    %1505 = vmatprep.subr.mxu0 0.0
    %1506 = vmatpush2.msra.mxu0 0.0
    %1507 = vmatprep.subr.mxu0 0.0
    %1508 = vmatpush2.msra.mxu0 0.0
    %1509 = vmatprep.mubr.f32.mxu0 0.0
    %1510 = vmatmul.mubr.f32.gmra.mxu0 %v1372
    %v1511 = vpop.f32.mrf.mxu0
    %v1512 = vadd.f32 0.0, %v1511
    %v1513 = vpop.f32.mrf.mxu0
    %v1514 = vadd.f32 0.0, %v1513
    %1515 = vdwg.mxu0
    %1516 = vmatprep.subr.mxu0 0.0
    %1517 = vmatpush1.msra.mxu0 0.0
    %1518 = vmatprep.subr.mxu0 0.0
    %1519 = vmatpush1.msra.mxu0 0.0
    %1520 = vmatprep.subr.mxu0 0.0
    %1521 = vmatpush1.msra.mxu0 0.0
    %1522 = vmatprep.subr.mxu0 0.0
    %1523 = vmatpush1.msra.mxu0 0.0
    %1524 = vmatprep.subr.mxu0 0.0
    %1525 = vmatpush1.msra.mxu0 0.0
    %1526 = vmatprep.subr.mxu0 0.0
    %1527 = vmatpush1.msra.mxu0 0.0
    %1528 = vmatprep.subr.mxu0 0.0
    %1529 = vmatpush1.msra.mxu0 0.0
    %1530 = vmatprep.subr.mxu0 0.0
    %1531 = vmatpush1.msra.mxu0 0.0
    %1532 = vmatprep.subr.mxu0 0.0
    %1533 = vmatpush1.msra.mxu0 0.0
    %1534 = vmatprep.subr.mxu0 0.0
    %1535 = vmatpush1.msra.mxu0 0.0
    %1536 = vmatprep.subr.mxu0 0.0
    %1537 = vmatpush1.msra.mxu0 0.0
    %1538 = vmatprep.subr.mxu0 0.0
    %1539 = vmatpush1.msra.mxu0 0.0
    %1540 = vmatprep.subr.mxu0 0.0
    %1541 = vmatpush1.msra.mxu0 0.0
    %1542 = vmatprep.subr.mxu0 0.0
    %1543 = vmatpush1.msra.mxu0 0.0
    %1544 = vmatprep.subr.mxu0 0.0
    %1545 = vmatpush1.msra.mxu0 0.0
    %1546 = vmatprep.subr.mxu0 %v1369
    %1547 = vmatpush1.msra.mxu0 %v1364
    %1548 = vmatprep.subr.mxu0 0.0
    %1549 = vmatpush2.msra.mxu0 0.0
    %1550 = vmatprep.subr.mxu0 0.0
    %1551 = vmatpush2.msra.mxu0 0.0
    %1552 = vmatprep.subr.mxu0 0.0
    %1553 = vmatpush2.msra.mxu0 0.0
    %1554 = vmatprep.subr.mxu0 0.0
    %1555 = vmatpush2.msra.mxu0 0.0
    %1556 = vmatprep.subr.mxu0 0.0
    %1557 = vmatpush2.msra.mxu0 0.0
    %1558 = vmatprep.subr.mxu0 0.0
    %1559 = vmatpush2.msra.mxu0 0.0
    %1560 = vmatprep.subr.mxu0 0.0
    %1561 = vmatpush2.msra.mxu0 0.0
    %1562 = vmatprep.subr.mxu0 0.0
    %1563 = vmatpush2.msra.mxu0 0.0
    %1564 = vmatprep.subr.mxu0 0.0
    %1565 = vmatpush2.msra.mxu0 0.0
    %1566 = vmatprep.subr.mxu0 0.0
    %1567 = vmatpush2.msra.mxu0 0.0
    %1568 = vmatprep.subr.mxu0 0.0
    %1569 = vmatpush2.msra.mxu0 0.0
    %1570 = vmatprep.subr.mxu0 0.0
    %1571 = vmatpush2.msra.mxu0 0.0
    %1572 = vmatprep.subr.mxu0 0.0
    %1573 = vmatpush2.msra.mxu0 0.0
    %1574 = vmatprep.subr.mxu0 0.0
    %1575 = vmatpush2.msra.mxu0 0.0
    %1576 = vmatprep.subr.mxu0 0.0
    %1577 = vmatpush2.msra.mxu0 0.0
    %1578 = vmatprep.subr.mxu0 0.0
    %1579 = vmatpush2.msra.mxu0 0.0
    %1580 = vmatprep.mubr.f32.mxu0 0.0
    %1581 = vmatmul.mubr.f32.gmra.mxu0 %v1372
    %v1582 = vpop.f32.mrf.mxu0
    %v1583 = vadd.f32 0.0, %v1582
    %v1584 = vpop.f32.mrf.mxu0
    %v1585 = vadd.f32 0.0, %v1584
    %1586 = vdwg.mxu0
    %v1587 = vadd.f32 %v1345, %v1441
    %v1588 = vadd.f32 %v1346, %v1443
    %v1589 = vadd.f32 %v1347, %v1512
    %v1590 = vadd.f32 %v1348, %v1514
    %v1591 = vadd.f32 %v1349, %v1583
    %v1592 = vadd.f32 %v1350, %v1585
    %1593 = vrot.lane.b32.xlu0 %v163, 111
    %v1594 = vpop.permute.xlu0 %1593
    %1595 = vrot.lane.b32.xlu0 %v164, 111
    %v1596 = vpop.permute.xlu0 %1595
    %1597 = vrot.lane.b32.xlu0 %v165, 111
    %v1598 = vpop.permute.xlu0 %1597
    %1599 = vrot.lane.b32.xlu0 %v166, 111
    %v1600 = vpop.permute.xlu0 %1599
    %1601 = vrot.lane.b32.xlu0 %v167, 111
    %v1602 = vpop.permute.xlu0 %1601
    %1603 = vrot.lane.b32.xlu0 %v168, 111
    %v1604 = vpop.permute.xlu0 %1603
    %vm1605 = vcmp.lt.s32.totalorder %v182, 111
    %v1606 = vsel %vm1605, %v1602, %v1604
    %v1607 = vsel %vm1605, %v1600, %v1602
    %v1608 = vsel %vm1605, %v1598, %v1600
    %v1609 = vsel %vm1605, %v1596, %v1598
    %v1610 = vsel %vm1605, %v1594, %v1596
    %v1611 = vsel %vm1605, %v1604, %v1594
    %v1612 = vld [vmem:[%s4 + $0x30] sm:$0xff]
    %v1614 = vsel %vm211, %v1612, 0
    %1616 = vmatprep.subr.mxu0 0.0
    %1617 = vmatpush1.msra.mxu0 0.0
    %1618 = vmatprep.subr.mxu0 0.0
    %1619 = vmatpush1.msra.mxu0 0.0
    %1620 = vmatprep.subr.mxu0 0.0
    %1621 = vmatpush1.msra.mxu0 0.0
    %1622 = vmatprep.subr.mxu0 0.0
    %1623 = vmatpush1.msra.mxu0 0.0
    %1624 = vmatprep.subr.mxu0 0.0
    %1625 = vmatpush1.msra.mxu0 0.0
    %1626 = vmatprep.subr.mxu0 0.0
    %1627 = vmatpush1.msra.mxu0 0.0
    %1628 = vmatprep.subr.mxu0 0.0
    %1629 = vmatpush1.msra.mxu0 0.0
    %1630 = vmatprep.subr.mxu0 0.0
    %1631 = vmatpush1.msra.mxu0 0.0
    %1632 = vmatprep.subr.mxu0 0.0
    %1633 = vmatpush1.msra.mxu0 0.0
    %1634 = vmatprep.subr.mxu0 0.0
    %1635 = vmatpush1.msra.mxu0 0.0
    %1636 = vmatprep.subr.mxu0 0.0
    %1637 = vmatpush1.msra.mxu0 0.0
    %1638 = vmatprep.subr.mxu0 0.0
    %1639 = vmatpush1.msra.mxu0 0.0
    %1640 = vmatprep.subr.mxu0 0.0
    %1641 = vmatpush1.msra.mxu0 0.0
    %1642 = vmatprep.subr.mxu0 0.0
    %1643 = vmatpush1.msra.mxu0 0.0
    %1644 = vmatprep.subr.mxu0 0.0
    %1645 = vmatpush1.msra.mxu0 0.0
    %1646 = vmatprep.subr.mxu0 %v1609
    %1647 = vmatpush1.msra.mxu0 %v1610
    %1648 = vmatprep.subr.mxu0 0.0
    %1649 = vmatpush2.msra.mxu0 0.0
    %1650 = vmatprep.subr.mxu0 0.0
    %1651 = vmatpush2.msra.mxu0 0.0
    %1652 = vmatprep.subr.mxu0 0.0
    %1653 = vmatpush2.msra.mxu0 0.0
    %1654 = vmatprep.subr.mxu0 0.0
    %1655 = vmatpush2.msra.mxu0 0.0
    %1656 = vmatprep.subr.mxu0 0.0
    %1657 = vmatpush2.msra.mxu0 0.0
    %1658 = vmatprep.subr.mxu0 0.0
    %1659 = vmatpush2.msra.mxu0 0.0
    %1660 = vmatprep.subr.mxu0 0.0
    %1661 = vmatpush2.msra.mxu0 0.0
    %1662 = vmatprep.subr.mxu0 0.0
    %1663 = vmatpush2.msra.mxu0 0.0
    %1664 = vmatprep.subr.mxu0 0.0
    %1665 = vmatpush2.msra.mxu0 0.0
    %1666 = vmatprep.subr.mxu0 0.0
    %1667 = vmatpush2.msra.mxu0 0.0
    %1668 = vmatprep.subr.mxu0 0.0
    %1669 = vmatpush2.msra.mxu0 0.0
    %1670 = vmatprep.subr.mxu0 0.0
    %1671 = vmatpush2.msra.mxu0 0.0
    %1672 = vmatprep.subr.mxu0 0.0
    %1673 = vmatpush2.msra.mxu0 0.0
    %1674 = vmatprep.subr.mxu0 0.0
    %1675 = vmatpush2.msra.mxu0 0.0
    %1676 = vmatprep.subr.mxu0 0.0
    %1677 = vmatpush2.msra.mxu0 0.0
    %1678 = vmatprep.subr.mxu0 0.0
    %1679 = vmatpush2.msra.mxu0 0.0
    %1680 = vmatprep.mubr.f32.mxu0 0.0
    %1681 = vmatmul.mubr.f32.gmra.mxu0 %v1614
    %v1682 = vpop.f32.mrf.mxu0
    %v1683 = vadd.f32 0.0, %v1682
    %v1684 = vpop.f32.mrf.mxu0
    %v1685 = vadd.f32 0.0, %v1684
    %1686 = vdwg.mxu0
    %1687 = vmatprep.subr.mxu0 0.0
    %1688 = vmatpush1.msra.mxu0 0.0
    %1689 = vmatprep.subr.mxu0 0.0
    %1690 = vmatpush1.msra.mxu0 0.0
    %1691 = vmatprep.subr.mxu0 0.0
    %1692 = vmatpush1.msra.mxu0 0.0
    %1693 = vmatprep.subr.mxu0 0.0
    %1694 = vmatpush1.msra.mxu0 0.0
    %1695 = vmatprep.subr.mxu0 0.0
    %1696 = vmatpush1.msra.mxu0 0.0
    %1697 = vmatprep.subr.mxu0 0.0
    %1698 = vmatpush1.msra.mxu0 0.0
    %1699 = vmatprep.subr.mxu0 0.0
    %1700 = vmatpush1.msra.mxu0 0.0
    %1701 = vmatprep.subr.mxu0 0.0
    %1702 = vmatpush1.msra.mxu0 0.0
    %1703 = vmatprep.subr.mxu0 0.0
    %1704 = vmatpush1.msra.mxu0 0.0
    %1705 = vmatprep.subr.mxu0 0.0
    %1706 = vmatpush1.msra.mxu0 0.0
    %1707 = vmatprep.subr.mxu0 0.0
    %1708 = vmatpush1.msra.mxu0 0.0
    %1709 = vmatprep.subr.mxu0 0.0
    %1710 = vmatpush1.msra.mxu0 0.0
    %1711 = vmatprep.subr.mxu0 0.0
    %1712 = vmatpush1.msra.mxu0 0.0
    %1713 = vmatprep.subr.mxu0 0.0
    %1714 = vmatpush1.msra.mxu0 0.0
    %1715 = vmatprep.subr.mxu0 0.0
    %1716 = vmatpush1.msra.mxu0 0.0
    %1717 = vmatprep.subr.mxu0 %v1607
    %1718 = vmatpush1.msra.mxu0 %v1608
    %1719 = vmatprep.subr.mxu0 0.0
    %1720 = vmatpush2.msra.mxu0 0.0
    %1721 = vmatprep.subr.mxu0 0.0
    %1722 = vmatpush2.msra.mxu0 0.0
    %1723 = vmatprep.subr.mxu0 0.0
    %1724 = vmatpush2.msra.mxu0 0.0
    %1725 = vmatprep.subr.mxu0 0.0
    %1726 = vmatpush2.msra.mxu0 0.0
    %1727 = vmatprep.subr.mxu0 0.0
    %1728 = vmatpush2.msra.mxu0 0.0
    %1729 = vmatprep.subr.mxu0 0.0
    %1730 = vmatpush2.msra.mxu0 0.0
    %1731 = vmatprep.subr.mxu0 0.0
    %1732 = vmatpush2.msra.mxu0 0.0
    %1733 = vmatprep.subr.mxu0 0.0
    %1734 = vmatpush2.msra.mxu0 0.0
    %1735 = vmatprep.subr.mxu0 0.0
    %1736 = vmatpush2.msra.mxu0 0.0
    %1737 = vmatprep.subr.mxu0 0.0
    %1738 = vmatpush2.msra.mxu0 0.0
    %1739 = vmatprep.subr.mxu0 0.0
    %1740 = vmatpush2.msra.mxu0 0.0
    %1741 = vmatprep.subr.mxu0 0.0
    %1742 = vmatpush2.msra.mxu0 0.0
    %1743 = vmatprep.subr.mxu0 0.0
    %1744 = vmatpush2.msra.mxu0 0.0
    %1745 = vmatprep.subr.mxu0 0.0
    %1746 = vmatpush2.msra.mxu0 0.0
    %1747 = vmatprep.subr.mxu0 0.0
    %1748 = vmatpush2.msra.mxu0 0.0
    %1749 = vmatprep.subr.mxu0 0.0
    %1750 = vmatpush2.msra.mxu0 0.0
    %1751 = vmatprep.mubr.f32.mxu0 0.0
    %1752 = vmatmul.mubr.f32.gmra.mxu0 %v1614
    %v1753 = vpop.f32.mrf.mxu0
    %v1754 = vadd.f32 0.0, %v1753
    %v1755 = vpop.f32.mrf.mxu0
    %v1756 = vadd.f32 0.0, %v1755
    %1757 = vdwg.mxu0
    %1758 = vmatprep.subr.mxu0 0.0
    %1759 = vmatpush1.msra.mxu0 0.0
    %1760 = vmatprep.subr.mxu0 0.0
    %1761 = vmatpush1.msra.mxu0 0.0
    %1762 = vmatprep.subr.mxu0 0.0
    %1763 = vmatpush1.msra.mxu0 0.0
    %1764 = vmatprep.subr.mxu0 0.0
    %1765 = vmatpush1.msra.mxu0 0.0
    %1766 = vmatprep.subr.mxu0 0.0
    %1767 = vmatpush1.msra.mxu0 0.0
    %1768 = vmatprep.subr.mxu0 0.0
    %1769 = vmatpush1.msra.mxu0 0.0
    %1770 = vmatprep.subr.mxu0 0.0
    %1771 = vmatpush1.msra.mxu0 0.0
    %1772 = vmatprep.subr.mxu0 0.0
    %1773 = vmatpush1.msra.mxu0 0.0
    %1774 = vmatprep.subr.mxu0 0.0
    %1775 = vmatpush1.msra.mxu0 0.0
    %1776 = vmatprep.subr.mxu0 0.0
    %1777 = vmatpush1.msra.mxu0 0.0
    %1778 = vmatprep.subr.mxu0 0.0
    %1779 = vmatpush1.msra.mxu0 0.0
    %1780 = vmatprep.subr.mxu0 0.0
    %1781 = vmatpush1.msra.mxu0 0.0
    %1782 = vmatprep.subr.mxu0 0.0
    %1783 = vmatpush1.msra.mxu0 0.0
    %1784 = vmatprep.subr.mxu0 0.0
    %1785 = vmatpush1.msra.mxu0 0.0
    %1786 = vmatprep.subr.mxu0 0.0
    %1787 = vmatpush1.msra.mxu0 0.0
    %1788 = vmatprep.subr.mxu0 %v1611
    %1789 = vmatpush1.msra.mxu0 %v1606
    %1790 = vmatprep.subr.mxu0 0.0
    %1791 = vmatpush2.msra.mxu0 0.0
    %1792 = vmatprep.subr.mxu0 0.0
    %1793 = vmatpush2.msra.mxu0 0.0
    %1794 = vmatprep.subr.mxu0 0.0
    %1795 = vmatpush2.msra.mxu0 0.0
    %1796 = vmatprep.subr.mxu0 0.0
    %1797 = vmatpush2.msra.mxu0 0.0
    %1798 = vmatprep.subr.mxu0 0.0
    %1799 = vmatpush2.msra.mxu0 0.0
    %1800 = vmatprep.subr.mxu0 0.0
    %1801 = vmatpush2.msra.mxu0 0.0
    %1802 = vmatprep.subr.mxu0 0.0
    %1803 = vmatpush2.msra.mxu0 0.0
    %1804 = vmatprep.subr.mxu0 0.0
    %1805 = vmatpush2.msra.mxu0 0.0
    %1806 = vmatprep.subr.mxu0 0.0
    %1807 = vmatpush2.msra.mxu0 0.0
    %1808 = vmatprep.subr.mxu0 0.0
    %1809 = vmatpush2.msra.mxu0 0.0
    %1810 = vmatprep.subr.mxu0 0.0
    %1811 = vmatpush2.msra.mxu0 0.0
    %1812 = vmatprep.subr.mxu0 0.0
    %1813 = vmatpush2.msra.mxu0 0.0
    %1814 = vmatprep.subr.mxu0 0.0
    %1815 = vmatpush2.msra.mxu0 0.0
    %1816 = vmatprep.subr.mxu0 0.0
    %1817 = vmatpush2.msra.mxu0 0.0
    %1818 = vmatprep.subr.mxu0 0.0
    %1819 = vmatpush2.msra.mxu0 0.0
    %1820 = vmatprep.subr.mxu0 0.0
    %1821 = vmatpush2.msra.mxu0 0.0
    %1822 = vmatprep.mubr.f32.mxu0 0.0
    %1823 = vmatmul.mubr.f32.gmra.mxu0 %v1614
    %v1824 = vpop.f32.mrf.mxu0
    %v1825 = vadd.f32 0.0, %v1824
    %v1826 = vpop.f32.mrf.mxu0
    %v1827 = vadd.f32 0.0, %v1826
    %1828 = vdwg.mxu0
    %v1829 = vadd.f32 %v1587, %v1683
    %v1830 = vadd.f32 %v1588, %v1685
    %v1831 = vadd.f32 %v1589, %v1754
    %v1832 = vadd.f32 %v1590, %v1756
    %v1833 = vadd.f32 %v1591, %v1825
    %v1834 = vadd.f32 %v1592, %v1827
    %1835 = vrot.lane.b32.xlu0 %v163, 110
    %v1836 = vpop.permute.xlu0 %1835
    %1837 = vrot.lane.b32.xlu0 %v164, 110
    %v1838 = vpop.permute.xlu0 %1837
    %1839 = vrot.lane.b32.xlu0 %v165, 110
    %v1840 = vpop.permute.xlu0 %1839
    %1841 = vrot.lane.b32.xlu0 %v166, 110
    %v1842 = vpop.permute.xlu0 %1841
    %1843 = vrot.lane.b32.xlu0 %v167, 110
    %v1844 = vpop.permute.xlu0 %1843
    %1845 = vrot.lane.b32.xlu0 %v168, 110
    %v1846 = vpop.permute.xlu0 %1845
    %vm1847 = vcmp.lt.s32.totalorder %v182, 110
    %v1848 = vsel %vm1847, %v1844, %v1846
    %v1849 = vsel %vm1847, %v1842, %v1844
    %v1850 = vsel %vm1847, %v1840, %v1842
    %v1851 = vsel %vm1847, %v1838, %v1840
    %v1852 = vsel %vm1847, %v1836, %v1838
    %v1853 = vsel %vm1847, %v1846, %v1836
    %v1854 = vld [vmem:[%s4 + $0x38] sm:$0xff]
    %v1856 = vsel %vm211, %v1854, 0
    %1858 = vmatprep.subr.mxu0 0.0
    %1859 = vmatpush1.msra.mxu0 0.0
    %1860 = vmatprep.subr.mxu0 0.0
    %1861 = vmatpush1.msra.mxu0 0.0
    %1862 = vmatprep.subr.mxu0 0.0
    %1863 = vmatpush1.msra.mxu0 0.0
    %1864 = vmatprep.subr.mxu0 0.0
    %1865 = vmatpush1.msra.mxu0 0.0
    %1866 = vmatprep.subr.mxu0 0.0
    %1867 = vmatpush1.msra.mxu0 0.0
    %1868 = vmatprep.subr.mxu0 0.0
    %1869 = vmatpush1.msra.mxu0 0.0
    %1870 = vmatprep.subr.mxu0 0.0
    %1871 = vmatpush1.msra.mxu0 0.0
    %1872 = vmatprep.subr.mxu0 0.0
    %1873 = vmatpush1.msra.mxu0 0.0
    %1874 = vmatprep.subr.mxu0 0.0
    %1875 = vmatpush1.msra.mxu0 0.0
    %1876 = vmatprep.subr.mxu0 0.0
    %1877 = vmatpush1.msra.mxu0 0.0
    %1878 = vmatprep.subr.mxu0 0.0
    %1879 = vmatpush1.msra.mxu0 0.0
    %1880 = vmatprep.subr.mxu0 0.0
    %1881 = vmatpush1.msra.mxu0 0.0
    %1882 = vmatprep.subr.mxu0 0.0
    %1883 = vmatpush1.msra.mxu0 0.0
    %1884 = vmatprep.subr.mxu0 0.0
    %1885 = vmatpush1.msra.mxu0 0.0
    %1886 = vmatprep.subr.mxu0 0.0
    %1887 = vmatpush1.msra.mxu0 0.0
    %1888 = vmatprep.subr.mxu0 %v1851
    %1889 = vmatpush1.msra.mxu0 %v1852
    %1890 = vmatprep.subr.mxu0 0.0
    %1891 = vmatpush2.msra.mxu0 0.0
    %1892 = vmatprep.subr.mxu0 0.0
    %1893 = vmatpush2.msra.mxu0 0.0
    %1894 = vmatprep.subr.mxu0 0.0
    %1895 = vmatpush2.msra.mxu0 0.0
    %1896 = vmatprep.subr.mxu0 0.0
    %1897 = vmatpush2.msra.mxu0 0.0
    %1898 = vmatprep.subr.mxu0 0.0
    %1899 = vmatpush2.msra.mxu0 0.0
    %1900 = vmatprep.subr.mxu0 0.0
    %1901 = vmatpush2.msra.mxu0 0.0
    %1902 = vmatprep.subr.mxu0 0.0
    %1903 = vmatpush2.msra.mxu0 0.0
    %1904 = vmatprep.subr.mxu0 0.0
    %1905 = vmatpush2.msra.mxu0 0.0
    %1906 = vmatprep.subr.mxu0 0.0
    %1907 = vmatpush2.msra.mxu0 0.0
    %1908 = vmatprep.subr.mxu0 0.0
    %1909 = vmatpush2.msra.mxu0 0.0
    %1910 = vmatprep.subr.mxu0 0.0
    %1911 = vmatpush2.msra.mxu0 0.0
    %1912 = vmatprep.subr.mxu0 0.0
    %1913 = vmatpush2.msra.mxu0 0.0
    %1914 = vmatprep.subr.mxu0 0.0
    %1915 = vmatpush2.msra.mxu0 0.0
    %1916 = vmatprep.subr.mxu0 0.0
    %1917 = vmatpush2.msra.mxu0 0.0
    %1918 = vmatprep.subr.mxu0 0.0
    %1919 = vmatpush2.msra.mxu0 0.0
    %1920 = vmatprep.subr.mxu0 0.0
    %1921 = vmatpush2.msra.mxu0 0.0
    %1922 = vmatprep.mubr.f32.mxu0 0.0
    %1923 = vmatmul.mubr.f32.gmra.mxu0 %v1856
    %v1924 = vpop.f32.mrf.mxu0
    %v1925 = vadd.f32 0.0, %v1924
    %v1926 = vpop.f32.mrf.mxu0
    %v1927 = vadd.f32 0.0, %v1926
    %1928 = vdwg.mxu0
    %1929 = vmatprep.subr.mxu0 0.0
    %1930 = vmatpush1.msra.mxu0 0.0
    %1931 = vmatprep.subr.mxu0 0.0
    %1932 = vmatpush1.msra.mxu0 0.0
    %1933 = vmatprep.subr.mxu0 0.0
    %1934 = vmatpush1.msra.mxu0 0.0
    %1935 = vmatprep.subr.mxu0 0.0
    %1936 = vmatpush1.msra.mxu0 0.0
    %1937 = vmatprep.subr.mxu0 0.0
    %1938 = vmatpush1.msra.mxu0 0.0
    %1939 = vmatprep.subr.mxu0 0.0
    %1940 = vmatpush1.msra.mxu0 0.0
    %1941 = vmatprep.subr.mxu0 0.0
    %1942 = vmatpush1.msra.mxu0 0.0
    %1943 = vmatprep.subr.mxu0 0.0
    %1944 = vmatpush1.msra.mxu0 0.0
    %1945 = vmatprep.subr.mxu0 0.0
    %1946 = vmatpush1.msra.mxu0 0.0
    %1947 = vmatprep.subr.mxu0 0.0
    %1948 = vmatpush1.msra.mxu0 0.0
    %1949 = vmatprep.subr.mxu0 0.0
    %1950 = vmatpush1.msra.mxu0 0.0
    %1951 = vmatprep.subr.mxu0 0.0
    %1952 = vmatpush1.msra.mxu0 0.0
    %1953 = vmatprep.subr.mxu0 0.0
    %1954 = vmatpush1.msra.mxu0 0.0
    %1955 = vmatprep.subr.mxu0 0.0
    %1956 = vmatpush1.msra.mxu0 0.0
    %1957 = vmatprep.subr.mxu0 0.0
    %1958 = vmatpush1.msra.mxu0 0.0
    %1959 = vmatprep.subr.mxu0 %v1849
    %1960 = vmatpush1.msra.mxu0 %v1850
    %1961 = vmatprep.subr.mxu0 0.0
    %1962 = vmatpush2.msra.mxu0 0.0
    %1963 = vmatprep.subr.mxu0 0.0
    %1964 = vmatpush2.msra.mxu0 0.0
    %1965 = vmatprep.subr.mxu0 0.0
    %1966 = vmatpush2.msra.mxu0 0.0
    %1967 = vmatprep.subr.mxu0 0.0
    %1968 = vmatpush2.msra.mxu0 0.0
    %1969 = vmatprep.subr.mxu0 0.0
    %1970 = vmatpush2.msra.mxu0 0.0
    %1971 = vmatprep.subr.mxu0 0.0
    %1972 = vmatpush2.msra.mxu0 0.0
    %1973 = vmatprep.subr.mxu0 0.0
    %1974 = vmatpush2.msra.mxu0 0.0
    %1975 = vmatprep.subr.mxu0 0.0
    %1976 = vmatpush2.msra.mxu0 0.0
    %1977 = vmatprep.subr.mxu0 0.0
    %1978 = vmatpush2.msra.mxu0 0.0
    %1979 = vmatprep.subr.mxu0 0.0
    %1980 = vmatpush2.msra.mxu0 0.0
    %1981 = vmatprep.subr.mxu0 0.0
    %1982 = vmatpush2.msra.mxu0 0.0
    %1983 = vmatprep.subr.mxu0 0.0
    %1984 = vmatpush2.msra.mxu0 0.0
    %1985 = vmatprep.subr.mxu0 0.0
    %1986 = vmatpush2.msra.mxu0 0.0
    %1987 = vmatprep.subr.mxu0 0.0
    %1988 = vmatpush2.msra.mxu0 0.0
    %1989 = vmatprep.subr.mxu0 0.0
    %1990 = vmatpush2.msra.mxu0 0.0
    %1991 = vmatprep.subr.mxu0 0.0
    %1992 = vmatpush2.msra.mxu0 0.0
    %1993 = vmatprep.mubr.f32.mxu0 0.0
    %1994 = vmatmul.mubr.f32.gmra.mxu0 %v1856
    %v1995 = vpop.f32.mrf.mxu0
    %v1996 = vadd.f32 0.0, %v1995
    %v1997 = vpop.f32.mrf.mxu0
    %v1998 = vadd.f32 0.0, %v1997
    %1999 = vdwg.mxu0
    %2000 = vmatprep.subr.mxu0 0.0
    %2001 = vmatpush1.msra.mxu0 0.0
    %2002 = vmatprep.subr.mxu0 0.0
    %2003 = vmatpush1.msra.mxu0 0.0
    %2004 = vmatprep.subr.mxu0 0.0
    %2005 = vmatpush1.msra.mxu0 0.0
    %2006 = vmatprep.subr.mxu0 0.0
    %2007 = vmatpush1.msra.mxu0 0.0
    %2008 = vmatprep.subr.mxu0 0.0
    %2009 = vmatpush1.msra.mxu0 0.0
    %2010 = vmatprep.subr.mxu0 0.0
    %2011 = vmatpush1.msra.mxu0 0.0
    %2012 = vmatprep.subr.mxu0 0.0
    %2013 = vmatpush1.msra.mxu0 0.0
    %2014 = vmatprep.subr.mxu0 0.0
    %2015 = vmatpush1.msra.mxu0 0.0
    %2016 = vmatprep.subr.mxu0 0.0
    %2017 = vmatpush1.msra.mxu0 0.0
    %2018 = vmatprep.subr.mxu0 0.0
    %2019 = vmatpush1.msra.mxu0 0.0
    %2020 = vmatprep.subr.mxu0 0.0
    %2021 = vmatpush1.msra.mxu0 0.0
    %2022 = vmatprep.subr.mxu0 0.0
    %2023 = vmatpush1.msra.mxu0 0.0
    %2024 = vmatprep.subr.mxu0 0.0
    %2025 = vmatpush1.msra.mxu0 0.0
    %2026 = vmatprep.subr.mxu0 0.0
    %2027 = vmatpush1.msra.mxu0 0.0
    %2028 = vmatprep.subr.mxu0 0.0
    %2029 = vmatpush1.msra.mxu0 0.0
    %2030 = vmatprep.subr.mxu0 %v1853
    %2031 = vmatpush1.msra.mxu0 %v1848
    %2032 = vmatprep.subr.mxu0 0.0
    %2033 = vmatpush2.msra.mxu0 0.0
    %2034 = vmatprep.subr.mxu0 0.0
    %2035 = vmatpush2.msra.mxu0 0.0
    %2036 = vmatprep.subr.mxu0 0.0
    %2037 = vmatpush2.msra.mxu0 0.0
    %2038 = vmatprep.subr.mxu0 0.0
    %2039 = vmatpush2.msra.mxu0 0.0
    %2040 = vmatprep.subr.mxu0 0.0
    %2041 = vmatpush2.msra.mxu0 0.0
    %2042 = vmatprep.subr.mxu0 0.0
    %2043 = vmatpush2.msra.mxu0 0.0
    %2044 = vmatprep.subr.mxu0 0.0
    %2045 = vmatpush2.msra.mxu0 0.0
    %2046 = vmatprep.subr.mxu0 0.0
    %2047 = vmatpush2.msra.mxu0 0.0
    %2048 = vmatprep.subr.mxu0 0.0
    %2049 = vmatpush2.msra.mxu0 0.0
    %2050 = vmatprep.subr.mxu0 0.0
    %2051 = vmatpush2.msra.mxu0 0.0
    %2052 = vmatprep.subr.mxu0 0.0
    %2053 = vmatpush2.msra.mxu0 0.0
    %2054 = vmatprep.subr.mxu0 0.0
    %2055 = vmatpush2.msra.mxu0 0.0
    %2056 = vmatprep.subr.mxu0 0.0
    %2057 = vmatpush2.msra.mxu0 0.0
    %2058 = vmatprep.subr.mxu0 0.0
    %2059 = vmatpush2.msra.mxu0 0.0
    %2060 = vmatprep.subr.mxu0 0.0
    %2061 = vmatpush2.msra.mxu0 0.0
    %2062 = vmatprep.subr.mxu0 0.0
    %2063 = vmatpush2.msra.mxu0 0.0
    %2064 = vmatprep.mubr.f32.mxu0 0.0
    %2065 = vmatmul.mubr.f32.gmra.mxu0 %v1856
    %v2066 = vpop.f32.mrf.mxu0
    %v2067 = vadd.f32 0.0, %v2066
    %v2068 = vpop.f32.mrf.mxu0
    %v2069 = vadd.f32 0.0, %v2068
    %2070 = vdwg.mxu0
    %v2071 = vadd.f32 %v1829, %v1925
    %v2072 = vadd.f32 %v1830, %v1927
    %v2073 = vadd.f32 %v1831, %v1996
    %v2074 = vadd.f32 %v1832, %v1998
    %v2075 = vadd.f32 %v1833, %v2067
    %v2076 = vadd.f32 %v1834, %v2069
    %2077 = vrot.lane.b32.xlu0 %v163, 109
    %v2078 = vpop.permute.xlu0 %2077
    %2079 = vrot.lane.b32.xlu0 %v164, 109
    %v2080 = vpop.permute.xlu0 %2079
    %2081 = vrot.lane.b32.xlu0 %v165, 109
    %v2082 = vpop.permute.xlu0 %2081
    %2083 = vrot.lane.b32.xlu0 %v166, 109
    %v2084 = vpop.permute.xlu0 %2083
    %2085 = vrot.lane.b32.xlu0 %v167, 109
    %v2086 = vpop.permute.xlu0 %2085
    %2087 = vrot.lane.b32.xlu0 %v168, 109
    %v2088 = vpop.permute.xlu0 %2087
    %vm2089 = vcmp.lt.s32.totalorder %v182, 109
    %v2090 = vsel %vm2089, %v2086, %v2088
    %v2091 = vsel %vm2089, %v2084, %v2086
    %v2092 = vsel %vm2089, %v2082, %v2084
    %v2093 = vsel %vm2089, %v2080, %v2082
    %v2094 = vsel %vm2089, %v2078, %v2080
    %v2095 = vsel %vm2089, %v2088, %v2078
    %v2096 = vld [vmem:[%s4 + $0x40] sm:$0xff]
    %v2098 = vsel %vm211, %v2096, 0
    %2100 = vmatprep.subr.mxu0 0.0
    %2101 = vmatpush1.msra.mxu0 0.0
    %2102 = vmatprep.subr.mxu0 0.0
    %2103 = vmatpush1.msra.mxu0 0.0
    %2104 = vmatprep.subr.mxu0 0.0
    %2105 = vmatpush1.msra.mxu0 0.0
    %2106 = vmatprep.subr.mxu0 0.0
    %2107 = vmatpush1.msra.mxu0 0.0
    %2108 = vmatprep.subr.mxu0 0.0
    %2109 = vmatpush1.msra.mxu0 0.0
    %2110 = vmatprep.subr.mxu0 0.0
    %2111 = vmatpush1.msra.mxu0 0.0
    %2112 = vmatprep.subr.mxu0 0.0
    %2113 = vmatpush1.msra.mxu0 0.0
    %2114 = vmatprep.subr.mxu0 0.0
    %2115 = vmatpush1.msra.mxu0 0.0
    %2116 = vmatprep.subr.mxu0 0.0
    %2117 = vmatpush1.msra.mxu0 0.0
    %2118 = vmatprep.subr.mxu0 0.0
    %2119 = vmatpush1.msra.mxu0 0.0
    %2120 = vmatprep.subr.mxu0 0.0
    %2121 = vmatpush1.msra.mxu0 0.0
    %2122 = vmatprep.subr.mxu0 0.0
    %2123 = vmatpush1.msra.mxu0 0.0
    %2124 = vmatprep.subr.mxu0 0.0
    %2125 = vmatpush1.msra.mxu0 0.0
    %2126 = vmatprep.subr.mxu0 0.0
    %2127 = vmatpush1.msra.mxu0 0.0
    %2128 = vmatprep.subr.mxu0 0.0
    %2129 = vmatpush1.msra.mxu0 0.0
    %2130 = vmatprep.subr.mxu0 %v2093
    %2131 = vmatpush1.msra.mxu0 %v2094
    %2132 = vmatprep.subr.mxu0 0.0
    %2133 = vmatpush2.msra.mxu0 0.0
    %2134 = vmatprep.subr.mxu0 0.0
    %2135 = vmatpush2.msra.mxu0 0.0
    %2136 = vmatprep.subr.mxu0 0.0
    %2137 = vmatpush2.msra.mxu0 0.0
    %2138 = vmatprep.subr.mxu0 0.0
    %2139 = vmatpush2.msra.mxu0 0.0
    %2140 = vmatprep.subr.mxu0 0.0
    %2141 = vmatpush2.msra.mxu0 0.0
    %2142 = vmatprep.subr.mxu0 0.0
    %2143 = vmatpush2.msra.mxu0 0.0
    %2144 = vmatprep.subr.mxu0 0.0
    %2145 = vmatpush2.msra.mxu0 0.0
    %2146 = vmatprep.subr.mxu0 0.0
    %2147 = vmatpush2.msra.mxu0 0.0
    %2148 = vmatprep.subr.mxu0 0.0
    %2149 = vmatpush2.msra.mxu0 0.0
    %2150 = vmatprep.subr.mxu0 0.0
    %2151 = vmatpush2.msra.mxu0 0.0
    %2152 = vmatprep.subr.mxu0 0.0
    %2153 = vmatpush2.msra.mxu0 0.0
    %2154 = vmatprep.subr.mxu0 0.0
    %2155 = vmatpush2.msra.mxu0 0.0
    %2156 = vmatprep.subr.mxu0 0.0
    %2157 = vmatpush2.msra.mxu0 0.0
    %2158 = vmatprep.subr.mxu0 0.0
    %2159 = vmatpush2.msra.mxu0 0.0
    %2160 = vmatprep.subr.mxu0 0.0
    %2161 = vmatpush2.msra.mxu0 0.0
    %2162 = vmatprep.subr.mxu0 0.0
    %2163 = vmatpush2.msra.mxu0 0.0
    %2164 = vmatprep.mubr.f32.mxu0 0.0
    %2165 = vmatmul.mubr.f32.gmra.mxu0 %v2098
    %v2166 = vpop.f32.mrf.mxu0
    %v2167 = vadd.f32 0.0, %v2166
    %v2168 = vpop.f32.mrf.mxu0
    %v2169 = vadd.f32 0.0, %v2168
    %2170 = vdwg.mxu0
    %2171 = vmatprep.subr.mxu0 0.0
    %2172 = vmatpush1.msra.mxu0 0.0
    %2173 = vmatprep.subr.mxu0 0.0
    %2174 = vmatpush1.msra.mxu0 0.0
    %2175 = vmatprep.subr.mxu0 0.0
    %2176 = vmatpush1.msra.mxu0 0.0
    %2177 = vmatprep.subr.mxu0 0.0
    %2178 = vmatpush1.msra.mxu0 0.0
    %2179 = vmatprep.subr.mxu0 0.0
    %2180 = vmatpush1.msra.mxu0 0.0
    %2181 = vmatprep.subr.mxu0 0.0
    %2182 = vmatpush1.msra.mxu0 0.0
    %2183 = vmatprep.subr.mxu0 0.0
    %2184 = vmatpush1.msra.mxu0 0.0
    %2185 = vmatprep.subr.mxu0 0.0
    %2186 = vmatpush1.msra.mxu0 0.0
    %2187 = vmatprep.subr.mxu0 0.0
    %2188 = vmatpush1.msra.mxu0 0.0
    %2189 = vmatprep.subr.mxu0 0.0
    %2190 = vmatpush1.msra.mxu0 0.0
    %2191 = vmatprep.subr.mxu0 0.0
    %2192 = vmatpush1.msra.mxu0 0.0
    %2193 = vmatprep.subr.mxu0 0.0
    %2194 = vmatpush1.msra.mxu0 0.0
    %2195 = vmatprep.subr.mxu0 0.0
    %2196 = vmatpush1.msra.mxu0 0.0
    %2197 = vmatprep.subr.mxu0 0.0
    %2198 = vmatpush1.msra.mxu0 0.0
    %2199 = vmatprep.subr.mxu0 0.0
    %2200 = vmatpush1.msra.mxu0 0.0
    %2201 = vmatprep.subr.mxu0 %v2091
    %2202 = vmatpush1.msra.mxu0 %v2092
    %2203 = vmatprep.subr.mxu0 0.0
    %2204 = vmatpush2.msra.mxu0 0.0
    %2205 = vmatprep.subr.mxu0 0.0
    %2206 = vmatpush2.msra.mxu0 0.0
    %2207 = vmatprep.subr.mxu0 0.0
    %2208 = vmatpush2.msra.mxu0 0.0
    %2209 = vmatprep.subr.mxu0 0.0
    %2210 = vmatpush2.msra.mxu0 0.0
    %2211 = vmatprep.subr.mxu0 0.0
    %2212 = vmatpush2.msra.mxu0 0.0
    %2213 = vmatprep.subr.mxu0 0.0
    %2214 = vmatpush2.msra.mxu0 0.0
    %2215 = vmatprep.subr.mxu0 0.0
    %2216 = vmatpush2.msra.mxu0 0.0
    %2217 = vmatprep.subr.mxu0 0.0
    %2218 = vmatpush2.msra.mxu0 0.0
    %2219 = vmatprep.subr.mxu0 0.0
    %2220 = vmatpush2.msra.mxu0 0.0
    %2221 = vmatprep.subr.mxu0 0.0
    %2222 = vmatpush2.msra.mxu0 0.0
    %2223 = vmatprep.subr.mxu0 0.0
    %2224 = vmatpush2.msra.mxu0 0.0
    %2225 = vmatprep.subr.mxu0 0.0
    %2226 = vmatpush2.msra.mxu0 0.0
    %2227 = vmatprep.subr.mxu0 0.0
    %2228 = vmatpush2.msra.mxu0 0.0
    %2229 = vmatprep.subr.mxu0 0.0
    %2230 = vmatpush2.msra.mxu0 0.0
    %2231 = vmatprep.subr.mxu0 0.0
    %2232 = vmatpush2.msra.mxu0 0.0
    %2233 = vmatprep.subr.mxu0 0.0
    %2234 = vmatpush2.msra.mxu0 0.0
    %2235 = vmatprep.mubr.f32.mxu0 0.0
    %2236 = vmatmul.mubr.f32.gmra.mxu0 %v2098
    %v2237 = vpop.f32.mrf.mxu0
    %v2238 = vadd.f32 0.0, %v2237
    %v2239 = vpop.f32.mrf.mxu0
    %v2240 = vadd.f32 0.0, %v2239
    %2241 = vdwg.mxu0
    %2242 = vmatprep.subr.mxu0 0.0
    %2243 = vmatpush1.msra.mxu0 0.0
    %2244 = vmatprep.subr.mxu0 0.0
    %2245 = vmatpush1.msra.mxu0 0.0
    %2246 = vmatprep.subr.mxu0 0.0
    %2247 = vmatpush1.msra.mxu0 0.0
    %2248 = vmatprep.subr.mxu0 0.0
    %2249 = vmatpush1.msra.mxu0 0.0
    %2250 = vmatprep.subr.mxu0 0.0
    %2251 = vmatpush1.msra.mxu0 0.0
    %2252 = vmatprep.subr.mxu0 0.0
    %2253 = vmatpush1.msra.mxu0 0.0
    %2254 = vmatprep.subr.mxu0 0.0
    %2255 = vmatpush1.msra.mxu0 0.0
    %2256 = vmatprep.subr.mxu0 0.0
    %2257 = vmatpush1.msra.mxu0 0.0
    %2258 = vmatprep.subr.mxu0 0.0
    %2259 = vmatpush1.msra.mxu0 0.0
    %2260 = vmatprep.subr.mxu0 0.0
    %2261 = vmatpush1.msra.mxu0 0.0
    %2262 = vmatprep.subr.mxu0 0.0
    %2263 = vmatpush1.msra.mxu0 0.0
    %2264 = vmatprep.subr.mxu0 0.0
    %2265 = vmatpush1.msra.mxu0 0.0
    %2266 = vmatprep.subr.mxu0 0.0
    %2267 = vmatpush1.msra.mxu0 0.0
    %2268 = vmatprep.subr.mxu0 0.0
    %2269 = vmatpush1.msra.mxu0 0.0
    %2270 = vmatprep.subr.mxu0 0.0
    %2271 = vmatpush1.msra.mxu0 0.0
    %2272 = vmatprep.subr.mxu0 %v2095
    %2273 = vmatpush1.msra.mxu0 %v2090
    %2274 = vmatprep.subr.mxu0 0.0
    %2275 = vmatpush2.msra.mxu0 0.0
    %2276 = vmatprep.subr.mxu0 0.0
    %2277 = vmatpush2.msra.mxu0 0.0
    %2278 = vmatprep.subr.mxu0 0.0
    %2279 = vmatpush2.msra.mxu0 0.0
    %2280 = vmatprep.subr.mxu0 0.0
    %2281 = vmatpush2.msra.mxu0 0.0
    %2282 = vmatprep.subr.mxu0 0.0
    %2283 = vmatpush2.msra.mxu0 0.0
    %2284 = vmatprep.subr.mxu0 0.0
    %2285 = vmatpush2.msra.mxu0 0.0
    %2286 = vmatprep.subr.mxu0 0.0
    %2287 = vmatpush2.msra.mxu0 0.0
    %2288 = vmatprep.subr.mxu0 0.0
    %2289 = vmatpush2.msra.mxu0 0.0
    %2290 = vmatprep.subr.mxu0 0.0
    %2291 = vmatpush2.msra.mxu0 0.0
    %2292 = vmatprep.subr.mxu0 0.0
    %2293 = vmatpush2.msra.mxu0 0.0
    %2294 = vmatprep.subr.mxu0 0.0
    %2295 = vmatpush2.msra.mxu0 0.0
    %2296 = vmatprep.subr.mxu0 0.0
    %2297 = vmatpush2.msra.mxu0 0.0
    %2298 = vmatprep.subr.mxu0 0.0
    %2299 = vmatpush2.msra.mxu0 0.0
    %2300 = vmatprep.subr.mxu0 0.0
    %2301 = vmatpush2.msra.mxu0 0.0
    %2302 = vmatprep.subr.mxu0 0.0
    %2303 = vmatpush2.msra.mxu0 0.0
    %2304 = vmatprep.subr.mxu0 0.0
    %2305 = vmatpush2.msra.mxu0 0.0
    %2306 = vmatprep.mubr.f32.mxu0 0.0
    %2307 = vmatmul.mubr.f32.gmra.mxu0 %v2098
    %v2308 = vpop.f32.mrf.mxu0
    %v2309 = vadd.f32 0.0, %v2308
    %v2310 = vpop.f32.mrf.mxu0
    %v2311 = vadd.f32 0.0, %v2310
    %2312 = vdwg.mxu0
    %v2313 = vadd.f32 %v2071, %v2167
    %v2314 = vadd.f32 %v2072, %v2169
    %v2315 = vadd.f32 %v2073, %v2238
    %v2316 = vadd.f32 %v2074, %v2240
    %v2317 = vadd.f32 %v2075, %v2309
    %v2318 = vadd.f32 %v2076, %v2311
    %v2319 = vld [vmem:[%s5] sm:$0xff]
    %2321 = vset.pattern.permute.xlu0 0
    %2322 = vperm.xlu0 %2321, %v2319
    %v2323 = vpop.permute.xlu0 %2322
    %v2325 = vadd.f32 %v2313, %v2323
    %v2326 = vadd.f32 %v2314, %v2323
    %v2327 = vadd.f32 %v2315, %v2323
    %v2328 = vadd.f32 %v2316, %v2323
    %v2329 = vadd.f32 %v2317, %v2323
    %v2330 = vadd.f32 %v2318, %v2323
    %v2331 = vmul.f32 %v2325, %v124
    %v2332 = vmul.f32 %v2326, %v128
    %v2333 = vmul.f32 %v2327, %v132
    %v2334 = vmul.f32 %v2328, %v136
    %v2335 = vmul.f32 %v2329, %v140
    %v2336 = vmul.f32 %v2330, %v144
    %2337 = vst [vmem:[#allocation5 + $0x30] sm:$0xff] %v2331
    %2338 = vst [vmem:[#allocation5 + $0x38] sm:$0xff] %v2332
    %2339 = vst [vmem:[#allocation5 + $0x40] sm:$0xff] %v2333
    %2340 = vst [vmem:[#allocation5 + $0x48] sm:$0xff] %v2334
    %2341 = vst [vmem:[#allocation5 + $0x50] sm:$0xff] %v2335
    %2342 = vst [vmem:[#allocation5 + $0x58] sm:$0xff] %v2336
    %v2343 = vadd.f32 %v2331, %v2332
    %v2344 = vadd.f32 %v2343, %v2333
    %v2345 = vadd.f32 %v2344, %v2334
    %v2346 = vadd.f32 %v2345, %v2335
    %v2347 = vadd.f32 %v2346, %v2336
    %2348 = vadd.xlane.f32.xlu0 %v2347
    %v2349 = vpop.xlane.xlu0 %2348
    %2350 = vst.msk [vmem:[#allocation3 + $0x8] sm:$0xff] %vm56, %v2349
    %v2351 = vmul.f32 %v2331, %v2331
    %v2352 = vmul.f32 %v2332, %v2332
    %v2353 = vmul.f32 %v2333, %v2333
    %v2354 = vmul.f32 %v2334, %v2334
    %v2355 = vmul.f32 %v2335, %v2335
    %v2356 = vmul.f32 %v2336, %v2336
    %v2357 = vadd.f32 %v2351, %v2352
    %v2358 = vadd.f32 %v2357, %v2353
    %v2359 = vadd.f32 %v2358, %v2354
    %v2360 = vadd.f32 %v2359, %v2355
    %v2361 = vadd.f32 %v2360, %v2356
    %2362 = vadd.xlane.f32.xlu0 %v2361
    %v2363 = vpop.xlane.xlu0 %2362
    %2364 = vst.msk [vmem:[#allocation4 + $0x8] sm:$0xff] %vm56, %v2363
    %v2365 = vld [vmem:[#allocation3] sm:$0xff]
    %v2366 = vld [vmem:[#allocation3 + $0x8] sm:$0xff]
    %v2367 = vmul.f32 %v2365, 0.001953125
    %v2368 = vmul.f32 %v2366, 0.001953125
    %v2369 = vld [vmem:[#allocation4] sm:$0xff]
    %v2370 = vld [vmem:[#allocation4 + $0x8] sm:$0xff]
    %v2371 = vmul.f32 %v2369, 0.001953125
    %v2372 = vmul.f32 %v2370, 0.001953125
    %v2373 = vmul.f32 %v2367, %v2367
    %v2374 = vmul.f32 %v2368, %v2368
    %v2375 = vsub.f32 %v2371, %v2373
    %v2376 = vsub.f32 %v2372, %v2374
    %v2377 = vmax.f32 %v2375, 0.0
    %v2378 = vmax.f32 %v2376, 0.0
    %v2379 = vld [vmem:[%s6] sm:$0xff]
    %v2380 = vld [vmem:[%s6 + $0x8] sm:$0xff]
    %v2381 = vadd.f32 %v2377, 1e-05
    %v2382 = vadd.f32 %v2378, 1e-05
    %v2383 = vrsqrt.pop %v2381
    %v2384 = vrsqrt.pop %v2382
    %v2385 = vmul.f32 %v2379, %v2383
    %v2386 = vmul.f32 %v2380, %v2384
    %v2387 = vld [vmem:[%s7] sm:$0xff]
    %v2388 = vld [vmem:[%s7 + $0x8] sm:$0xff]
    %v2389 = vmul.f32 %v2367, %v2385
    %v2390 = vmul.f32 %v2368, %v2386
    %v2391 = vsub.f32 %v2387, %v2389
    %v2392 = vsub.f32 %v2388, %v2390
    %v2393 = vld [vmem:[#allocation5] sm:$0xff]
    %v2394 = vld [vmem:[#allocation5 + $0x8] sm:$0xff]
    %v2395 = vld [vmem:[#allocation5 + $0x10] sm:$0xff]
    %v2396 = vld [vmem:[#allocation5 + $0x18] sm:$0xff]
    %v2397 = vld [vmem:[#allocation5 + $0x20] sm:$0xff]
    %v2398 = vld [vmem:[#allocation5 + $0x28] sm:$0xff]
    %v2399 = vld [vmem:[#allocation5 + $0x30] sm:$0xff]
    %v2400 = vld [vmem:[#allocation5 + $0x38] sm:$0xff]
    %v2401 = vld [vmem:[#allocation5 + $0x40] sm:$0xff]
    %v2402 = vld [vmem:[#allocation5 + $0x48] sm:$0xff]
    %v2403 = vld [vmem:[#allocation5 + $0x50] sm:$0xff]
    %v2404 = vld [vmem:[#allocation5 + $0x58] sm:$0xff]
    %2406 = vset.pattern.permute.xlu0 0
    %2407 = vperm.xlu0 %2406, %v2385
    %v2408 = vpop.permute.xlu0 %2407
    %2411 = vset.pattern.permute.xlu0 0
    %2412 = vperm.xlu0 %2411, %v2386
    %v2413 = vpop.permute.xlu0 %2412
    %v2415 = vmul.f32 %v2393, %v2408
    %v2416 = vmul.f32 %v2394, %v2408
    %v2417 = vmul.f32 %v2395, %v2408
    %v2418 = vmul.f32 %v2396, %v2408
    %v2419 = vmul.f32 %v2397, %v2408
    %v2420 = vmul.f32 %v2398, %v2408
    %v2421 = vmul.f32 %v2399, %v2413
    %v2422 = vmul.f32 %v2400, %v2413
    %v2423 = vmul.f32 %v2401, %v2413
    %v2424 = vmul.f32 %v2402, %v2413
    %v2425 = vmul.f32 %v2403, %v2413
    %v2426 = vmul.f32 %v2404, %v2413
    %2428 = vset.pattern.permute.xlu0 0
    %2429 = vperm.xlu0 %2428, %v2391
    %v2430 = vpop.permute.xlu0 %2429
    %2433 = vset.pattern.permute.xlu0 0
    %2434 = vperm.xlu0 %2433, %v2392
    %v2435 = vpop.permute.xlu0 %2434
    %v2437 = vadd.f32 %v2415, %v2430
    %v2438 = vadd.f32 %v2416, %v2430
    %v2439 = vadd.f32 %v2417, %v2430
    %v2440 = vadd.f32 %v2418, %v2430
    %v2441 = vadd.f32 %v2419, %v2430
    %v2442 = vadd.f32 %v2420, %v2430
    %v2443 = vadd.f32 %v2421, %v2435
    %v2444 = vadd.f32 %v2422, %v2435
    %v2445 = vadd.f32 %v2423, %v2435
    %v2446 = vadd.f32 %v2424, %v2435
    %v2447 = vadd.f32 %v2425, %v2435
    %v2448 = vadd.f32 %v2426, %v2435
    %v2449 = vmax.f32 %v2437, 0.0
    %v2450 = vmax.f32 %v2438, 0.0
    %v2451 = vmax.f32 %v2439, 0.0
    %v2452 = vmax.f32 %v2440, 0.0
    %v2453 = vmax.f32 %v2441, 0.0
    %v2454 = vmax.f32 %v2442, 0.0
    %v2455 = vmax.f32 %v2443, 0.0
    %v2456 = vmax.f32 %v2444, 0.0
    %v2457 = vmax.f32 %v2445, 0.0
    %v2458 = vmax.f32 %v2446, 0.0
    %v2459 = vmax.f32 %v2447, 0.0
    %v2460 = vmax.f32 %v2448, 0.0
    %v2461 = vmul.f32 %v2449, %v124
    %v2462 = vmul.f32 %v2450, %v128
    %v2463 = vmul.f32 %v2451, %v132
    %v2464 = vmul.f32 %v2452, %v136
    %v2465 = vmul.f32 %v2453, %v140
    %v2466 = vmul.f32 %v2454, %v144
    %v2467 = vmul.f32 %v2455, %v124
    %v2468 = vmul.f32 %v2456, %v128
    %v2469 = vmul.f32 %v2457, %v132
    %v2470 = vmul.f32 %v2458, %v136
    %v2471 = vmul.f32 %v2459, %v140
    %v2472 = vmul.f32 %v2460, %v144
    %2473 = vst [vmem:[#allocation2] sm:$0xff] %v2461
    %2474 = vst [vmem:[#allocation2 + $0x8] sm:$0xff] %v2462
    %2475 = vst [vmem:[#allocation2 + $0x10] sm:$0xff] %v2463
    %2476 = vst [vmem:[#allocation2 + $0x18] sm:$0xff] %v2464
    %2477 = vst [vmem:[#allocation2 + $0x20] sm:$0xff] %v2465
    %2478 = vst [vmem:[#allocation2 + $0x28] sm:$0xff] %v2466
    %2479 = vst [vmem:[#allocation2 + $0x30] sm:$0xff] %v2467
    %2480 = vst [vmem:[#allocation2 + $0x38] sm:$0xff] %v2468
    %2481 = vst [vmem:[#allocation2 + $0x40] sm:$0xff] %v2469
    %2482 = vst [vmem:[#allocation2 + $0x48] sm:$0xff] %v2470
    %2483 = vst [vmem:[#allocation2 + $0x50] sm:$0xff] %v2471
    %2484 = vst [vmem:[#allocation2 + $0x58] sm:$0xff] %v2472
    %v2485 = vld [vmem:[#allocation2] sm:$0xff]
    %v2486 = vld [vmem:[#allocation2 + $0x8] sm:$0xff]
    %v2487 = vld [vmem:[#allocation2 + $0x10] sm:$0xff]
    %v2488 = vld [vmem:[#allocation2 + $0x18] sm:$0xff]
    %v2489 = vld [vmem:[#allocation2 + $0x20] sm:$0xff]
    %v2490 = vld [vmem:[#allocation2 + $0x28] sm:$0xff]
    %v2491 = vld [vmem:[#allocation2 + $0x30] sm:$0xff]
    %v2492 = vld [vmem:[#allocation2 + $0x38] sm:$0xff]
    %v2493 = vld [vmem:[#allocation2 + $0x40] sm:$0xff]
    %v2494 = vld [vmem:[#allocation2 + $0x48] sm:$0xff]
    %v2495 = vld [vmem:[#allocation2 + $0x50] sm:$0xff]
    %v2496 = vld [vmem:[#allocation2 + $0x58] sm:$0xff]
    %2497 = vrot.lane.b32.xlu0 %v2485, 19
    %v2498 = vpop.permute.xlu0 %2497
    %2499 = vrot.lane.b32.xlu0 %v2491, 19
    %v2500 = vpop.permute.xlu0 %2499
    %2501 = vrot.lane.b32.xlu0 %v2486, 19
    %v2502 = vpop.permute.xlu0 %2501
    %2503 = vrot.lane.b32.xlu0 %v2492, 19
    %v2504 = vpop.permute.xlu0 %2503
    %2505 = vrot.lane.b32.xlu0 %v2487, 19
    %v2506 = vpop.permute.xlu0 %2505
    %2507 = vrot.lane.b32.xlu0 %v2493, 19
    %v2508 = vpop.permute.xlu0 %2507
    %2509 = vrot.lane.b32.xlu0 %v2488, 19
    %v2510 = vpop.permute.xlu0 %2509
    %2511 = vrot.lane.b32.xlu0 %v2494, 19
    %v2512 = vpop.permute.xlu0 %2511
    %2513 = vrot.lane.b32.xlu0 %v2489, 19
    %v2514 = vpop.permute.xlu0 %2513
    %2515 = vrot.lane.b32.xlu0 %v2495, 19
    %v2516 = vpop.permute.xlu0 %2515
    %2517 = vrot.lane.b32.xlu0 %v2490, 19
    %v2518 = vpop.permute.xlu0 %2517
    %2519 = vrot.lane.b32.xlu0 %v2496, 19
    %v2520 = vpop.permute.xlu0 %2519
    %v2521 = vsel %vm183, %v2514, %v2518
    %v2522 = vsel %vm183, %v2516, %v2520
    %v2523 = vsel %vm183, %v2510, %v2514
    %v2524 = vsel %vm183, %v2512, %v2516
    %v2525 = vsel %vm183, %v2506, %v2510
    %v2526 = vsel %vm183, %v2508, %v2512
    %v2527 = vsel %vm183, %v2502, %v2506
    %v2528 = vsel %vm183, %v2504, %v2508
    %v2529 = vsel %vm183, %v2498, %v2502
    %v2530 = vsel %vm183, %v2500, %v2504
    %v2531 = vsel %vm183, %v2518, %v2498
    %v2532 = vsel %vm183, %v2520, %v2500
    %v2533 = vld [vmem:[%s8] sm:$0xff]
    %2534 = vrot.lane.b32.xlu0 %v2485, 18
    %v2535 = vpop.permute.xlu0 %2534
    %2536 = vrot.lane.b32.xlu0 %v2491, 18
    %v2537 = vpop.permute.xlu0 %2536
    %2538 = vrot.lane.b32.xlu0 %v2486, 18
    %v2539 = vpop.permute.xlu0 %2538
    %2540 = vrot.lane.b32.xlu0 %v2492, 18
    %v2541 = vpop.permute.xlu0 %2540
    %2542 = vrot.lane.b32.xlu0 %v2487, 18
    %v2543 = vpop.permute.xlu0 %2542
    %2544 = vrot.lane.b32.xlu0 %v2493, 18
    %v2545 = vpop.permute.xlu0 %2544
    %2546 = vrot.lane.b32.xlu0 %v2488, 18
    %v2547 = vpop.permute.xlu0 %2546
    %2548 = vrot.lane.b32.xlu0 %v2494, 18
    %v2549 = vpop.permute.xlu0 %2548
    %2550 = vrot.lane.b32.xlu0 %v2489, 18
    %v2551 = vpop.permute.xlu0 %2550
    %2552 = vrot.lane.b32.xlu0 %v2495, 18
    %v2553 = vpop.permute.xlu0 %2552
    %2554 = vrot.lane.b32.xlu0 %v2490, 18
    %v2555 = vpop.permute.xlu0 %2554
    %2556 = vrot.lane.b32.xlu0 %v2496, 18
    %v2557 = vpop.permute.xlu0 %2556
    %v2558 = vsel %vm203, %v2551, %v2555
    %v2559 = vsel %vm203, %v2553, %v2557
    %v2560 = vsel %vm203, %v2547, %v2551
    %v2561 = vsel %vm203, %v2549, %v2553
    %v2562 = vsel %vm203, %v2543, %v2547
    %v2563 = vsel %vm203, %v2545, %v2549
    %v2564 = vsel %vm203, %v2539, %v2543
    %v2565 = vsel %vm203, %v2541, %v2545
    %v2566 = vsel %vm203, %v2535, %v2539
    %v2567 = vsel %vm203, %v2537, %v2541
    %v2568 = vsel %vm203, %v2555, %v2535
    %v2569 = vsel %vm203, %v2557, %v2537
    %v2570 = vld [vmem:[%s8 + $0x8] sm:$0xff]
    %vm2571 = vcmask 130048
    %v2573 = vsel %vm2571, %v2570, 0
    %2575 = vmatprep.subr.mxu0 0.0
    %2576 = vmatpush1.msra.mxu0 0.0
    %2577 = vmatprep.subr.mxu0 0.0
    %2578 = vmatpush1.msra.mxu0 0.0
    %2579 = vmatprep.subr.mxu0 0.0
    %2580 = vmatpush1.msra.mxu0 0.0
    %2581 = vmatprep.subr.mxu0 0.0
    %2582 = vmatpush1.msra.mxu0 0.0
    %2583 = vmatprep.subr.mxu0 0.0
    %2584 = vmatpush1.msra.mxu0 0.0
    %2585 = vmatprep.subr.mxu0 0.0
    %2586 = vmatpush1.msra.mxu0 0.0
    %2587 = vmatprep.subr.mxu0 0.0
    %2588 = vmatpush1.msra.mxu0 0.0
    %2589 = vmatprep.subr.mxu0 0.0
    %2590 = vmatpush1.msra.mxu0 0.0
    %2591 = vmatprep.subr.mxu0 0.0
    %2592 = vmatpush1.msra.mxu0 0.0
    %2593 = vmatprep.subr.mxu0 0.0
    %2594 = vmatpush1.msra.mxu0 0.0
    %2595 = vmatprep.subr.mxu0 0.0
    %2596 = vmatpush1.msra.mxu0 0.0
    %2597 = vmatprep.subr.mxu0 0.0
    %2598 = vmatpush1.msra.mxu0 0.0
    %2599 = vmatprep.subr.mxu0 0.0
    %2600 = vmatpush1.msra.mxu0 0.0
    %2601 = vmatprep.subr.mxu0 0.0
    %2602 = vmatpush1.msra.mxu0 0.0
    %2603 = vmatprep.subr.mxu0 %v2567
    %2604 = vmatpush1.msra.mxu0 %v2569
    %2605 = vmatprep.subr.mxu0 %v2566
    %2606 = vmatpush1.msra.mxu0 %v2568
    %2607 = vmatprep.subr.mxu0 0.0
    %2608 = vmatpush2.msra.mxu0 0.0
    %2609 = vmatprep.subr.mxu0 0.0
    %2610 = vmatpush2.msra.mxu0 0.0
    %2611 = vmatprep.subr.mxu0 0.0
    %2612 = vmatpush2.msra.mxu0 0.0
    %2613 = vmatprep.subr.mxu0 0.0
    %2614 = vmatpush2.msra.mxu0 0.0
    %2615 = vmatprep.subr.mxu0 0.0
    %2616 = vmatpush2.msra.mxu0 0.0
    %2617 = vmatprep.subr.mxu0 0.0
    %2618 = vmatpush2.msra.mxu0 0.0
    %2619 = vmatprep.subr.mxu0 0.0
    %2620 = vmatpush2.msra.mxu0 0.0
    %2621 = vmatprep.subr.mxu0 0.0
    %2622 = vmatpush2.msra.mxu0 0.0
    %2623 = vmatprep.subr.mxu0 0.0
    %2624 = vmatpush2.msra.mxu0 0.0
    %2625 = vmatprep.subr.mxu0 0.0
    %2626 = vmatpush2.msra.mxu0 0.0
    %2627 = vmatprep.subr.mxu0 0.0
    %2628 = vmatpush2.msra.mxu0 0.0
    %2629 = vmatprep.subr.mxu0 0.0
    %2630 = vmatpush2.msra.mxu0 0.0
    %2631 = vmatprep.subr.mxu0 0.0
    %2632 = vmatpush2.msra.mxu0 0.0
    %2633 = vmatprep.subr.mxu0 0.0
    %2634 = vmatpush2.msra.mxu0 0.0
    %2635 = vmatprep.subr.mxu0 0.0
    %2636 = vmatpush2.msra.mxu0 0.0
    %2637 = vmatprep.subr.mxu0 0.0
    %2638 = vmatpush2.msra.mxu0 0.0
    %2639 = vmatprep.mubr.f32.mxu0 0.0
    %2640 = vmatmul.mubr.f32.gmra.mxu0 %v2573
    %v2641 = vpop.f32.mrf.mxu0
    %v2642 = vadd.f32 0.0, %v2641
    %v2643 = vpop.f32.mrf.mxu0
    %v2644 = vadd.f32 0.0, %v2643
    %2645 = vdwg.mxu0
    %2646 = vmatprep.subr.mxu0 0.0
    %2647 = vmatpush1.msra.mxu0 0.0
    %2648 = vmatprep.subr.mxu0 0.0
    %2649 = vmatpush1.msra.mxu0 0.0
    %2650 = vmatprep.subr.mxu0 0.0
    %2651 = vmatpush1.msra.mxu0 0.0
    %2652 = vmatprep.subr.mxu0 0.0
    %2653 = vmatpush1.msra.mxu0 0.0
    %2654 = vmatprep.subr.mxu0 0.0
    %2655 = vmatpush1.msra.mxu0 0.0
    %2656 = vmatprep.subr.mxu0 0.0
    %2657 = vmatpush1.msra.mxu0 0.0
    %2658 = vmatprep.subr.mxu0 0.0
    %2659 = vmatpush1.msra.mxu0 0.0
    %2660 = vmatprep.subr.mxu0 0.0
    %2661 = vmatpush1.msra.mxu0 0.0
    %2662 = vmatprep.subr.mxu0 0.0
    %2663 = vmatpush1.msra.mxu0 0.0
    %2664 = vmatprep.subr.mxu0 0.0
    %2665 = vmatpush1.msra.mxu0 0.0
    %2666 = vmatprep.subr.mxu0 0.0
    %2667 = vmatpush1.msra.mxu0 0.0
    %2668 = vmatprep.subr.mxu0 0.0
    %2669 = vmatpush1.msra.mxu0 0.0
    %2670 = vmatprep.subr.mxu0 0.0
    %2671 = vmatpush1.msra.mxu0 0.0
    %2672 = vmatprep.subr.mxu0 0.0
    %2673 = vmatpush1.msra.mxu0 0.0
    %2674 = vmatprep.subr.mxu0 %v2563
    %2675 = vmatpush1.msra.mxu0 %v2565
    %2676 = vmatprep.subr.mxu0 %v2562
    %2677 = vmatpush1.msra.mxu0 %v2564
    %2678 = vmatprep.subr.mxu0 0.0
    %2679 = vmatpush2.msra.mxu0 0.0
    %2680 = vmatprep.subr.mxu0 0.0
    %2681 = vmatpush2.msra.mxu0 0.0
    %2682 = vmatprep.subr.mxu0 0.0
    %2683 = vmatpush2.msra.mxu0 0.0
    %2684 = vmatprep.subr.mxu0 0.0
    %2685 = vmatpush2.msra.mxu0 0.0
    %2686 = vmatprep.subr.mxu0 0.0
    %2687 = vmatpush2.msra.mxu0 0.0
    %2688 = vmatprep.subr.mxu0 0.0
    %2689 = vmatpush2.msra.mxu0 0.0
    %2690 = vmatprep.subr.mxu0 0.0
    %2691 = vmatpush2.msra.mxu0 0.0
    %2692 = vmatprep.subr.mxu0 0.0
    %2693 = vmatpush2.msra.mxu0 0.0
    %2694 = vmatprep.subr.mxu0 0.0
    %2695 = vmatpush2.msra.mxu0 0.0
    %2696 = vmatprep.subr.mxu0 0.0
    %2697 = vmatpush2.msra.mxu0 0.0
    %2698 = vmatprep.subr.mxu0 0.0
    %2699 = vmatpush2.msra.mxu0 0.0
    %2700 = vmatprep.subr.mxu0 0.0
    %2701 = vmatpush2.msra.mxu0 0.0
    %2702 = vmatprep.subr.mxu0 0.0
    %2703 = vmatpush2.msra.mxu0 0.0
    %2704 = vmatprep.subr.mxu0 0.0
    %2705 = vmatpush2.msra.mxu0 0.0
    %2706 = vmatprep.subr.mxu0 0.0
    %2707 = vmatpush2.msra.mxu0 0.0
    %2708 = vmatprep.subr.mxu0 0.0
    %2709 = vmatpush2.msra.mxu0 0.0
    %2710 = vmatprep.mubr.f32.mxu0 0.0
    %2711 = vmatmul.mubr.f32.gmra.mxu0 %v2573
    %v2712 = vpop.f32.mrf.mxu0
    %v2713 = vadd.f32 0.0, %v2712
    %v2714 = vpop.f32.mrf.mxu0
    %v2715 = vadd.f32 0.0, %v2714
    %2716 = vdwg.mxu0
    %2717 = vmatprep.subr.mxu0 0.0
    %2718 = vmatpush1.msra.mxu0 0.0
    %2719 = vmatprep.subr.mxu0 0.0
    %2720 = vmatpush1.msra.mxu0 0.0
    %2721 = vmatprep.subr.mxu0 0.0
    %2722 = vmatpush1.msra.mxu0 0.0
    %2723 = vmatprep.subr.mxu0 0.0
    %2724 = vmatpush1.msra.mxu0 0.0
    %2725 = vmatprep.subr.mxu0 0.0
    %2726 = vmatpush1.msra.mxu0 0.0
    %2727 = vmatprep.subr.mxu0 0.0
    %2728 = vmatpush1.msra.mxu0 0.0
    %2729 = vmatprep.subr.mxu0 0.0
    %2730 = vmatpush1.msra.mxu0 0.0
    %2731 = vmatprep.subr.mxu0 0.0
    %2732 = vmatpush1.msra.mxu0 0.0
    %2733 = vmatprep.subr.mxu0 0.0
    %2734 = vmatpush1.msra.mxu0 0.0
    %2735 = vmatprep.subr.mxu0 0.0
    %2736 = vmatpush1.msra.mxu0 0.0
    %2737 = vmatprep.subr.mxu0 0.0
    %2738 = vmatpush1.msra.mxu0 0.0
    %2739 = vmatprep.subr.mxu0 0.0
    %2740 = vmatpush1.msra.mxu0 0.0
    %2741 = vmatprep.subr.mxu0 0.0
    %2742 = vmatpush1.msra.mxu0 0.0
    %2743 = vmatprep.subr.mxu0 0.0
    %2744 = vmatpush1.msra.mxu0 0.0
    %2745 = vmatprep.subr.mxu0 %v2559
    %2746 = vmatpush1.msra.mxu0 %v2561
    %2747 = vmatprep.subr.mxu0 %v2558
    %2748 = vmatpush1.msra.mxu0 %v2560
    %2749 = vmatprep.subr.mxu0 0.0
    %2750 = vmatpush2.msra.mxu0 0.0
    %2751 = vmatprep.subr.mxu0 0.0
    %2752 = vmatpush2.msra.mxu0 0.0
    %2753 = vmatprep.subr.mxu0 0.0
    %2754 = vmatpush2.msra.mxu0 0.0
    %2755 = vmatprep.subr.mxu0 0.0
    %2756 = vmatpush2.msra.mxu0 0.0
    %2757 = vmatprep.subr.mxu0 0.0
    %2758 = vmatpush2.msra.mxu0 0.0
    %2759 = vmatprep.subr.mxu0 0.0
    %2760 = vmatpush2.msra.mxu0 0.0
    %2761 = vmatprep.subr.mxu0 0.0
    %2762 = vmatpush2.msra.mxu0 0.0
    %2763 = vmatprep.subr.mxu0 0.0
    %2764 = vmatpush2.msra.mxu0 0.0
    %2765 = vmatprep.subr.mxu0 0.0
    %2766 = vmatpush2.msra.mxu0 0.0
    %2767 = vmatprep.subr.mxu0 0.0
    %2768 = vmatpush2.msra.mxu0 0.0
    %2769 = vmatprep.subr.mxu0 0.0
    %2770 = vmatpush2.msra.mxu0 0.0
    %2771 = vmatprep.subr.mxu0 0.0
    %2772 = vmatpush2.msra.mxu0 0.0
    %2773 = vmatprep.subr.mxu0 0.0
    %2774 = vmatpush2.msra.mxu0 0.0
    %2775 = vmatprep.subr.mxu0 0.0
    %2776 = vmatpush2.msra.mxu0 0.0
    %2777 = vmatprep.subr.mxu0 0.0
    %2778 = vmatpush2.msra.mxu0 0.0
    %2779 = vmatprep.subr.mxu0 0.0
    %2780 = vmatpush2.msra.mxu0 0.0
    %2781 = vmatprep.mubr.f32.mxu0 0.0
    %2782 = vmatmul.mubr.f32.gmra.mxu0 %v2573
    %v2783 = vpop.f32.mrf.mxu0
    %v2784 = vadd.f32 0.0, %v2783
    %v2785 = vpop.f32.mrf.mxu0
    %v2786 = vadd.f32 0.0, %v2785
    %2787 = vdwg.mxu0
    %v2789 = vsel %vm2571, %v2533, 0
    %2791 = vmatprep.subr.mxu0 0.0
    %2792 = vmatpush1.msra.mxu0 0.0
    %2793 = vmatprep.subr.mxu0 0.0
    %2794 = vmatpush1.msra.mxu0 0.0
    %2795 = vmatprep.subr.mxu0 0.0
    %2796 = vmatpush1.msra.mxu0 0.0
    %2797 = vmatprep.subr.mxu0 0.0
    %2798 = vmatpush1.msra.mxu0 0.0
    %2799 = vmatprep.subr.mxu0 0.0
    %2800 = vmatpush1.msra.mxu0 0.0
    %2801 = vmatprep.subr.mxu0 0.0
    %2802 = vmatpush1.msra.mxu0 0.0
    %2803 = vmatprep.subr.mxu0 0.0
    %2804 = vmatpush1.msra.mxu0 0.0
    %2805 = vmatprep.subr.mxu0 0.0
    %2806 = vmatpush1.msra.mxu0 0.0
    %2807 = vmatprep.subr.mxu0 0.0
    %2808 = vmatpush1.msra.mxu0 0.0
    %2809 = vmatprep.subr.mxu0 0.0
    %2810 = vmatpush1.msra.mxu0 0.0
    %2811 = vmatprep.subr.mxu0 0.0
    %2812 = vmatpush1.msra.mxu0 0.0
    %2813 = vmatprep.subr.mxu0 0.0
    %2814 = vmatpush1.msra.mxu0 0.0
    %2815 = vmatprep.subr.mxu0 0.0
    %2816 = vmatpush1.msra.mxu0 0.0
    %2817 = vmatprep.subr.mxu0 0.0
    %2818 = vmatpush1.msra.mxu0 0.0
    %2819 = vmatprep.subr.mxu0 %v2530
    %2820 = vmatpush1.msra.mxu0 %v2532
    %2821 = vmatprep.subr.mxu0 %v2529
    %2822 = vmatpush1.msra.mxu0 %v2531
    %2823 = vmatprep.subr.mxu0 0.0
    %2824 = vmatpush2.msra.mxu0 0.0
    %2825 = vmatprep.subr.mxu0 0.0
    %2826 = vmatpush2.msra.mxu0 0.0
    %2827 = vmatprep.subr.mxu0 0.0
    %2828 = vmatpush2.msra.mxu0 0.0
    %2829 = vmatprep.subr.mxu0 0.0
    %2830 = vmatpush2.msra.mxu0 0.0
    %2831 = vmatprep.subr.mxu0 0.0
    %2832 = vmatpush2.msra.mxu0 0.0
    %2833 = vmatprep.subr.mxu0 0.0
    %2834 = vmatpush2.msra.mxu0 0.0
    %2835 = vmatprep.subr.mxu0 0.0
    %2836 = vmatpush2.msra.mxu0 0.0
    %2837 = vmatprep.subr.mxu0 0.0
    %2838 = vmatpush2.msra.mxu0 0.0
    %2839 = vmatprep.subr.mxu0 0.0
    %2840 = vmatpush2.msra.mxu0 0.0
    %2841 = vmatprep.subr.mxu0 0.0
    %2842 = vmatpush2.msra.mxu0 0.0
    %2843 = vmatprep.subr.mxu0 0.0
    %2844 = vmatpush2.msra.mxu0 0.0
    %2845 = vmatprep.subr.mxu0 0.0
    %2846 = vmatpush2.msra.mxu0 0.0
    %2847 = vmatprep.subr.mxu0 0.0
    %2848 = vmatpush2.msra.mxu0 0.0
    %2849 = vmatprep.subr.mxu0 0.0
    %2850 = vmatpush2.msra.mxu0 0.0
    %2851 = vmatprep.subr.mxu0 0.0
    %2852 = vmatpush2.msra.mxu0 0.0
    %2853 = vmatprep.subr.mxu0 0.0
    %2854 = vmatpush2.msra.mxu0 0.0
    %2855 = vmatprep.mubr.f32.mxu0 0.0
    %2856 = vmatmul.mubr.f32.gmra.mxu0 %v2789
    %v2857 = vpop.f32.mrf.mxu0
    %v2858 = vadd.f32 %v2642, %v2857
    %v2859 = vpop.f32.mrf.mxu0
    %v2860 = vadd.f32 %v2644, %v2859
    %2861 = vdwg.mxu0
    %2862 = vmatprep.subr.mxu0 0.0
    %2863 = vmatpush1.msra.mxu0 0.0
    %2864 = vmatprep.subr.mxu0 0.0
    %2865 = vmatpush1.msra.mxu0 0.0
    %2866 = vmatprep.subr.mxu0 0.0
    %2867 = vmatpush1.msra.mxu0 0.0
    %2868 = vmatprep.subr.mxu0 0.0
    %2869 = vmatpush1.msra.mxu0 0.0
    %2870 = vmatprep.subr.mxu0 0.0
    %2871 = vmatpush1.msra.mxu0 0.0
    %2872 = vmatprep.subr.mxu0 0.0
    %2873 = vmatpush1.msra.mxu0 0.0
    %2874 = vmatprep.subr.mxu0 0.0
    %2875 = vmatpush1.msra.mxu0 0.0
    %2876 = vmatprep.subr.mxu0 0.0
    %2877 = vmatpush1.msra.mxu0 0.0
    %2878 = vmatprep.subr.mxu0 0.0
    %2879 = vmatpush1.msra.mxu0 0.0
    %2880 = vmatprep.subr.mxu0 0.0
    %2881 = vmatpush1.msra.mxu0 0.0
    %2882 = vmatprep.subr.mxu0 0.0
    %2883 = vmatpush1.msra.mxu0 0.0
    %2884 = vmatprep.subr.mxu0 0.0
    %2885 = vmatpush1.msra.mxu0 0.0
    %2886 = vmatprep.subr.mxu0 0.0
    %2887 = vmatpush1.msra.mxu0 0.0
    %2888 = vmatprep.subr.mxu0 0.0
    %2889 = vmatpush1.msra.mxu0 0.0
    %2890 = vmatprep.subr.mxu0 %v2526
    %2891 = vmatpush1.msra.mxu0 %v2528
    %2892 = vmatprep.subr.mxu0 %v2525
    %2893 = vmatpush1.msra.mxu0 %v2527
    %2894 = vmatprep.subr.mxu0 0.0
    %2895 = vmatpush2.msra.mxu0 0.0
    %2896 = vmatprep.subr.mxu0 0.0
    %2897 = vmatpush2.msra.mxu0 0.0
    %2898 = vmatprep.subr.mxu0 0.0
    %2899 = vmatpush2.msra.mxu0 0.0
    %2900 = vmatprep.subr.mxu0 0.0
    %2901 = vmatpush2.msra.mxu0 0.0
    %2902 = vmatprep.subr.mxu0 0.0
    %2903 = vmatpush2.msra.mxu0 0.0
    %2904 = vmatprep.subr.mxu0 0.0
    %2905 = vmatpush2.msra.mxu0 0.0
    %2906 = vmatprep.subr.mxu0 0.0
    %2907 = vmatpush2.msra.mxu0 0.0
    %2908 = vmatprep.subr.mxu0 0.0
    %2909 = vmatpush2.msra.mxu0 0.0
    %2910 = vmatprep.subr.mxu0 0.0
    %2911 = vmatpush2.msra.mxu0 0.0
    %2912 = vmatprep.subr.mxu0 0.0
    %2913 = vmatpush2.msra.mxu0 0.0
    %2914 = vmatprep.subr.mxu0 0.0
    %2915 = vmatpush2.msra.mxu0 0.0
    %2916 = vmatprep.subr.mxu0 0.0
    %2917 = vmatpush2.msra.mxu0 0.0
    %2918 = vmatprep.subr.mxu0 0.0
    %2919 = vmatpush2.msra.mxu0 0.0
    %2920 = vmatprep.subr.mxu0 0.0
    %2921 = vmatpush2.msra.mxu0 0.0
    %2922 = vmatprep.subr.mxu0 0.0
    %2923 = vmatpush2.msra.mxu0 0.0
    %2924 = vmatprep.subr.mxu0 0.0
    %2925 = vmatpush2.msra.mxu0 0.0
    %2926 = vmatprep.mubr.f32.mxu0 0.0
    %2927 = vmatmul.mubr.f32.gmra.mxu0 %v2789
    %v2928 = vpop.f32.mrf.mxu0
    %v2929 = vadd.f32 %v2713, %v2928
    %v2930 = vpop.f32.mrf.mxu0
    %v2931 = vadd.f32 %v2715, %v2930
    %2932 = vdwg.mxu0
    %2933 = vmatprep.subr.mxu0 0.0
    %2934 = vmatpush1.msra.mxu0 0.0
    %2935 = vmatprep.subr.mxu0 0.0
    %2936 = vmatpush1.msra.mxu0 0.0
    %2937 = vmatprep.subr.mxu0 0.0
    %2938 = vmatpush1.msra.mxu0 0.0
    %2939 = vmatprep.subr.mxu0 0.0
    %2940 = vmatpush1.msra.mxu0 0.0
    %2941 = vmatprep.subr.mxu0 0.0
    %2942 = vmatpush1.msra.mxu0 0.0
    %2943 = vmatprep.subr.mxu0 0.0
    %2944 = vmatpush1.msra.mxu0 0.0
    %2945 = vmatprep.subr.mxu0 0.0
    %2946 = vmatpush1.msra.mxu0 0.0
    %2947 = vmatprep.subr.mxu0 0.0
    %2948 = vmatpush1.msra.mxu0 0.0
    %2949 = vmatprep.subr.mxu0 0.0
    %2950 = vmatpush1.msra.mxu0 0.0
    %2951 = vmatprep.subr.mxu0 0.0
    %2952 = vmatpush1.msra.mxu0 0.0
    %2953 = vmatprep.subr.mxu0 0.0
    %2954 = vmatpush1.msra.mxu0 0.0
    %2955 = vmatprep.subr.mxu0 0.0
    %2956 = vmatpush1.msra.mxu0 0.0
    %2957 = vmatprep.subr.mxu0 0.0
    %2958 = vmatpush1.msra.mxu0 0.0
    %2959 = vmatprep.subr.mxu0 0.0
    %2960 = vmatpush1.msra.mxu0 0.0
    %2961 = vmatprep.subr.mxu0 %v2522
    %2962 = vmatpush1.msra.mxu0 %v2524
    %2963 = vmatprep.subr.mxu0 %v2521
    %2964 = vmatpush1.msra.mxu0 %v2523
    %2965 = vmatprep.subr.mxu0 0.0
    %2966 = vmatpush2.msra.mxu0 0.0
    %2967 = vmatprep.subr.mxu0 0.0
    %2968 = vmatpush2.msra.mxu0 0.0
    %2969 = vmatprep.subr.mxu0 0.0
    %2970 = vmatpush2.msra.mxu0 0.0
    %2971 = vmatprep.subr.mxu0 0.0
    %2972 = vmatpush2.msra.mxu0 0.0
    %2973 = vmatprep.subr.mxu0 0.0
    %2974 = vmatpush2.msra.mxu0 0.0
    %2975 = vmatprep.subr.mxu0 0.0
    %2976 = vmatpush2.msra.mxu0 0.0
    %2977 = vmatprep.subr.mxu0 0.0
    %2978 = vmatpush2.msra.mxu0 0.0
    %2979 = vmatprep.subr.mxu0 0.0
    %2980 = vmatpush2.msra.mxu0 0.0
    %2981 = vmatprep.subr.mxu0 0.0
    %2982 = vmatpush2.msra.mxu0 0.0
    %2983 = vmatprep.subr.mxu0 0.0
    %2984 = vmatpush2.msra.mxu0 0.0
    %2985 = vmatprep.subr.mxu0 0.0
    %2986 = vmatpush2.msra.mxu0 0.0
    %2987 = vmatprep.subr.mxu0 0.0
    %2988 = vmatpush2.msra.mxu0 0.0
    %2989 = vmatprep.subr.mxu0 0.0
    %2990 = vmatpush2.msra.mxu0 0.0
    %2991 = vmatprep.subr.mxu0 0.0
    %2992 = vmatpush2.msra.mxu0 0.0
    %2993 = vmatprep.subr.mxu0 0.0
    %2994 = vmatpush2.msra.mxu0 0.0
    %2995 = vmatprep.subr.mxu0 0.0
    %2996 = vmatpush2.msra.mxu0 0.0
    %2997 = vmatprep.mubr.f32.mxu0 0.0
    %2998 = vmatmul.mubr.f32.gmra.mxu0 %v2789
    %v2999 = vpop.f32.mrf.mxu0
    %v3000 = vadd.f32 %v2784, %v2999
    %v3001 = vpop.f32.mrf.mxu0
    %v3002 = vadd.f32 %v2786, %v3001
    %3003 = vdwg.mxu0
    %3004 = vrot.lane.b32.xlu0 %v2485, 17
    %v3005 = vpop.permute.xlu0 %3004
    %3006 = vrot.lane.b32.xlu0 %v2491, 17
    %v3007 = vpop.permute.xlu0 %3006
    %3008 = vrot.lane.b32.xlu0 %v2486, 17
    %v3009 = vpop.permute.xlu0 %3008
    %3010 = vrot.lane.b32.xlu0 %v2492, 17
    %v3011 = vpop.permute.xlu0 %3010
    %3012 = vrot.lane.b32.xlu0 %v2487, 17
    %v3013 = vpop.permute.xlu0 %3012
    %3014 = vrot.lane.b32.xlu0 %v2493, 17
    %v3015 = vpop.permute.xlu0 %3014
    %3016 = vrot.lane.b32.xlu0 %v2488, 17
    %v3017 = vpop.permute.xlu0 %3016
    %3018 = vrot.lane.b32.xlu0 %v2494, 17
    %v3019 = vpop.permute.xlu0 %3018
    %3020 = vrot.lane.b32.xlu0 %v2489, 17
    %v3021 = vpop.permute.xlu0 %3020
    %3022 = vrot.lane.b32.xlu0 %v2495, 17
    %v3023 = vpop.permute.xlu0 %3022
    %3024 = vrot.lane.b32.xlu0 %v2490, 17
    %v3025 = vpop.permute.xlu0 %3024
    %3026 = vrot.lane.b32.xlu0 %v2496, 17
    %v3027 = vpop.permute.xlu0 %3026
    %v3028 = vsel %vm656, %v3021, %v3025
    %v3029 = vsel %vm656, %v3023, %v3027
    %v3030 = vsel %vm656, %v3017, %v3021
    %v3031 = vsel %vm656, %v3019, %v3023
    %v3032 = vsel %vm656, %v3013, %v3017
    %v3033 = vsel %vm656, %v3015, %v3019
    %v3034 = vsel %vm656, %v3009, %v3013
    %v3035 = vsel %vm656, %v3011, %v3015
    %v3036 = vsel %vm656, %v3005, %v3009
    %v3037 = vsel %vm656, %v3007, %v3011
    %v3038 = vsel %vm656, %v3025, %v3005
    %v3039 = vsel %vm656, %v3027, %v3007
    %v3040 = vld [vmem:[%s8 + $0x10] sm:$0xff]
    %v3042 = vsel %vm2571, %v3040, 0
    %3044 = vmatprep.subr.mxu0 0.0
    %3045 = vmatpush1.msra.mxu0 0.0
    %3046 = vmatprep.subr.mxu0 0.0
    %3047 = vmatpush1.msra.mxu0 0.0
    %3048 = vmatprep.subr.mxu0 0.0
    %3049 = vmatpush1.msra.mxu0 0.0
    %3050 = vmatprep.subr.mxu0 0.0
    %3051 = vmatpush1.msra.mxu0 0.0
    %3052 = vmatprep.subr.mxu0 0.0
    %3053 = vmatpush1.msra.mxu0 0.0
    %3054 = vmatprep.subr.mxu0 0.0
    %3055 = vmatpush1.msra.mxu0 0.0
    %3056 = vmatprep.subr.mxu0 0.0
    %3057 = vmatpush1.msra.mxu0 0.0
    %3058 = vmatprep.subr.mxu0 0.0
    %3059 = vmatpush1.msra.mxu0 0.0
    %3060 = vmatprep.subr.mxu0 0.0
    %3061 = vmatpush1.msra.mxu0 0.0
    %3062 = vmatprep.subr.mxu0 0.0
    %3063 = vmatpush1.msra.mxu0 0.0
    %3064 = vmatprep.subr.mxu0 0.0
    %3065 = vmatpush1.msra.mxu0 0.0
    %3066 = vmatprep.subr.mxu0 0.0
    %3067 = vmatpush1.msra.mxu0 0.0
    %3068 = vmatprep.subr.mxu0 0.0
    %3069 = vmatpush1.msra.mxu0 0.0
    %3070 = vmatprep.subr.mxu0 0.0
    %3071 = vmatpush1.msra.mxu0 0.0
    %3072 = vmatprep.subr.mxu0 %v3037
    %3073 = vmatpush1.msra.mxu0 %v3039
    %3074 = vmatprep.subr.mxu0 %v3036
    %3075 = vmatpush1.msra.mxu0 %v3038
    %3076 = vmatprep.subr.mxu0 0.0
    %3077 = vmatpush2.msra.mxu0 0.0
    %3078 = vmatprep.subr.mxu0 0.0
    %3079 = vmatpush2.msra.mxu0 0.0
    %3080 = vmatprep.subr.mxu0 0.0
    %3081 = vmatpush2.msra.mxu0 0.0
    %3082 = vmatprep.subr.mxu0 0.0
    %3083 = vmatpush2.msra.mxu0 0.0
    %3084 = vmatprep.subr.mxu0 0.0
    %3085 = vmatpush2.msra.mxu0 0.0
    %3086 = vmatprep.subr.mxu0 0.0
    %3087 = vmatpush2.msra.mxu0 0.0
    %3088 = vmatprep.subr.mxu0 0.0
    %3089 = vmatpush2.msra.mxu0 0.0
    %3090 = vmatprep.subr.mxu0 0.0
    %3091 = vmatpush2.msra.mxu0 0.0
    %3092 = vmatprep.subr.mxu0 0.0
    %3093 = vmatpush2.msra.mxu0 0.0
    %3094 = vmatprep.subr.mxu0 0.0
    %3095 = vmatpush2.msra.mxu0 0.0
    %3096 = vmatprep.subr.mxu0 0.0
    %3097 = vmatpush2.msra.mxu0 0.0
    %3098 = vmatprep.subr.mxu0 0.0
    %3099 = vmatpush2.msra.mxu0 0.0
    %3100 = vmatprep.subr.mxu0 0.0
    %3101 = vmatpush2.msra.mxu0 0.0
    %3102 = vmatprep.subr.mxu0 0.0
    %3103 = vmatpush2.msra.mxu0 0.0
    %3104 = vmatprep.subr.mxu0 0.0
    %3105 = vmatpush2.msra.mxu0 0.0
    %3106 = vmatprep.subr.mxu0 0.0
    %3107 = vmatpush2.msra.mxu0 0.0
    %3108 = vmatprep.mubr.f32.mxu0 0.0
    %3109 = vmatmul.mubr.f32.gmra.mxu0 %v3042
    %v3110 = vpop.f32.mrf.mxu0
    %v3111 = vadd.f32 0.0, %v3110
    %v3112 = vpop.f32.mrf.mxu0
    %v3113 = vadd.f32 0.0, %v3112
    %3114 = vdwg.mxu0
    %3115 = vmatprep.subr.mxu0 0.0
    %3116 = vmatpush1.msra.mxu0 0.0
    %3117 = vmatprep.subr.mxu0 0.0
    %3118 = vmatpush1.msra.mxu0 0.0
    %3119 = vmatprep.subr.mxu0 0.0
    %3120 = vmatpush1.msra.mxu0 0.0
    %3121 = vmatprep.subr.mxu0 0.0
    %3122 = vmatpush1.msra.mxu0 0.0
    %3123 = vmatprep.subr.mxu0 0.0
    %3124 = vmatpush1.msra.mxu0 0.0
    %3125 = vmatprep.subr.mxu0 0.0
    %3126 = vmatpush1.msra.mxu0 0.0
    %3127 = vmatprep.subr.mxu0 0.0
    %3128 = vmatpush1.msra.mxu0 0.0
    %3129 = vmatprep.subr.mxu0 0.0
    %3130 = vmatpush1.msra.mxu0 0.0
    %3131 = vmatprep.subr.mxu0 0.0
    %3132 = vmatpush1.msra.mxu0 0.0
    %3133 = vmatprep.subr.mxu0 0.0
    %3134 = vmatpush1.msra.mxu0 0.0
    %3135 = vmatprep.subr.mxu0 0.0
    %3136 = vmatpush1.msra.mxu0 0.0
    %3137 = vmatprep.subr.mxu0 0.0
    %3138 = vmatpush1.msra.mxu0 0.0
    %3139 = vmatprep.subr.mxu0 0.0
    %3140 = vmatpush1.msra.mxu0 0.0
    %3141 = vmatprep.subr.mxu0 0.0
    %3142 = vmatpush1.msra.mxu0 0.0
    %3143 = vmatprep.subr.mxu0 %v3033
    %3144 = vmatpush1.msra.mxu0 %v3035
    %3145 = vmatprep.subr.mxu0 %v3032
    %3146 = vmatpush1.msra.mxu0 %v3034
    %3147 = vmatprep.subr.mxu0 0.0
    %3148 = vmatpush2.msra.mxu0 0.0
    %3149 = vmatprep.subr.mxu0 0.0
    %3150 = vmatpush2.msra.mxu0 0.0
    %3151 = vmatprep.subr.mxu0 0.0
    %3152 = vmatpush2.msra.mxu0 0.0
    %3153 = vmatprep.subr.mxu0 0.0
    %3154 = vmatpush2.msra.mxu0 0.0
    %3155 = vmatprep.subr.mxu0 0.0
    %3156 = vmatpush2.msra.mxu0 0.0
    %3157 = vmatprep.subr.mxu0 0.0
    %3158 = vmatpush2.msra.mxu0 0.0
    %3159 = vmatprep.subr.mxu0 0.0
    %3160 = vmatpush2.msra.mxu0 0.0
    %3161 = vmatprep.subr.mxu0 0.0
    %3162 = vmatpush2.msra.mxu0 0.0
    %3163 = vmatprep.subr.mxu0 0.0
    %3164 = vmatpush2.msra.mxu0 0.0
    %3165 = vmatprep.subr.mxu0 0.0
    %3166 = vmatpush2.msra.mxu0 0.0
    %3167 = vmatprep.subr.mxu0 0.0
    %3168 = vmatpush2.msra.mxu0 0.0
    %3169 = vmatprep.subr.mxu0 0.0
    %3170 = vmatpush2.msra.mxu0 0.0
    %3171 = vmatprep.subr.mxu0 0.0
    %3172 = vmatpush2.msra.mxu0 0.0
    %3173 = vmatprep.subr.mxu0 0.0
    %3174 = vmatpush2.msra.mxu0 0.0
    %3175 = vmatprep.subr.mxu0 0.0
    %3176 = vmatpush2.msra.mxu0 0.0
    %3177 = vmatprep.subr.mxu0 0.0
    %3178 = vmatpush2.msra.mxu0 0.0
    %3179 = vmatprep.mubr.f32.mxu0 0.0
    %3180 = vmatmul.mubr.f32.gmra.mxu0 %v3042
    %v3181 = vpop.f32.mrf.mxu0
    %v3182 = vadd.f32 0.0, %v3181
    %v3183 = vpop.f32.mrf.mxu0
    %v3184 = vadd.f32 0.0, %v3183
    %3185 = vdwg.mxu0
    %3186 = vmatprep.subr.mxu0 0.0
    %3187 = vmatpush1.msra.mxu0 0.0
    %3188 = vmatprep.subr.mxu0 0.0
    %3189 = vmatpush1.msra.mxu0 0.0
    %3190 = vmatprep.subr.mxu0 0.0
    %3191 = vmatpush1.msra.mxu0 0.0
    %3192 = vmatprep.subr.mxu0 0.0
    %3193 = vmatpush1.msra.mxu0 0.0
    %3194 = vmatprep.subr.mxu0 0.0
    %3195 = vmatpush1.msra.mxu0 0.0
    %3196 = vmatprep.subr.mxu0 0.0
    %3197 = vmatpush1.msra.mxu0 0.0
    %3198 = vmatprep.subr.mxu0 0.0
    %3199 = vmatpush1.msra.mxu0 0.0
    %3200 = vmatprep.subr.mxu0 0.0
    %3201 = vmatpush1.msra.mxu0 0.0
    %3202 = vmatprep.subr.mxu0 0.0
    %3203 = vmatpush1.msra.mxu0 0.0
    %3204 = vmatprep.subr.mxu0 0.0
    %3205 = vmatpush1.msra.mxu0 0.0
    %3206 = vmatprep.subr.mxu0 0.0
    %3207 = vmatpush1.msra.mxu0 0.0
    %3208 = vmatprep.subr.mxu0 0.0
    %3209 = vmatpush1.msra.mxu0 0.0
    %3210 = vmatprep.subr.mxu0 0.0
    %3211 = vmatpush1.msra.mxu0 0.0
    %3212 = vmatprep.subr.mxu0 0.0
    %3213 = vmatpush1.msra.mxu0 0.0
    %3214 = vmatprep.subr.mxu0 %v3029
    %3215 = vmatpush1.msra.mxu0 %v3031
    %3216 = vmatprep.subr.mxu0 %v3028
    %3217 = vmatpush1.msra.mxu0 %v3030
    %3218 = vmatprep.subr.mxu0 0.0
    %3219 = vmatpush2.msra.mxu0 0.0
    %3220 = vmatprep.subr.mxu0 0.0
    %3221 = vmatpush2.msra.mxu0 0.0
    %3222 = vmatprep.subr.mxu0 0.0
    %3223 = vmatpush2.msra.mxu0 0.0
    %3224 = vmatprep.subr.mxu0 0.0
    %3225 = vmatpush2.msra.mxu0 0.0
    %3226 = vmatprep.subr.mxu0 0.0
    %3227 = vmatpush2.msra.mxu0 0.0
    %3228 = vmatprep.subr.mxu0 0.0
    %3229 = vmatpush2.msra.mxu0 0.0
    %3230 = vmatprep.subr.mxu0 0.0
    %3231 = vmatpush2.msra.mxu0 0.0
    %3232 = vmatprep.subr.mxu0 0.0
    %3233 = vmatpush2.msra.mxu0 0.0
    %3234 = vmatprep.subr.mxu0 0.0
    %3235 = vmatpush2.msra.mxu0 0.0
    %3236 = vmatprep.subr.mxu0 0.0
    %3237 = vmatpush2.msra.mxu0 0.0
    %3238 = vmatprep.subr.mxu0 0.0
    %3239 = vmatpush2.msra.mxu0 0.0
    %3240 = vmatprep.subr.mxu0 0.0
    %3241 = vmatpush2.msra.mxu0 0.0
    %3242 = vmatprep.subr.mxu0 0.0
    %3243 = vmatpush2.msra.mxu0 0.0
    %3244 = vmatprep.subr.mxu0 0.0
    %3245 = vmatpush2.msra.mxu0 0.0
    %3246 = vmatprep.subr.mxu0 0.0
    %3247 = vmatpush2.msra.mxu0 0.0
    %3248 = vmatprep.subr.mxu0 0.0
    %3249 = vmatpush2.msra.mxu0 0.0
    %3250 = vmatprep.mubr.f32.mxu0 0.0
    %3251 = vmatmul.mubr.f32.gmra.mxu0 %v3042
    %v3252 = vpop.f32.mrf.mxu0
    %v3253 = vadd.f32 0.0, %v3252
    %v3254 = vpop.f32.mrf.mxu0
    %v3255 = vadd.f32 0.0, %v3254
    %3256 = vdwg.mxu0
    %v3257 = vadd.f32 %v2858, %v3111
    %v3258 = vadd.f32 %v2860, %v3113
    %v3259 = vadd.f32 %v2929, %v3182
    %v3260 = vadd.f32 %v2931, %v3184
    %v3261 = vadd.f32 %v3000, %v3253
    %v3262 = vadd.f32 %v3002, %v3255
    %3263 = vrot.lane.b32.xlu0 %v2485, 1
    %v3264 = vpop.permute.xlu0 %3263
    %3265 = vrot.lane.b32.xlu0 %v2491, 1
    %v3266 = vpop.permute.xlu0 %3265
    %3267 = vrot.lane.b32.xlu0 %v2486, 1
    %v3268 = vpop.permute.xlu0 %3267
    %3269 = vrot.lane.b32.xlu0 %v2492, 1
    %v3270 = vpop.permute.xlu0 %3269
    %3271 = vrot.lane.b32.xlu0 %v2487, 1
    %v3272 = vpop.permute.xlu0 %3271
    %3273 = vrot.lane.b32.xlu0 %v2493, 1
    %v3274 = vpop.permute.xlu0 %3273
    %3275 = vrot.lane.b32.xlu0 %v2488, 1
    %v3276 = vpop.permute.xlu0 %3275
    %3277 = vrot.lane.b32.xlu0 %v2494, 1
    %v3278 = vpop.permute.xlu0 %3277
    %3279 = vrot.lane.b32.xlu0 %v2489, 1
    %v3280 = vpop.permute.xlu0 %3279
    %3281 = vrot.lane.b32.xlu0 %v2495, 1
    %v3282 = vpop.permute.xlu0 %3281
    %3283 = vrot.lane.b32.xlu0 %v2490, 1
    %v3284 = vpop.permute.xlu0 %3283
    %3285 = vrot.lane.b32.xlu0 %v2496, 1
    %v3286 = vpop.permute.xlu0 %3285
    %v3287 = vsel %vm898, %v3280, %v3284
    %v3288 = vsel %vm898, %v3282, %v3286
    %v3289 = vsel %vm898, %v3276, %v3280
    %v3290 = vsel %vm898, %v3278, %v3282
    %v3291 = vsel %vm898, %v3272, %v3276
    %v3292 = vsel %vm898, %v3274, %v3278
    %v3293 = vsel %vm898, %v3268, %v3272
    %v3294 = vsel %vm898, %v3270, %v3274
    %v3295 = vsel %vm898, %v3264, %v3268
    %v3296 = vsel %vm898, %v3266, %v3270
    %v3297 = vsel %vm898, %v3284, %v3264
    %v3298 = vsel %vm898, %v3286, %v3266
    %v3299 = vld [vmem:[%s8 + $0x18] sm:$0xff]
    %v3301 = vsel %vm2571, %v3299, 0
    %3303 = vmatprep.subr.mxu0 0.0
    %3304 = vmatpush1.msra.mxu0 0.0
    %3305 = vmatprep.subr.mxu0 0.0
    %3306 = vmatpush1.msra.mxu0 0.0
    %3307 = vmatprep.subr.mxu0 0.0
    %3308 = vmatpush1.msra.mxu0 0.0
    %3309 = vmatprep.subr.mxu0 0.0
    %3310 = vmatpush1.msra.mxu0 0.0
    %3311 = vmatprep.subr.mxu0 0.0
    %3312 = vmatpush1.msra.mxu0 0.0
    %3313 = vmatprep.subr.mxu0 0.0
    %3314 = vmatpush1.msra.mxu0 0.0
    %3315 = vmatprep.subr.mxu0 0.0
    %3316 = vmatpush1.msra.mxu0 0.0
    %3317 = vmatprep.subr.mxu0 0.0
    %3318 = vmatpush1.msra.mxu0 0.0
    %3319 = vmatprep.subr.mxu0 0.0
    %3320 = vmatpush1.msra.mxu0 0.0
    %3321 = vmatprep.subr.mxu0 0.0
    %3322 = vmatpush1.msra.mxu0 0.0
    %3323 = vmatprep.subr.mxu0 0.0
    %3324 = vmatpush1.msra.mxu0 0.0
    %3325 = vmatprep.subr.mxu0 0.0
    %3326 = vmatpush1.msra.mxu0 0.0
    %3327 = vmatprep.subr.mxu0 0.0
    %3328 = vmatpush1.msra.mxu0 0.0
    %3329 = vmatprep.subr.mxu0 0.0
    %3330 = vmatpush1.msra.mxu0 0.0
    %3331 = vmatprep.subr.mxu0 %v3296
    %3332 = vmatpush1.msra.mxu0 %v3298
    %3333 = vmatprep.subr.mxu0 %v3295
    %3334 = vmatpush1.msra.mxu0 %v3297
    %3335 = vmatprep.subr.mxu0 0.0
    %3336 = vmatpush2.msra.mxu0 0.0
    %3337 = vmatprep.subr.mxu0 0.0
    %3338 = vmatpush2.msra.mxu0 0.0
    %3339 = vmatprep.subr.mxu0 0.0
    %3340 = vmatpush2.msra.mxu0 0.0
    %3341 = vmatprep.subr.mxu0 0.0
    %3342 = vmatpush2.msra.mxu0 0.0
    %3343 = vmatprep.subr.mxu0 0.0
    %3344 = vmatpush2.msra.mxu0 0.0
    %3345 = vmatprep.subr.mxu0 0.0
    %3346 = vmatpush2.msra.mxu0 0.0
    %3347 = vmatprep.subr.mxu0 0.0
    %3348 = vmatpush2.msra.mxu0 0.0
    %3349 = vmatprep.subr.mxu0 0.0
    %3350 = vmatpush2.msra.mxu0 0.0
    %3351 = vmatprep.subr.mxu0 0.0
    %3352 = vmatpush2.msra.mxu0 0.0
    %3353 = vmatprep.subr.mxu0 0.0
    %3354 = vmatpush2.msra.mxu0 0.0
    %3355 = vmatprep.subr.mxu0 0.0
    %3356 = vmatpush2.msra.mxu0 0.0
    %3357 = vmatprep.subr.mxu0 0.0
    %3358 = vmatpush2.msra.mxu0 0.0
    %3359 = vmatprep.subr.mxu0 0.0
    %3360 = vmatpush2.msra.mxu0 0.0
    %3361 = vmatprep.subr.mxu0 0.0
    %3362 = vmatpush2.msra.mxu0 0.0
    %3363 = vmatprep.subr.mxu0 0.0
    %3364 = vmatpush2.msra.mxu0 0.0
    %3365 = vmatprep.subr.mxu0 0.0
    %3366 = vmatpush2.msra.mxu0 0.0
    %3367 = vmatprep.mubr.f32.mxu0 0.0
    %3368 = vmatmul.mubr.f32.gmra.mxu0 %v3301
    %v3369 = vpop.f32.mrf.mxu0
    %v3370 = vadd.f32 0.0, %v3369
    %v3371 = vpop.f32.mrf.mxu0
    %v3372 = vadd.f32 0.0, %v3371
    %3373 = vdwg.mxu0
    %3374 = vmatprep.subr.mxu0 0.0
    %3375 = vmatpush1.msra.mxu0 0.0
    %3376 = vmatprep.subr.mxu0 0.0
    %3377 = vmatpush1.msra.mxu0 0.0
    %3378 = vmatprep.subr.mxu0 0.0
    %3379 = vmatpush1.msra.mxu0 0.0
    %3380 = vmatprep.subr.mxu0 0.0
    %3381 = vmatpush1.msra.mxu0 0.0
    %3382 = vmatprep.subr.mxu0 0.0
    %3383 = vmatpush1.msra.mxu0 0.0
    %3384 = vmatprep.subr.mxu0 0.0
    %3385 = vmatpush1.msra.mxu0 0.0
    %3386 = vmatprep.subr.mxu0 0.0
    %3387 = vmatpush1.msra.mxu0 0.0
    %3388 = vmatprep.subr.mxu0 0.0
    %3389 = vmatpush1.msra.mxu0 0.0
    %3390 = vmatprep.subr.mxu0 0.0
    %3391 = vmatpush1.msra.mxu0 0.0
    %3392 = vmatprep.subr.mxu0 0.0
    %3393 = vmatpush1.msra.mxu0 0.0
    %3394 = vmatprep.subr.mxu0 0.0
    %3395 = vmatpush1.msra.mxu0 0.0
    %3396 = vmatprep.subr.mxu0 0.0
    %3397 = vmatpush1.msra.mxu0 0.0
    %3398 = vmatprep.subr.mxu0 0.0
    %3399 = vmatpush1.msra.mxu0 0.0
    %3400 = vmatprep.subr.mxu0 0.0
    %3401 = vmatpush1.msra.mxu0 0.0
    %3402 = vmatprep.subr.mxu0 %v3292
    %3403 = vmatpush1.msra.mxu0 %v3294
    %3404 = vmatprep.subr.mxu0 %v3291
    %3405 = vmatpush1.msra.mxu0 %v3293
    %3406 = vmatprep.subr.mxu0 0.0
    %3407 = vmatpush2.msra.mxu0 0.0
    %3408 = vmatprep.subr.mxu0 0.0
    %3409 = vmatpush2.msra.mxu0 0.0
    %3410 = vmatprep.subr.mxu0 0.0
    %3411 = vmatpush2.msra.mxu0 0.0
    %3412 = vmatprep.subr.mxu0 0.0
    %3413 = vmatpush2.msra.mxu0 0.0
    %3414 = vmatprep.subr.mxu0 0.0
    %3415 = vmatpush2.msra.mxu0 0.0
    %3416 = vmatprep.subr.mxu0 0.0
    %3417 = vmatpush2.msra.mxu0 0.0
    %3418 = vmatprep.subr.mxu0 0.0
    %3419 = vmatpush2.msra.mxu0 0.0
    %3420 = vmatprep.subr.mxu0 0.0
    %3421 = vmatpush2.msra.mxu0 0.0
    %3422 = vmatprep.subr.mxu0 0.0
    %3423 = vmatpush2.msra.mxu0 0.0
    %3424 = vmatprep.subr.mxu0 0.0
    %3425 = vmatpush2.msra.mxu0 0.0
    %3426 = vmatprep.subr.mxu0 0.0
    %3427 = vmatpush2.msra.mxu0 0.0
    %3428 = vmatprep.subr.mxu0 0.0
    %3429 = vmatpush2.msra.mxu0 0.0
    %3430 = vmatprep.subr.mxu0 0.0
    %3431 = vmatpush2.msra.mxu0 0.0
    %3432 = vmatprep.subr.mxu0 0.0
    %3433 = vmatpush2.msra.mxu0 0.0
    %3434 = vmatprep.subr.mxu0 0.0
    %3435 = vmatpush2.msra.mxu0 0.0
    %3436 = vmatprep.subr.mxu0 0.0
    %3437 = vmatpush2.msra.mxu0 0.0
    %3438 = vmatprep.mubr.f32.mxu0 0.0
    %3439 = vmatmul.mubr.f32.gmra.mxu0 %v3301
    %v3440 = vpop.f32.mrf.mxu0
    %v3441 = vadd.f32 0.0, %v3440
    %v3442 = vpop.f32.mrf.mxu0
    %v3443 = vadd.f32 0.0, %v3442
    %3444 = vdwg.mxu0
    %3445 = vmatprep.subr.mxu0 0.0
    %3446 = vmatpush1.msra.mxu0 0.0
    %3447 = vmatprep.subr.mxu0 0.0
    %3448 = vmatpush1.msra.mxu0 0.0
    %3449 = vmatprep.subr.mxu0 0.0
    %3450 = vmatpush1.msra.mxu0 0.0
    %3451 = vmatprep.subr.mxu0 0.0
    %3452 = vmatpush1.msra.mxu0 0.0
    %3453 = vmatprep.subr.mxu0 0.0
    %3454 = vmatpush1.msra.mxu0 0.0
    %3455 = vmatprep.subr.mxu0 0.0
    %3456 = vmatpush1.msra.mxu0 0.0
    %3457 = vmatprep.subr.mxu0 0.0
    %3458 = vmatpush1.msra.mxu0 0.0
    %3459 = vmatprep.subr.mxu0 0.0
    %3460 = vmatpush1.msra.mxu0 0.0
    %3461 = vmatprep.subr.mxu0 0.0
    %3462 = vmatpush1.msra.mxu0 0.0
    %3463 = vmatprep.subr.mxu0 0.0
    %3464 = vmatpush1.msra.mxu0 0.0
    %3465 = vmatprep.subr.mxu0 0.0
    %3466 = vmatpush1.msra.mxu0 0.0
    %3467 = vmatprep.subr.mxu0 0.0
    %3468 = vmatpush1.msra.mxu0 0.0
    %3469 = vmatprep.subr.mxu0 0.0
    %3470 = vmatpush1.msra.mxu0 0.0
    %3471 = vmatprep.subr.mxu0 0.0
    %3472 = vmatpush1.msra.mxu0 0.0
    %3473 = vmatprep.subr.mxu0 %v3288
    %3474 = vmatpush1.msra.mxu0 %v3290
    %3475 = vmatprep.subr.mxu0 %v3287
    %3476 = vmatpush1.msra.mxu0 %v3289
    %3477 = vmatprep.subr.mxu0 0.0
    %3478 = vmatpush2.msra.mxu0 0.0
    %3479 = vmatprep.subr.mxu0 0.0
    %3480 = vmatpush2.msra.mxu0 0.0
    %3481 = vmatprep.subr.mxu0 0.0
    %3482 = vmatpush2.msra.mxu0 0.0
    %3483 = vmatprep.subr.mxu0 0.0
    %3484 = vmatpush2.msra.mxu0 0.0
    %3485 = vmatprep.subr.mxu0 0.0
    %3486 = vmatpush2.msra.mxu0 0.0
    %3487 = vmatprep.subr.mxu0 0.0
    %3488 = vmatpush2.msra.mxu0 0.0
    %3489 = vmatprep.subr.mxu0 0.0
    %3490 = vmatpush2.msra.mxu0 0.0
    %3491 = vmatprep.subr.mxu0 0.0
    %3492 = vmatpush2.msra.mxu0 0.0
    %3493 = vmatprep.subr.mxu0 0.0
    %3494 = vmatpush2.msra.mxu0 0.0
    %3495 = vmatprep.subr.mxu0 0.0
    %3496 = vmatpush2.msra.mxu0 0.0
    %3497 = vmatprep.subr.mxu0 0.0
    %3498 = vmatpush2.msra.mxu0 0.0
    %3499 = vmatprep.subr.mxu0 0.0
    %3500 = vmatpush2.msra.mxu0 0.0
    %3501 = vmatprep.subr.mxu0 0.0
    %3502 = vmatpush2.msra.mxu0 0.0
    %3503 = vmatprep.subr.mxu0 0.0
    %3504 = vmatpush2.msra.mxu0 0.0
    %3505 = vmatprep.subr.mxu0 0.0
    %3506 = vmatpush2.msra.mxu0 0.0
    %3507 = vmatprep.subr.mxu0 0.0
    %3508 = vmatpush2.msra.mxu0 0.0
    %3509 = vmatprep.mubr.f32.mxu0 0.0
    %3510 = vmatmul.mubr.f32.gmra.mxu0 %v3301
    %v3511 = vpop.f32.mrf.mxu0
    %v3512 = vadd.f32 0.0, %v3511
    %v3513 = vpop.f32.mrf.mxu0
    %v3514 = vadd.f32 0.0, %v3513
    %3515 = vdwg.mxu0
    %v3516 = vadd.f32 %v3257, %v3370
    %v3517 = vadd.f32 %v3258, %v3372
    %v3518 = vadd.f32 %v3259, %v3441
    %v3519 = vadd.f32 %v3260, %v3443
    %v3520 = vadd.f32 %v3261, %v3512
    %v3521 = vadd.f32 %v3262, %v3514
    %v3522 = vld [vmem:[%s8 + $0x20] sm:$0xff]
    %v3524 = vsel %vm2571, %v3522, 0
    %3526 = vmatprep.subr.mxu0 0.0
    %3527 = vmatpush1.msra.mxu0 0.0
    %3528 = vmatprep.subr.mxu0 0.0
    %3529 = vmatpush1.msra.mxu0 0.0
    %3530 = vmatprep.subr.mxu0 0.0
    %3531 = vmatpush1.msra.mxu0 0.0
    %3532 = vmatprep.subr.mxu0 0.0
    %3533 = vmatpush1.msra.mxu0 0.0
    %3534 = vmatprep.subr.mxu0 0.0
    %3535 = vmatpush1.msra.mxu0 0.0
    %3536 = vmatprep.subr.mxu0 0.0
    %3537 = vmatpush1.msra.mxu0 0.0
    %3538 = vmatprep.subr.mxu0 0.0
    %3539 = vmatpush1.msra.mxu0 0.0
    %3540 = vmatprep.subr.mxu0 0.0
    %3541 = vmatpush1.msra.mxu0 0.0
    %3542 = vmatprep.subr.mxu0 0.0
    %3543 = vmatpush1.msra.mxu0 0.0
    %3544 = vmatprep.subr.mxu0 0.0
    %3545 = vmatpush1.msra.mxu0 0.0
    %3546 = vmatprep.subr.mxu0 0.0
    %3547 = vmatpush1.msra.mxu0 0.0
    %3548 = vmatprep.subr.mxu0 0.0
    %3549 = vmatpush1.msra.mxu0 0.0
    %3550 = vmatprep.subr.mxu0 0.0
    %3551 = vmatpush1.msra.mxu0 0.0
    %3552 = vmatprep.subr.mxu0 0.0
    %3553 = vmatpush1.msra.mxu0 0.0
    %3554 = vmatprep.subr.mxu0 %v2492
    %3555 = vmatpush1.msra.mxu0 %v2491
    %3556 = vmatprep.subr.mxu0 %v2486
    %3557 = vmatpush1.msra.mxu0 %v2485
    %3558 = vmatprep.subr.mxu0 0.0
    %3559 = vmatpush2.msra.mxu0 0.0
    %3560 = vmatprep.subr.mxu0 0.0
    %3561 = vmatpush2.msra.mxu0 0.0
    %3562 = vmatprep.subr.mxu0 0.0
    %3563 = vmatpush2.msra.mxu0 0.0
    %3564 = vmatprep.subr.mxu0 0.0
    %3565 = vmatpush2.msra.mxu0 0.0
    %3566 = vmatprep.subr.mxu0 0.0
    %3567 = vmatpush2.msra.mxu0 0.0
    %3568 = vmatprep.subr.mxu0 0.0
    %3569 = vmatpush2.msra.mxu0 0.0
    %3570 = vmatprep.subr.mxu0 0.0
    %3571 = vmatpush2.msra.mxu0 0.0
    %3572 = vmatprep.subr.mxu0 0.0
    %3573 = vmatpush2.msra.mxu0 0.0
    %3574 = vmatprep.subr.mxu0 0.0
    %3575 = vmatpush2.msra.mxu0 0.0
    %3576 = vmatprep.subr.mxu0 0.0
    %3577 = vmatpush2.msra.mxu0 0.0
    %3578 = vmatprep.subr.mxu0 0.0
    %3579 = vmatpush2.msra.mxu0 0.0
    %3580 = vmatprep.subr.mxu0 0.0
    %3581 = vmatpush2.msra.mxu0 0.0
    %3582 = vmatprep.subr.mxu0 0.0
    %3583 = vmatpush2.msra.mxu0 0.0
    %3584 = vmatprep.subr.mxu0 0.0
    %3585 = vmatpush2.msra.mxu0 0.0
    %3586 = vmatprep.subr.mxu0 0.0
    %3587 = vmatpush2.msra.mxu0 0.0
    %3588 = vmatprep.subr.mxu0 0.0
    %3589 = vmatpush2.msra.mxu0 0.0
    %3590 = vmatprep.mubr.f32.mxu0 0.0
    %3591 = vmatmul.mubr.f32.gmra.mxu0 %v3524
    %v3592 = vpop.f32.mrf.mxu0
    %v3593 = vadd.f32 0.0, %v3592
    %v3594 = vpop.f32.mrf.mxu0
    %v3595 = vadd.f32 0.0, %v3594
    %3596 = vdwg.mxu0
    %3597 = vmatprep.subr.mxu0 0.0
    %3598 = vmatpush1.msra.mxu0 0.0
    %3599 = vmatprep.subr.mxu0 0.0
    %3600 = vmatpush1.msra.mxu0 0.0
    %3601 = vmatprep.subr.mxu0 0.0
    %3602 = vmatpush1.msra.mxu0 0.0
    %3603 = vmatprep.subr.mxu0 0.0
    %3604 = vmatpush1.msra.mxu0 0.0
    %3605 = vmatprep.subr.mxu0 0.0
    %3606 = vmatpush1.msra.mxu0 0.0
    %3607 = vmatprep.subr.mxu0 0.0
    %3608 = vmatpush1.msra.mxu0 0.0
    %3609 = vmatprep.subr.mxu0 0.0
    %3610 = vmatpush1.msra.mxu0 0.0
    %3611 = vmatprep.subr.mxu0 0.0
    %3612 = vmatpush1.msra.mxu0 0.0
    %3613 = vmatprep.subr.mxu0 0.0
    %3614 = vmatpush1.msra.mxu0 0.0
    %3615 = vmatprep.subr.mxu0 0.0
    %3616 = vmatpush1.msra.mxu0 0.0
    %3617 = vmatprep.subr.mxu0 0.0
    %3618 = vmatpush1.msra.mxu0 0.0
    %3619 = vmatprep.subr.mxu0 0.0
    %3620 = vmatpush1.msra.mxu0 0.0
    %3621 = vmatprep.subr.mxu0 0.0
    %3622 = vmatpush1.msra.mxu0 0.0
    %3623 = vmatprep.subr.mxu0 0.0
    %3624 = vmatpush1.msra.mxu0 0.0
    %3625 = vmatprep.subr.mxu0 %v2494
    %3626 = vmatpush1.msra.mxu0 %v2493
    %3627 = vmatprep.subr.mxu0 %v2488
    %3628 = vmatpush1.msra.mxu0 %v2487
    %3629 = vmatprep.subr.mxu0 0.0
    %3630 = vmatpush2.msra.mxu0 0.0
    %3631 = vmatprep.subr.mxu0 0.0
    %3632 = vmatpush2.msra.mxu0 0.0
    %3633 = vmatprep.subr.mxu0 0.0
    %3634 = vmatpush2.msra.mxu0 0.0
    %3635 = vmatprep.subr.mxu0 0.0
    %3636 = vmatpush2.msra.mxu0 0.0
    %3637 = vmatprep.subr.mxu0 0.0
    %3638 = vmatpush2.msra.mxu0 0.0
    %3639 = vmatprep.subr.mxu0 0.0
    %3640 = vmatpush2.msra.mxu0 0.0
    %3641 = vmatprep.subr.mxu0 0.0
    %3642 = vmatpush2.msra.mxu0 0.0
    %3643 = vmatprep.subr.mxu0 0.0
    %3644 = vmatpush2.msra.mxu0 0.0
    %3645 = vmatprep.subr.mxu0 0.0
    %3646 = vmatpush2.msra.mxu0 0.0
    %3647 = vmatprep.subr.mxu0 0.0
    %3648 = vmatpush2.msra.mxu0 0.0
    %3649 = vmatprep.subr.mxu0 0.0
    %3650 = vmatpush2.msra.mxu0 0.0
    %3651 = vmatprep.subr.mxu0 0.0
    %3652 = vmatpush2.msra.mxu0 0.0
    %3653 = vmatprep.subr.mxu0 0.0
    %3654 = vmatpush2.msra.mxu0 0.0
    %3655 = vmatprep.subr.mxu0 0.0
    %3656 = vmatpush2.msra.mxu0 0.0
    %3657 = vmatprep.subr.mxu0 0.0
    %3658 = vmatpush2.msra.mxu0 0.0
    %3659 = vmatprep.subr.mxu0 0.0
    %3660 = vmatpush2.msra.mxu0 0.0
    %3661 = vmatprep.mubr.f32.mxu0 0.0
    %3662 = vmatmul.mubr.f32.gmra.mxu0 %v3524
    %v3663 = vpop.f32.mrf.mxu0
    %v3664 = vadd.f32 0.0, %v3663
    %v3665 = vpop.f32.mrf.mxu0
    %v3666 = vadd.f32 0.0, %v3665
    %3667 = vdwg.mxu0
    %3668 = vmatprep.subr.mxu0 0.0
    %3669 = vmatpush1.msra.mxu0 0.0
    %3670 = vmatprep.subr.mxu0 0.0
    %3671 = vmatpush1.msra.mxu0 0.0
    %3672 = vmatprep.subr.mxu0 0.0
    %3673 = vmatpush1.msra.mxu0 0.0
    %3674 = vmatprep.subr.mxu0 0.0
    %3675 = vmatpush1.msra.mxu0 0.0
    %3676 = vmatprep.subr.mxu0 0.0
    %3677 = vmatpush1.msra.mxu0 0.0
    %3678 = vmatprep.subr.mxu0 0.0
    %3679 = vmatpush1.msra.mxu0 0.0
    %3680 = vmatprep.subr.mxu0 0.0
    %3681 = vmatpush1.msra.mxu0 0.0
    %3682 = vmatprep.subr.mxu0 0.0
    %3683 = vmatpush1.msra.mxu0 0.0
    %3684 = vmatprep.subr.mxu0 0.0
    %3685 = vmatpush1.msra.mxu0 0.0
    %3686 = vmatprep.subr.mxu0 0.0
    %3687 = vmatpush1.msra.mxu0 0.0
    %3688 = vmatprep.subr.mxu0 0.0
    %3689 = vmatpush1.msra.mxu0 0.0
    %3690 = vmatprep.subr.mxu0 0.0
    %3691 = vmatpush1.msra.mxu0 0.0
    %3692 = vmatprep.subr.mxu0 0.0
    %3693 = vmatpush1.msra.mxu0 0.0
    %3694 = vmatprep.subr.mxu0 0.0
    %3695 = vmatpush1.msra.mxu0 0.0
    %3696 = vmatprep.subr.mxu0 %v2496
    %3697 = vmatpush1.msra.mxu0 %v2495
    %3698 = vmatprep.subr.mxu0 %v2490
    %3699 = vmatpush1.msra.mxu0 %v2489
    %3700 = vmatprep.subr.mxu0 0.0
    %3701 = vmatpush2.msra.mxu0 0.0
    %3702 = vmatprep.subr.mxu0 0.0
    %3703 = vmatpush2.msra.mxu0 0.0
    %3704 = vmatprep.subr.mxu0 0.0
    %3705 = vmatpush2.msra.mxu0 0.0
    %3706 = vmatprep.subr.mxu0 0.0
    %3707 = vmatpush2.msra.mxu0 0.0
    %3708 = vmatprep.subr.mxu0 0.0
    %3709 = vmatpush2.msra.mxu0 0.0
    %3710 = vmatprep.subr.mxu0 0.0
    %3711 = vmatpush2.msra.mxu0 0.0
    %3712 = vmatprep.subr.mxu0 0.0
    %3713 = vmatpush2.msra.mxu0 0.0
    %3714 = vmatprep.subr.mxu0 0.0
    %3715 = vmatpush2.msra.mxu0 0.0
    %3716 = vmatprep.subr.mxu0 0.0
    %3717 = vmatpush2.msra.mxu0 0.0
    %3718 = vmatprep.subr.mxu0 0.0
    %3719 = vmatpush2.msra.mxu0 0.0
    %3720 = vmatprep.subr.mxu0 0.0
    %3721 = vmatpush2.msra.mxu0 0.0
    %3722 = vmatprep.subr.mxu0 0.0
    %3723 = vmatpush2.msra.mxu0 0.0
    %3724 = vmatprep.subr.mxu0 0.0
    %3725 = vmatpush2.msra.mxu0 0.0
    %3726 = vmatprep.subr.mxu0 0.0
    %3727 = vmatpush2.msra.mxu0 0.0
    %3728 = vmatprep.subr.mxu0 0.0
    %3729 = vmatpush2.msra.mxu0 0.0
    %3730 = vmatprep.subr.mxu0 0.0
    %3731 = vmatpush2.msra.mxu0 0.0
    %3732 = vmatprep.mubr.f32.mxu0 0.0
    %3733 = vmatmul.mubr.f32.gmra.mxu0 %v3524
    %v3734 = vpop.f32.mrf.mxu0
    %v3735 = vadd.f32 0.0, %v3734
    %v3736 = vpop.f32.mrf.mxu0
    %v3737 = vadd.f32 0.0, %v3736
    %3738 = vdwg.mxu0
    %v3739 = vadd.f32 %v3516, %v3593
    %v3740 = vadd.f32 %v3517, %v3595
    %v3741 = vadd.f32 %v3518, %v3664
    %v3742 = vadd.f32 %v3519, %v3666
    %v3743 = vadd.f32 %v3520, %v3735
    %v3744 = vadd.f32 %v3521, %v3737
    %3745 = vrot.lane.b32.xlu0 %v2485, 127
    %v3746 = vpop.permute.xlu0 %3745
    %3747 = vrot.lane.b32.xlu0 %v2491, 127
    %v3748 = vpop.permute.xlu0 %3747
    %3749 = vrot.lane.b32.xlu0 %v2486, 127
    %v3750 = vpop.permute.xlu0 %3749
    %3751 = vrot.lane.b32.xlu0 %v2492, 127
    %v3752 = vpop.permute.xlu0 %3751
    %3753 = vrot.lane.b32.xlu0 %v2487, 127
    %v3754 = vpop.permute.xlu0 %3753
    %3755 = vrot.lane.b32.xlu0 %v2493, 127
    %v3756 = vpop.permute.xlu0 %3755
    %3757 = vrot.lane.b32.xlu0 %v2488, 127
    %v3758 = vpop.permute.xlu0 %3757
    %3759 = vrot.lane.b32.xlu0 %v2494, 127
    %v3760 = vpop.permute.xlu0 %3759
    %3761 = vrot.lane.b32.xlu0 %v2489, 127
    %v3762 = vpop.permute.xlu0 %3761
    %3763 = vrot.lane.b32.xlu0 %v2495, 127
    %v3764 = vpop.permute.xlu0 %3763
    %3765 = vrot.lane.b32.xlu0 %v2490, 127
    %v3766 = vpop.permute.xlu0 %3765
    %3767 = vrot.lane.b32.xlu0 %v2496, 127
    %v3768 = vpop.permute.xlu0 %3767
    %v3769 = vsel %vm1363, %v3762, %v3766
    %v3770 = vsel %vm1363, %v3764, %v3768
    %v3771 = vsel %vm1363, %v3758, %v3762
    %v3772 = vsel %vm1363, %v3760, %v3764
    %v3773 = vsel %vm1363, %v3754, %v3758
    %v3774 = vsel %vm1363, %v3756, %v3760
    %v3775 = vsel %vm1363, %v3750, %v3754
    %v3776 = vsel %vm1363, %v3752, %v3756
    %v3777 = vsel %vm1363, %v3746, %v3750
    %v3778 = vsel %vm1363, %v3748, %v3752
    %v3779 = vsel %vm1363, %v3766, %v3746
    %v3780 = vsel %vm1363, %v3768, %v3748
    %v3781 = vld [vmem:[%s8 + $0x28] sm:$0xff]
    %v3783 = vsel %vm2571, %v3781, 0
    %3785 = vmatprep.subr.mxu0 0.0
    %3786 = vmatpush1.msra.mxu0 0.0
    %3787 = vmatprep.subr.mxu0 0.0
    %3788 = vmatpush1.msra.mxu0 0.0
    %3789 = vmatprep.subr.mxu0 0.0
    %3790 = vmatpush1.msra.mxu0 0.0
    %3791 = vmatprep.subr.mxu0 0.0
    %3792 = vmatpush1.msra.mxu0 0.0
    %3793 = vmatprep.subr.mxu0 0.0
    %3794 = vmatpush1.msra.mxu0 0.0
    %3795 = vmatprep.subr.mxu0 0.0
    %3796 = vmatpush1.msra.mxu0 0.0
    %3797 = vmatprep.subr.mxu0 0.0
    %3798 = vmatpush1.msra.mxu0 0.0
    %3799 = vmatprep.subr.mxu0 0.0
    %3800 = vmatpush1.msra.mxu0 0.0
    %3801 = vmatprep.subr.mxu0 0.0
    %3802 = vmatpush1.msra.mxu0 0.0
    %3803 = vmatprep.subr.mxu0 0.0
    %3804 = vmatpush1.msra.mxu0 0.0
    %3805 = vmatprep.subr.mxu0 0.0
    %3806 = vmatpush1.msra.mxu0 0.0
    %3807 = vmatprep.subr.mxu0 0.0
    %3808 = vmatpush1.msra.mxu0 0.0
    %3809 = vmatprep.subr.mxu0 0.0
    %3810 = vmatpush1.msra.mxu0 0.0
    %3811 = vmatprep.subr.mxu0 0.0
    %3812 = vmatpush1.msra.mxu0 0.0
    %3813 = vmatprep.subr.mxu0 %v3776
    %3814 = vmatpush1.msra.mxu0 %v3778
    %3815 = vmatprep.subr.mxu0 %v3775
    %3816 = vmatpush1.msra.mxu0 %v3777
    %3817 = vmatprep.subr.mxu0 0.0
    %3818 = vmatpush2.msra.mxu0 0.0
    %3819 = vmatprep.subr.mxu0 0.0
    %3820 = vmatpush2.msra.mxu0 0.0
    %3821 = vmatprep.subr.mxu0 0.0
    %3822 = vmatpush2.msra.mxu0 0.0
    %3823 = vmatprep.subr.mxu0 0.0
    %3824 = vmatpush2.msra.mxu0 0.0
    %3825 = vmatprep.subr.mxu0 0.0
    %3826 = vmatpush2.msra.mxu0 0.0
    %3827 = vmatprep.subr.mxu0 0.0
    %3828 = vmatpush2.msra.mxu0 0.0
    %3829 = vmatprep.subr.mxu0 0.0
    %3830 = vmatpush2.msra.mxu0 0.0
    %3831 = vmatprep.subr.mxu0 0.0
    %3832 = vmatpush2.msra.mxu0 0.0
    %3833 = vmatprep.subr.mxu0 0.0
    %3834 = vmatpush2.msra.mxu0 0.0
    %3835 = vmatprep.subr.mxu0 0.0
    %3836 = vmatpush2.msra.mxu0 0.0
    %3837 = vmatprep.subr.mxu0 0.0
    %3838 = vmatpush2.msra.mxu0 0.0
    %3839 = vmatprep.subr.mxu0 0.0
    %3840 = vmatpush2.msra.mxu0 0.0
    %3841 = vmatprep.subr.mxu0 0.0
    %3842 = vmatpush2.msra.mxu0 0.0
    %3843 = vmatprep.subr.mxu0 0.0
    %3844 = vmatpush2.msra.mxu0 0.0
    %3845 = vmatprep.subr.mxu0 0.0
    %3846 = vmatpush2.msra.mxu0 0.0
    %3847 = vmatprep.subr.mxu0 0.0
    %3848 = vmatpush2.msra.mxu0 0.0
    %3849 = vmatprep.mubr.f32.mxu0 0.0
    %3850 = vmatmul.mubr.f32.gmra.mxu0 %v3783
    %v3851 = vpop.f32.mrf.mxu0
    %v3852 = vadd.f32 0.0, %v3851
    %v3853 = vpop.f32.mrf.mxu0
    %v3854 = vadd.f32 0.0, %v3853
    %3855 = vdwg.mxu0
    %3856 = vmatprep.subr.mxu0 0.0
    %3857 = vmatpush1.msra.mxu0 0.0
    %3858 = vmatprep.subr.mxu0 0.0
    %3859 = vmatpush1.msra.mxu0 0.0
    %3860 = vmatprep.subr.mxu0 0.0
    %3861 = vmatpush1.msra.mxu0 0.0
    %3862 = vmatprep.subr.mxu0 0.0
    %3863 = vmatpush1.msra.mxu0 0.0
    %3864 = vmatprep.subr.mxu0 0.0
    %3865 = vmatpush1.msra.mxu0 0.0
    %3866 = vmatprep.subr.mxu0 0.0
    %3867 = vmatpush1.msra.mxu0 0.0
    %3868 = vmatprep.subr.mxu0 0.0
    %3869 = vmatpush1.msra.mxu0 0.0
    %3870 = vmatprep.subr.mxu0 0.0
    %3871 = vmatpush1.msra.mxu0 0.0
    %3872 = vmatprep.subr.mxu0 0.0
    %3873 = vmatpush1.msra.mxu0 0.0
    %3874 = vmatprep.subr.mxu0 0.0
    %3875 = vmatpush1.msra.mxu0 0.0
    %3876 = vmatprep.subr.mxu0 0.0
    %3877 = vmatpush1.msra.mxu0 0.0
    %3878 = vmatprep.subr.mxu0 0.0
    %3879 = vmatpush1.msra.mxu0 0.0
    %3880 = vmatprep.subr.mxu0 0.0
    %3881 = vmatpush1.msra.mxu0 0.0
    %3882 = vmatprep.subr.mxu0 0.0
    %3883 = vmatpush1.msra.mxu0 0.0
    %3884 = vmatprep.subr.mxu0 %v3772
    %3885 = vmatpush1.msra.mxu0 %v3774
    %3886 = vmatprep.subr.mxu0 %v3771
    %3887 = vmatpush1.msra.mxu0 %v3773
    %3888 = vmatprep.subr.mxu0 0.0
    %3889 = vmatpush2.msra.mxu0 0.0
    %3890 = vmatprep.subr.mxu0 0.0
    %3891 = vmatpush2.msra.mxu0 0.0
    %3892 = vmatprep.subr.mxu0 0.0
    %3893 = vmatpush2.msra.mxu0 0.0
    %3894 = vmatprep.subr.mxu0 0.0
    %3895 = vmatpush2.msra.mxu0 0.0
    %3896 = vmatprep.subr.mxu0 0.0
    %3897 = vmatpush2.msra.mxu0 0.0
    %3898 = vmatprep.subr.mxu0 0.0
    %3899 = vmatpush2.msra.mxu0 0.0
    %3900 = vmatprep.subr.mxu0 0.0
    %3901 = vmatpush2.msra.mxu0 0.0
    %3902 = vmatprep.subr.mxu0 0.0
    %3903 = vmatpush2.msra.mxu0 0.0
    %3904 = vmatprep.subr.mxu0 0.0
    %3905 = vmatpush2.msra.mxu0 0.0
    %3906 = vmatprep.subr.mxu0 0.0
    %3907 = vmatpush2.msra.mxu0 0.0
    %3908 = vmatprep.subr.mxu0 0.0
    %3909 = vmatpush2.msra.mxu0 0.0
    %3910 = vmatprep.subr.mxu0 0.0
    %3911 = vmatpush2.msra.mxu0 0.0
    %3912 = vmatprep.subr.mxu0 0.0
    %3913 = vmatpush2.msra.mxu0 0.0
    %3914 = vmatprep.subr.mxu0 0.0
    %3915 = vmatpush2.msra.mxu0 0.0
    %3916 = vmatprep.subr.mxu0 0.0
    %3917 = vmatpush2.msra.mxu0 0.0
    %3918 = vmatprep.subr.mxu0 0.0
    %3919 = vmatpush2.msra.mxu0 0.0
    %3920 = vmatprep.mubr.f32.mxu0 0.0
    %3921 = vmatmul.mubr.f32.gmra.mxu0 %v3783
    %v3922 = vpop.f32.mrf.mxu0
    %v3923 = vadd.f32 0.0, %v3922
    %v3924 = vpop.f32.mrf.mxu0
    %v3925 = vadd.f32 0.0, %v3924
    %3926 = vdwg.mxu0
    %3927 = vmatprep.subr.mxu0 0.0
    %3928 = vmatpush1.msra.mxu0 0.0
    %3929 = vmatprep.subr.mxu0 0.0
    %3930 = vmatpush1.msra.mxu0 0.0
    %3931 = vmatprep.subr.mxu0 0.0
    %3932 = vmatpush1.msra.mxu0 0.0
    %3933 = vmatprep.subr.mxu0 0.0
    %3934 = vmatpush1.msra.mxu0 0.0
    %3935 = vmatprep.subr.mxu0 0.0
    %3936 = vmatpush1.msra.mxu0 0.0
    %3937 = vmatprep.subr.mxu0 0.0
    %3938 = vmatpush1.msra.mxu0 0.0
    %3939 = vmatprep.subr.mxu0 0.0
    %3940 = vmatpush1.msra.mxu0 0.0
    %3941 = vmatprep.subr.mxu0 0.0
    %3942 = vmatpush1.msra.mxu0 0.0
    %3943 = vmatprep.subr.mxu0 0.0
    %3944 = vmatpush1.msra.mxu0 0.0
    %3945 = vmatprep.subr.mxu0 0.0
    %3946 = vmatpush1.msra.mxu0 0.0
    %3947 = vmatprep.subr.mxu0 0.0
    %3948 = vmatpush1.msra.mxu0 0.0
    %3949 = vmatprep.subr.mxu0 0.0
    %3950 = vmatpush1.msra.mxu0 0.0
    %3951 = vmatprep.subr.mxu0 0.0
    %3952 = vmatpush1.msra.mxu0 0.0
    %3953 = vmatprep.subr.mxu0 0.0
    %3954 = vmatpush1.msra.mxu0 0.0
    %3955 = vmatprep.subr.mxu0 %v3780
    %3956 = vmatpush1.msra.mxu0 %v3770
    %3957 = vmatprep.subr.mxu0 %v3779
    %3958 = vmatpush1.msra.mxu0 %v3769
    %3959 = vmatprep.subr.mxu0 0.0
    %3960 = vmatpush2.msra.mxu0 0.0
    %3961 = vmatprep.subr.mxu0 0.0
    %3962 = vmatpush2.msra.mxu0 0.0
    %3963 = vmatprep.subr.mxu0 0.0
    %3964 = vmatpush2.msra.mxu0 0.0
    %3965 = vmatprep.subr.mxu0 0.0
    %3966 = vmatpush2.msra.mxu0 0.0
    %3967 = vmatprep.subr.mxu0 0.0
    %3968 = vmatpush2.msra.mxu0 0.0
    %3969 = vmatprep.subr.mxu0 0.0
    %3970 = vmatpush2.msra.mxu0 0.0
    %3971 = vmatprep.subr.mxu0 0.0
    %3972 = vmatpush2.msra.mxu0 0.0
    %3973 = vmatprep.subr.mxu0 0.0
    %3974 = vmatpush2.msra.mxu0 0.0
    %3975 = vmatprep.subr.mxu0 0.0
    %3976 = vmatpush2.msra.mxu0 0.0
    %3977 = vmatprep.subr.mxu0 0.0
    %3978 = vmatpush2.msra.mxu0 0.0
    %3979 = vmatprep.subr.mxu0 0.0
    %3980 = vmatpush2.msra.mxu0 0.0
    %3981 = vmatprep.subr.mxu0 0.0
    %3982 = vmatpush2.msra.mxu0 0.0
    %3983 = vmatprep.subr.mxu0 0.0
    %3984 = vmatpush2.msra.mxu0 0.0
    %3985 = vmatprep.subr.mxu0 0.0
    %3986 = vmatpush2.msra.mxu0 0.0
    %3987 = vmatprep.subr.mxu0 0.0
    %3988 = vmatpush2.msra.mxu0 0.0
    %3989 = vmatprep.subr.mxu0 0.0
    %3990 = vmatpush2.msra.mxu0 0.0
    %3991 = vmatprep.mubr.f32.mxu0 0.0
    %3992 = vmatmul.mubr.f32.gmra.mxu0 %v3783
    %v3993 = vpop.f32.mrf.mxu0
    %v3994 = vadd.f32 0.0, %v3993
    %v3995 = vpop.f32.mrf.mxu0
    %v3996 = vadd.f32 0.0, %v3995
    %3997 = vdwg.mxu0
    %v3998 = vadd.f32 %v3739, %v3852
    %v3999 = vadd.f32 %v3740, %v3854
    %v4000 = vadd.f32 %v3741, %v3923
    %v4001 = vadd.f32 %v3742, %v3925
    %v4002 = vadd.f32 %v3743, %v3994
    %v4003 = vadd.f32 %v3744, %v3996
    %4004 = vrot.lane.b32.xlu0 %v2485, 111
    %v4005 = vpop.permute.xlu0 %4004
    %4006 = vrot.lane.b32.xlu0 %v2491, 111
    %v4007 = vpop.permute.xlu0 %4006
    %4008 = vrot.lane.b32.xlu0 %v2486, 111
    %v4009 = vpop.permute.xlu0 %4008
    %4010 = vrot.lane.b32.xlu0 %v2492, 111
    %v4011 = vpop.permute.xlu0 %4010
    %4012 = vrot.lane.b32.xlu0 %v2487, 111
    %v4013 = vpop.permute.xlu0 %4012
    %4014 = vrot.lane.b32.xlu0 %v2493, 111
    %v4015 = vpop.permute.xlu0 %4014
    %4016 = vrot.lane.b32.xlu0 %v2488, 111
    %v4017 = vpop.permute.xlu0 %4016
    %4018 = vrot.lane.b32.xlu0 %v2494, 111
    %v4019 = vpop.permute.xlu0 %4018
    %4020 = vrot.lane.b32.xlu0 %v2489, 111
    %v4021 = vpop.permute.xlu0 %4020
    %4022 = vrot.lane.b32.xlu0 %v2495, 111
    %v4023 = vpop.permute.xlu0 %4022
    %4024 = vrot.lane.b32.xlu0 %v2490, 111
    %v4025 = vpop.permute.xlu0 %4024
    %4026 = vrot.lane.b32.xlu0 %v2496, 111
    %v4027 = vpop.permute.xlu0 %4026
    %v4028 = vsel %vm1605, %v4021, %v4025
    %v4029 = vsel %vm1605, %v4023, %v4027
    %v4030 = vsel %vm1605, %v4017, %v4021
    %v4031 = vsel %vm1605, %v4019, %v4023
    %v4032 = vsel %vm1605, %v4013, %v4017
    %v4033 = vsel %vm1605, %v4015, %v4019
    %v4034 = vsel %vm1605, %v4009, %v4013
    %v4035 = vsel %vm1605, %v4011, %v4015
    %v4036 = vsel %vm1605, %v4005, %v4009
    %v4037 = vsel %vm1605, %v4007, %v4011
    %v4038 = vsel %vm1605, %v4025, %v4005
    %v4039 = vsel %vm1605, %v4027, %v4007
    %v4040 = vld [vmem:[%s8 + $0x30] sm:$0xff]
    %v4042 = vsel %vm2571, %v4040, 0
    %4044 = vmatprep.subr.mxu0 0.0
    %4045 = vmatpush1.msra.mxu0 0.0
    %4046 = vmatprep.subr.mxu0 0.0
    %4047 = vmatpush1.msra.mxu0 0.0
    %4048 = vmatprep.subr.mxu0 0.0
    %4049 = vmatpush1.msra.mxu0 0.0
    %4050 = vmatprep.subr.mxu0 0.0
    %4051 = vmatpush1.msra.mxu0 0.0
    %4052 = vmatprep.subr.mxu0 0.0
    %4053 = vmatpush1.msra.mxu0 0.0
    %4054 = vmatprep.subr.mxu0 0.0
    %4055 = vmatpush1.msra.mxu0 0.0
    %4056 = vmatprep.subr.mxu0 0.0
    %4057 = vmatpush1.msra.mxu0 0.0
    %4058 = vmatprep.subr.mxu0 0.0
    %4059 = vmatpush1.msra.mxu0 0.0
    %4060 = vmatprep.subr.mxu0 0.0
    %4061 = vmatpush1.msra.mxu0 0.0
    %4062 = vmatprep.subr.mxu0 0.0
    %4063 = vmatpush1.msra.mxu0 0.0
    %4064 = vmatprep.subr.mxu0 0.0
    %4065 = vmatpush1.msra.mxu0 0.0
    %4066 = vmatprep.subr.mxu0 0.0
    %4067 = vmatpush1.msra.mxu0 0.0
    %4068 = vmatprep.subr.mxu0 0.0
    %4069 = vmatpush1.msra.mxu0 0.0
    %4070 = vmatprep.subr.mxu0 0.0
    %4071 = vmatpush1.msra.mxu0 0.0
    %4072 = vmatprep.subr.mxu0 %v4035
    %4073 = vmatpush1.msra.mxu0 %v4037
    %4074 = vmatprep.subr.mxu0 %v4034
    %4075 = vmatpush1.msra.mxu0 %v4036
    %4076 = vmatprep.subr.mxu0 0.0
    %4077 = vmatpush2.msra.mxu0 0.0
    %4078 = vmatprep.subr.mxu0 0.0
    %4079 = vmatpush2.msra.mxu0 0.0
    %4080 = vmatprep.subr.mxu0 0.0
    %4081 = vmatpush2.msra.mxu0 0.0
    %4082 = vmatprep.subr.mxu0 0.0
    %4083 = vmatpush2.msra.mxu0 0.0
    %4084 = vmatprep.subr.mxu0 0.0
    %4085 = vmatpush2.msra.mxu0 0.0
    %4086 = vmatprep.subr.mxu0 0.0
    %4087 = vmatpush2.msra.mxu0 0.0
    %4088 = vmatprep.subr.mxu0 0.0
    %4089 = vmatpush2.msra.mxu0 0.0
    %4090 = vmatprep.subr.mxu0 0.0
    %4091 = vmatpush2.msra.mxu0 0.0
    %4092 = vmatprep.subr.mxu0 0.0
    %4093 = vmatpush2.msra.mxu0 0.0
    %4094 = vmatprep.subr.mxu0 0.0
    %4095 = vmatpush2.msra.mxu0 0.0
    %4096 = vmatprep.subr.mxu0 0.0
    %4097 = vmatpush2.msra.mxu0 0.0
    %4098 = vmatprep.subr.mxu0 0.0
    %4099 = vmatpush2.msra.mxu0 0.0
    %4100 = vmatprep.subr.mxu0 0.0
    %4101 = vmatpush2.msra.mxu0 0.0
    %4102 = vmatprep.subr.mxu0 0.0
    %4103 = vmatpush2.msra.mxu0 0.0
    %4104 = vmatprep.subr.mxu0 0.0
    %4105 = vmatpush2.msra.mxu0 0.0
    %4106 = vmatprep.subr.mxu0 0.0
    %4107 = vmatpush2.msra.mxu0 0.0
    %4108 = vmatprep.mubr.f32.mxu0 0.0
    %4109 = vmatmul.mubr.f32.gmra.mxu0 %v4042
    %v4110 = vpop.f32.mrf.mxu0
    %v4111 = vadd.f32 0.0, %v4110
    %v4112 = vpop.f32.mrf.mxu0
    %v4113 = vadd.f32 0.0, %v4112
    %4114 = vdwg.mxu0
    %4115 = vmatprep.subr.mxu0 0.0
    %4116 = vmatpush1.msra.mxu0 0.0
    %4117 = vmatprep.subr.mxu0 0.0
    %4118 = vmatpush1.msra.mxu0 0.0
    %4119 = vmatprep.subr.mxu0 0.0
    %4120 = vmatpush1.msra.mxu0 0.0
    %4121 = vmatprep.subr.mxu0 0.0
    %4122 = vmatpush1.msra.mxu0 0.0
    %4123 = vmatprep.subr.mxu0 0.0
    %4124 = vmatpush1.msra.mxu0 0.0
    %4125 = vmatprep.subr.mxu0 0.0
    %4126 = vmatpush1.msra.mxu0 0.0
    %4127 = vmatprep.subr.mxu0 0.0
    %4128 = vmatpush1.msra.mxu0 0.0
    %4129 = vmatprep.subr.mxu0 0.0
    %4130 = vmatpush1.msra.mxu0 0.0
    %4131 = vmatprep.subr.mxu0 0.0
    %4132 = vmatpush1.msra.mxu0 0.0
    %4133 = vmatprep.subr.mxu0 0.0
    %4134 = vmatpush1.msra.mxu0 0.0
    %4135 = vmatprep.subr.mxu0 0.0
    %4136 = vmatpush1.msra.mxu0 0.0
    %4137 = vmatprep.subr.mxu0 0.0
    %4138 = vmatpush1.msra.mxu0 0.0
    %4139 = vmatprep.subr.mxu0 0.0
    %4140 = vmatpush1.msra.mxu0 0.0
    %4141 = vmatprep.subr.mxu0 0.0
    %4142 = vmatpush1.msra.mxu0 0.0
    %4143 = vmatprep.subr.mxu0 %v4031
    %4144 = vmatpush1.msra.mxu0 %v4033
    %4145 = vmatprep.subr.mxu0 %v4030
    %4146 = vmatpush1.msra.mxu0 %v4032
    %4147 = vmatprep.subr.mxu0 0.0
    %4148 = vmatpush2.msra.mxu0 0.0
    %4149 = vmatprep.subr.mxu0 0.0
    %4150 = vmatpush2.msra.mxu0 0.0
    %4151 = vmatprep.subr.mxu0 0.0
    %4152 = vmatpush2.msra.mxu0 0.0
    %4153 = vmatprep.subr.mxu0 0.0
    %4154 = vmatpush2.msra.mxu0 0.0
    %4155 = vmatprep.subr.mxu0 0.0
    %4156 = vmatpush2.msra.mxu0 0.0
    %4157 = vmatprep.subr.mxu0 0.0
    %4158 = vmatpush2.msra.mxu0 0.0
    %4159 = vmatprep.subr.mxu0 0.0
    %4160 = vmatpush2.msra.mxu0 0.0
    %4161 = vmatprep.subr.mxu0 0.0
    %4162 = vmatpush2.msra.mxu0 0.0
    %4163 = vmatprep.subr.mxu0 0.0
    %4164 = vmatpush2.msra.mxu0 0.0
    %4165 = vmatprep.subr.mxu0 0.0
    %4166 = vmatpush2.msra.mxu0 0.0
    %4167 = vmatprep.subr.mxu0 0.0
    %4168 = vmatpush2.msra.mxu0 0.0
    %4169 = vmatprep.subr.mxu0 0.0
    %4170 = vmatpush2.msra.mxu0 0.0
    %4171 = vmatprep.subr.mxu0 0.0
    %4172 = vmatpush2.msra.mxu0 0.0
    %4173 = vmatprep.subr.mxu0 0.0
    %4174 = vmatpush2.msra.mxu0 0.0
    %4175 = vmatprep.subr.mxu0 0.0
    %4176 = vmatpush2.msra.mxu0 0.0
    %4177 = vmatprep.subr.mxu0 0.0
    %4178 = vmatpush2.msra.mxu0 0.0
    %4179 = vmatprep.mubr.f32.mxu0 0.0
    %4180 = vmatmul.mubr.f32.gmra.mxu0 %v4042
    %v4181 = vpop.f32.mrf.mxu0
    %v4182 = vadd.f32 0.0, %v4181
    %v4183 = vpop.f32.mrf.mxu0
    %v4184 = vadd.f32 0.0, %v4183
    %4185 = vdwg.mxu0
    %4186 = vmatprep.subr.mxu0 0.0
    %4187 = vmatpush1.msra.mxu0 0.0
    %4188 = vmatprep.subr.mxu0 0.0
    %4189 = vmatpush1.msra.mxu0 0.0
    %4190 = vmatprep.subr.mxu0 0.0
    %4191 = vmatpush1.msra.mxu0 0.0
    %4192 = vmatprep.subr.mxu0 0.0
    %4193 = vmatpush1.msra.mxu0 0.0
    %4194 = vmatprep.subr.mxu0 0.0
    %4195 = vmatpush1.msra.mxu0 0.0
    %4196 = vmatprep.subr.mxu0 0.0
    %4197 = vmatpush1.msra.mxu0 0.0
    %4198 = vmatprep.subr.mxu0 0.0
    %4199 = vmatpush1.msra.mxu0 0.0
    %4200 = vmatprep.subr.mxu0 0.0
    %4201 = vmatpush1.msra.mxu0 0.0
    %4202 = vmatprep.subr.mxu0 0.0
    %4203 = vmatpush1.msra.mxu0 0.0
    %4204 = vmatprep.subr.mxu0 0.0
    %4205 = vmatpush1.msra.mxu0 0.0
    %4206 = vmatprep.subr.mxu0 0.0
    %4207 = vmatpush1.msra.mxu0 0.0
    %4208 = vmatprep.subr.mxu0 0.0
    %4209 = vmatpush1.msra.mxu0 0.0
    %4210 = vmatprep.subr.mxu0 0.0
    %4211 = vmatpush1.msra.mxu0 0.0
    %4212 = vmatprep.subr.mxu0 0.0
    %4213 = vmatpush1.msra.mxu0 0.0
    %4214 = vmatprep.subr.mxu0 %v4039
    %4215 = vmatpush1.msra.mxu0 %v4029
    %4216 = vmatprep.subr.mxu0 %v4038
    %4217 = vmatpush1.msra.mxu0 %v4028
    %4218 = vmatprep.subr.mxu0 0.0
    %4219 = vmatpush2.msra.mxu0 0.0
    %4220 = vmatprep.subr.mxu0 0.0
    %4221 = vmatpush2.msra.mxu0 0.0
    %4222 = vmatprep.subr.mxu0 0.0
    %4223 = vmatpush2.msra.mxu0 0.0
    %4224 = vmatprep.subr.mxu0 0.0
    %4225 = vmatpush2.msra.mxu0 0.0
    %4226 = vmatprep.subr.mxu0 0.0
    %4227 = vmatpush2.msra.mxu0 0.0
    %4228 = vmatprep.subr.mxu0 0.0
    %4229 = vmatpush2.msra.mxu0 0.0
    %4230 = vmatprep.subr.mxu0 0.0
    %4231 = vmatpush2.msra.mxu0 0.0
    %4232 = vmatprep.subr.mxu0 0.0
    %4233 = vmatpush2.msra.mxu0 0.0
    %4234 = vmatprep.subr.mxu0 0.0
    %4235 = vmatpush2.msra.mxu0 0.0
    %4236 = vmatprep.subr.mxu0 0.0
    %4237 = vmatpush2.msra.mxu0 0.0
    %4238 = vmatprep.subr.mxu0 0.0
    %4239 = vmatpush2.msra.mxu0 0.0
    %4240 = vmatprep.subr.mxu0 0.0
    %4241 = vmatpush2.msra.mxu0 0.0
    %4242 = vmatprep.subr.mxu0 0.0
    %4243 = vmatpush2.msra.mxu0 0.0
    %4244 = vmatprep.subr.mxu0 0.0
    %4245 = vmatpush2.msra.mxu0 0.0
    %4246 = vmatprep.subr.mxu0 0.0
    %4247 = vmatpush2.msra.mxu0 0.0
    %4248 = vmatprep.subr.mxu0 0.0
    %4249 = vmatpush2.msra.mxu0 0.0
    %4250 = vmatprep.mubr.f32.mxu0 0.0
    %4251 = vmatmul.mubr.f32.gmra.mxu0 %v4042
    %v4252 = vpop.f32.mrf.mxu0
    %v4253 = vadd.f32 0.0, %v4252
    %v4254 = vpop.f32.mrf.mxu0
    %v4255 = vadd.f32 0.0, %v4254
    %4256 = vdwg.mxu0
    %v4257 = vadd.f32 %v3998, %v4111
    %v4258 = vadd.f32 %v3999, %v4113
    %v4259 = vadd.f32 %v4000, %v4182
    %v4260 = vadd.f32 %v4001, %v4184
    %v4261 = vadd.f32 %v4002, %v4253
    %v4262 = vadd.f32 %v4003, %v4255
    %4263 = vrot.lane.b32.xlu0 %v2485, 110
    %v4264 = vpop.permute.xlu0 %4263
    %4265 = vrot.lane.b32.xlu0 %v2491, 110
    %v4266 = vpop.permute.xlu0 %4265
    %4267 = vrot.lane.b32.xlu0 %v2486, 110
    %v4268 = vpop.permute.xlu0 %4267
    %4269 = vrot.lane.b32.xlu0 %v2492, 110
    %v4270 = vpop.permute.xlu0 %4269
    %4271 = vrot.lane.b32.xlu0 %v2487, 110
    %v4272 = vpop.permute.xlu0 %4271
    %4273 = vrot.lane.b32.xlu0 %v2493, 110
    %v4274 = vpop.permute.xlu0 %4273
    %4275 = vrot.lane.b32.xlu0 %v2488, 110
    %v4276 = vpop.permute.xlu0 %4275
    %4277 = vrot.lane.b32.xlu0 %v2494, 110
    %v4278 = vpop.permute.xlu0 %4277
    %4279 = vrot.lane.b32.xlu0 %v2489, 110
    %v4280 = vpop.permute.xlu0 %4279
    %4281 = vrot.lane.b32.xlu0 %v2495, 110
    %v4282 = vpop.permute.xlu0 %4281
    %4283 = vrot.lane.b32.xlu0 %v2490, 110
    %v4284 = vpop.permute.xlu0 %4283
    %4285 = vrot.lane.b32.xlu0 %v2496, 110
    %v4286 = vpop.permute.xlu0 %4285
    %v4287 = vsel %vm1847, %v4280, %v4284
    %v4288 = vsel %vm1847, %v4282, %v4286
    %v4289 = vsel %vm1847, %v4276, %v4280
    %v4290 = vsel %vm1847, %v4278, %v4282
    %v4291 = vsel %vm1847, %v4272, %v4276
    %v4292 = vsel %vm1847, %v4274, %v4278
    %v4293 = vsel %vm1847, %v4268, %v4272
    %v4294 = vsel %vm1847, %v4270, %v4274
    %v4295 = vsel %vm1847, %v4264, %v4268
    %v4296 = vsel %vm1847, %v4266, %v4270
    %v4297 = vsel %vm1847, %v4284, %v4264
    %v4298 = vsel %vm1847, %v4286, %v4266
    %v4299 = vld [vmem:[%s8 + $0x38] sm:$0xff]
    %v4301 = vsel %vm2571, %v4299, 0
    %4303 = vmatprep.subr.mxu0 0.0
    %4304 = vmatpush1.msra.mxu0 0.0
    %4305 = vmatprep.subr.mxu0 0.0
    %4306 = vmatpush1.msra.mxu0 0.0
    %4307 = vmatprep.subr.mxu0 0.0
    %4308 = vmatpush1.msra.mxu0 0.0
    %4309 = vmatprep.subr.mxu0 0.0
    %4310 = vmatpush1.msra.mxu0 0.0
    %4311 = vmatprep.subr.mxu0 0.0
    %4312 = vmatpush1.msra.mxu0 0.0
    %4313 = vmatprep.subr.mxu0 0.0
    %4314 = vmatpush1.msra.mxu0 0.0
    %4315 = vmatprep.subr.mxu0 0.0
    %4316 = vmatpush1.msra.mxu0 0.0
    %4317 = vmatprep.subr.mxu0 0.0
    %4318 = vmatpush1.msra.mxu0 0.0
    %4319 = vmatprep.subr.mxu0 0.0
    %4320 = vmatpush1.msra.mxu0 0.0
    %4321 = vmatprep.subr.mxu0 0.0
    %4322 = vmatpush1.msra.mxu0 0.0
    %4323 = vmatprep.subr.mxu0 0.0
    %4324 = vmatpush1.msra.mxu0 0.0
    %4325 = vmatprep.subr.mxu0 0.0
    %4326 = vmatpush1.msra.mxu0 0.0
    %4327 = vmatprep.subr.mxu0 0.0
    %4328 = vmatpush1.msra.mxu0 0.0
    %4329 = vmatprep.subr.mxu0 0.0
    %4330 = vmatpush1.msra.mxu0 0.0
    %4331 = vmatprep.subr.mxu0 %v4294
    %4332 = vmatpush1.msra.mxu0 %v4296
    %4333 = vmatprep.subr.mxu0 %v4293
    %4334 = vmatpush1.msra.mxu0 %v4295
    %4335 = vmatprep.subr.mxu0 0.0
    %4336 = vmatpush2.msra.mxu0 0.0
    %4337 = vmatprep.subr.mxu0 0.0
    %4338 = vmatpush2.msra.mxu0 0.0
    %4339 = vmatprep.subr.mxu0 0.0
    %4340 = vmatpush2.msra.mxu0 0.0
    %4341 = vmatprep.subr.mxu0 0.0
    %4342 = vmatpush2.msra.mxu0 0.0
    %4343 = vmatprep.subr.mxu0 0.0
    %4344 = vmatpush2.msra.mxu0 0.0
    %4345 = vmatprep.subr.mxu0 0.0
    %4346 = vmatpush2.msra.mxu0 0.0
    %4347 = vmatprep.subr.mxu0 0.0
    %4348 = vmatpush2.msra.mxu0 0.0
    %4349 = vmatprep.subr.mxu0 0.0
    %4350 = vmatpush2.msra.mxu0 0.0
    %4351 = vmatprep.subr.mxu0 0.0
    %4352 = vmatpush2.msra.mxu0 0.0
    %4353 = vmatprep.subr.mxu0 0.0
    %4354 = vmatpush2.msra.mxu0 0.0
    %4355 = vmatprep.subr.mxu0 0.0
    %4356 = vmatpush2.msra.mxu0 0.0
    %4357 = vmatprep.subr.mxu0 0.0
    %4358 = vmatpush2.msra.mxu0 0.0
    %4359 = vmatprep.subr.mxu0 0.0
    %4360 = vmatpush2.msra.mxu0 0.0
    %4361 = vmatprep.subr.mxu0 0.0
    %4362 = vmatpush2.msra.mxu0 0.0
    %4363 = vmatprep.subr.mxu0 0.0
    %4364 = vmatpush2.msra.mxu0 0.0
    %4365 = vmatprep.subr.mxu0 0.0
    %4366 = vmatpush2.msra.mxu0 0.0
    %4367 = vmatprep.mubr.f32.mxu0 0.0
    %4368 = vmatmul.mubr.f32.gmra.mxu0 %v4301
    %v4369 = vpop.f32.mrf.mxu0
    %v4370 = vadd.f32 0.0, %v4369
    %v4371 = vpop.f32.mrf.mxu0
    %v4372 = vadd.f32 0.0, %v4371
    %4373 = vdwg.mxu0
    %4374 = vmatprep.subr.mxu0 0.0
    %4375 = vmatpush1.msra.mxu0 0.0
    %4376 = vmatprep.subr.mxu0 0.0
    %4377 = vmatpush1.msra.mxu0 0.0
    %4378 = vmatprep.subr.mxu0 0.0
    %4379 = vmatpush1.msra.mxu0 0.0
    %4380 = vmatprep.subr.mxu0 0.0
    %4381 = vmatpush1.msra.mxu0 0.0
    %4382 = vmatprep.subr.mxu0 0.0
    %4383 = vmatpush1.msra.mxu0 0.0
    %4384 = vmatprep.subr.mxu0 0.0
    %4385 = vmatpush1.msra.mxu0 0.0
    %4386 = vmatprep.subr.mxu0 0.0
    %4387 = vmatpush1.msra.mxu0 0.0
    %4388 = vmatprep.subr.mxu0 0.0
    %4389 = vmatpush1.msra.mxu0 0.0
    %4390 = vmatprep.subr.mxu0 0.0
    %4391 = vmatpush1.msra.mxu0 0.0
    %4392 = vmatprep.subr.mxu0 0.0
    %4393 = vmatpush1.msra.mxu0 0.0
    %4394 = vmatprep.subr.mxu0 0.0
    %4395 = vmatpush1.msra.mxu0 0.0
    %4396 = vmatprep.subr.mxu0 0.0
    %4397 = vmatpush1.msra.mxu0 0.0
    %4398 = vmatprep.subr.mxu0 0.0
    %4399 = vmatpush1.msra.mxu0 0.0
    %4400 = vmatprep.subr.mxu0 0.0
    %4401 = vmatpush1.msra.mxu0 0.0
    %4402 = vmatprep.subr.mxu0 %v4290
    %4403 = vmatpush1.msra.mxu0 %v4292
    %4404 = vmatprep.subr.mxu0 %v4289
    %4405 = vmatpush1.msra.mxu0 %v4291
    %4406 = vmatprep.subr.mxu0 0.0
    %4407 = vmatpush2.msra.mxu0 0.0
    %4408 = vmatprep.subr.mxu0 0.0
    %4409 = vmatpush2.msra.mxu0 0.0
    %4410 = vmatprep.subr.mxu0 0.0
    %4411 = vmatpush2.msra.mxu0 0.0
    %4412 = vmatprep.subr.mxu0 0.0
    %4413 = vmatpush2.msra.mxu0 0.0
    %4414 = vmatprep.subr.mxu0 0.0
    %4415 = vmatpush2.msra.mxu0 0.0
    %4416 = vmatprep.subr.mxu0 0.0
    %4417 = vmatpush2.msra.mxu0 0.0
    %4418 = vmatprep.subr.mxu0 0.0
    %4419 = vmatpush2.msra.mxu0 0.0
    %4420 = vmatprep.subr.mxu0 0.0
    %4421 = vmatpush2.msra.mxu0 0.0
    %4422 = vmatprep.subr.mxu0 0.0
    %4423 = vmatpush2.msra.mxu0 0.0
    %4424 = vmatprep.subr.mxu0 0.0
    %4425 = vmatpush2.msra.mxu0 0.0
    %4426 = vmatprep.subr.mxu0 0.0
    %4427 = vmatpush2.msra.mxu0 0.0
    %4428 = vmatprep.subr.mxu0 0.0
    %4429 = vmatpush2.msra.mxu0 0.0
    %4430 = vmatprep.subr.mxu0 0.0
    %4431 = vmatpush2.msra.mxu0 0.0
    %4432 = vmatprep.subr.mxu0 0.0
    %4433 = vmatpush2.msra.mxu0 0.0
    %4434 = vmatprep.subr.mxu0 0.0
    %4435 = vmatpush2.msra.mxu0 0.0
    %4436 = vmatprep.subr.mxu0 0.0
    %4437 = vmatpush2.msra.mxu0 0.0
    %4438 = vmatprep.mubr.f32.mxu0 0.0
    %4439 = vmatmul.mubr.f32.gmra.mxu0 %v4301
    %v4440 = vpop.f32.mrf.mxu0
    %v4441 = vadd.f32 0.0, %v4440
    %v4442 = vpop.f32.mrf.mxu0
    %v4443 = vadd.f32 0.0, %v4442
    %4444 = vdwg.mxu0
    %4445 = vmatprep.subr.mxu0 0.0
    %4446 = vmatpush1.msra.mxu0 0.0
    %4447 = vmatprep.subr.mxu0 0.0
    %4448 = vmatpush1.msra.mxu0 0.0
    %4449 = vmatprep.subr.mxu0 0.0
    %4450 = vmatpush1.msra.mxu0 0.0
    %4451 = vmatprep.subr.mxu0 0.0
    %4452 = vmatpush1.msra.mxu0 0.0
    %4453 = vmatprep.subr.mxu0 0.0
    %4454 = vmatpush1.msra.mxu0 0.0
    %4455 = vmatprep.subr.mxu0 0.0
    %4456 = vmatpush1.msra.mxu0 0.0
    %4457 = vmatprep.subr.mxu0 0.0
    %4458 = vmatpush1.msra.mxu0 0.0
    %4459 = vmatprep.subr.mxu0 0.0
    %4460 = vmatpush1.msra.mxu0 0.0
    %4461 = vmatprep.subr.mxu0 0.0
    %4462 = vmatpush1.msra.mxu0 0.0
    %4463 = vmatprep.subr.mxu0 0.0
    %4464 = vmatpush1.msra.mxu0 0.0
    %4465 = vmatprep.subr.mxu0 0.0
    %4466 = vmatpush1.msra.mxu0 0.0
    %4467 = vmatprep.subr.mxu0 0.0
    %4468 = vmatpush1.msra.mxu0 0.0
    %4469 = vmatprep.subr.mxu0 0.0
    %4470 = vmatpush1.msra.mxu0 0.0
    %4471 = vmatprep.subr.mxu0 0.0
    %4472 = vmatpush1.msra.mxu0 0.0
    %4473 = vmatprep.subr.mxu0 %v4298
    %4474 = vmatpush1.msra.mxu0 %v4288
    %4475 = vmatprep.subr.mxu0 %v4297
    %4476 = vmatpush1.msra.mxu0 %v4287
    %4477 = vmatprep.subr.mxu0 0.0
    %4478 = vmatpush2.msra.mxu0 0.0
    %4479 = vmatprep.subr.mxu0 0.0
    %4480 = vmatpush2.msra.mxu0 0.0
    %4481 = vmatprep.subr.mxu0 0.0
    %4482 = vmatpush2.msra.mxu0 0.0
    %4483 = vmatprep.subr.mxu0 0.0
    %4484 = vmatpush2.msra.mxu0 0.0
    %4485 = vmatprep.subr.mxu0 0.0
    %4486 = vmatpush2.msra.mxu0 0.0
    %4487 = vmatprep.subr.mxu0 0.0
    %4488 = vmatpush2.msra.mxu0 0.0
    %4489 = vmatprep.subr.mxu0 0.0
    %4490 = vmatpush2.msra.mxu0 0.0
    %4491 = vmatprep.subr.mxu0 0.0
    %4492 = vmatpush2.msra.mxu0 0.0
    %4493 = vmatprep.subr.mxu0 0.0
    %4494 = vmatpush2.msra.mxu0 0.0
    %4495 = vmatprep.subr.mxu0 0.0
    %4496 = vmatpush2.msra.mxu0 0.0
    %4497 = vmatprep.subr.mxu0 0.0
    %4498 = vmatpush2.msra.mxu0 0.0
    %4499 = vmatprep.subr.mxu0 0.0
    %4500 = vmatpush2.msra.mxu0 0.0
    %4501 = vmatprep.subr.mxu0 0.0
    %4502 = vmatpush2.msra.mxu0 0.0
    %4503 = vmatprep.subr.mxu0 0.0
    %4504 = vmatpush2.msra.mxu0 0.0
    %4505 = vmatprep.subr.mxu0 0.0
    %4506 = vmatpush2.msra.mxu0 0.0
    %4507 = vmatprep.subr.mxu0 0.0
    %4508 = vmatpush2.msra.mxu0 0.0
    %4509 = vmatprep.mubr.f32.mxu0 0.0
    %4510 = vmatmul.mubr.f32.gmra.mxu0 %v4301
    %v4511 = vpop.f32.mrf.mxu0
    %v4512 = vadd.f32 0.0, %v4511
    %v4513 = vpop.f32.mrf.mxu0
    %v4514 = vadd.f32 0.0, %v4513
    %4515 = vdwg.mxu0
    %v4516 = vadd.f32 %v4257, %v4370
    %v4517 = vadd.f32 %v4258, %v4372
    %v4518 = vadd.f32 %v4259, %v4441
    %v4519 = vadd.f32 %v4260, %v4443
    %v4520 = vadd.f32 %v4261, %v4512
    %v4521 = vadd.f32 %v4262, %v4514
    %4522 = vrot.lane.b32.xlu0 %v2485, 109
    %v4523 = vpop.permute.xlu0 %4522
    %4524 = vrot.lane.b32.xlu0 %v2491, 109
    %v4525 = vpop.permute.xlu0 %4524
    %4526 = vrot.lane.b32.xlu0 %v2486, 109
    %v4527 = vpop.permute.xlu0 %4526
    %4528 = vrot.lane.b32.xlu0 %v2492, 109
    %v4529 = vpop.permute.xlu0 %4528
    %4530 = vrot.lane.b32.xlu0 %v2487, 109
    %v4531 = vpop.permute.xlu0 %4530
    %4532 = vrot.lane.b32.xlu0 %v2493, 109
    %v4533 = vpop.permute.xlu0 %4532
    %4534 = vrot.lane.b32.xlu0 %v2488, 109
    %v4535 = vpop.permute.xlu0 %4534
    %4536 = vrot.lane.b32.xlu0 %v2494, 109
    %v4537 = vpop.permute.xlu0 %4536
    %4538 = vrot.lane.b32.xlu0 %v2489, 109
    %v4539 = vpop.permute.xlu0 %4538
    %4540 = vrot.lane.b32.xlu0 %v2495, 109
    %v4541 = vpop.permute.xlu0 %4540
    %4542 = vrot.lane.b32.xlu0 %v2490, 109
    %v4543 = vpop.permute.xlu0 %4542
    %4544 = vrot.lane.b32.xlu0 %v2496, 109
    %v4545 = vpop.permute.xlu0 %4544
    %v4546 = vsel %vm2089, %v4539, %v4543
    %v4547 = vsel %vm2089, %v4541, %v4545
    %v4548 = vsel %vm2089, %v4535, %v4539
    %v4549 = vsel %vm2089, %v4537, %v4541
    %v4550 = vsel %vm2089, %v4531, %v4535
    %v4551 = vsel %vm2089, %v4533, %v4537
    %v4552 = vsel %vm2089, %v4527, %v4531
    %v4553 = vsel %vm2089, %v4529, %v4533
    %v4554 = vsel %vm2089, %v4523, %v4527
    %v4555 = vsel %vm2089, %v4525, %v4529
    %v4556 = vsel %vm2089, %v4543, %v4523
    %v4557 = vsel %vm2089, %v4545, %v4525
    %v4558 = vld [vmem:[%s8 + $0x40] sm:$0xff]
    %v4560 = vsel %vm2571, %v4558, 0
    %4562 = vmatprep.subr.mxu0 0.0
    %4563 = vmatpush1.msra.mxu0 0.0
    %4564 = vmatprep.subr.mxu0 0.0
    %4565 = vmatpush1.msra.mxu0 0.0
    %4566 = vmatprep.subr.mxu0 0.0
    %4567 = vmatpush1.msra.mxu0 0.0
    %4568 = vmatprep.subr.mxu0 0.0
    %4569 = vmatpush1.msra.mxu0 0.0
    %4570 = vmatprep.subr.mxu0 0.0
    %4571 = vmatpush1.msra.mxu0 0.0
    %4572 = vmatprep.subr.mxu0 0.0
    %4573 = vmatpush1.msra.mxu0 0.0
    %4574 = vmatprep.subr.mxu0 0.0
    %4575 = vmatpush1.msra.mxu0 0.0
    %4576 = vmatprep.subr.mxu0 0.0
    %4577 = vmatpush1.msra.mxu0 0.0
    %4578 = vmatprep.subr.mxu0 0.0
    %4579 = vmatpush1.msra.mxu0 0.0
    %4580 = vmatprep.subr.mxu0 0.0
    %4581 = vmatpush1.msra.mxu0 0.0
    %4582 = vmatprep.subr.mxu0 0.0
    %4583 = vmatpush1.msra.mxu0 0.0
    %4584 = vmatprep.subr.mxu0 0.0
    %4585 = vmatpush1.msra.mxu0 0.0
    %4586 = vmatprep.subr.mxu0 0.0
    %4587 = vmatpush1.msra.mxu0 0.0
    %4588 = vmatprep.subr.mxu0 0.0
    %4589 = vmatpush1.msra.mxu0 0.0
    %4590 = vmatprep.subr.mxu0 %v4553
    %4591 = vmatpush1.msra.mxu0 %v4555
    %4592 = vmatprep.subr.mxu0 %v4552
    %4593 = vmatpush1.msra.mxu0 %v4554
    %4594 = vmatprep.subr.mxu0 0.0
    %4595 = vmatpush2.msra.mxu0 0.0
    %4596 = vmatprep.subr.mxu0 0.0
    %4597 = vmatpush2.msra.mxu0 0.0
    %4598 = vmatprep.subr.mxu0 0.0
    %4599 = vmatpush2.msra.mxu0 0.0
    %4600 = vmatprep.subr.mxu0 0.0
    %4601 = vmatpush2.msra.mxu0 0.0
    %4602 = vmatprep.subr.mxu0 0.0
    %4603 = vmatpush2.msra.mxu0 0.0
    %4604 = vmatprep.subr.mxu0 0.0
    %4605 = vmatpush2.msra.mxu0 0.0
    %4606 = vmatprep.subr.mxu0 0.0
    %4607 = vmatpush2.msra.mxu0 0.0
    %4608 = vmatprep.subr.mxu0 0.0
    %4609 = vmatpush2.msra.mxu0 0.0
    %4610 = vmatprep.subr.mxu0 0.0
    %4611 = vmatpush2.msra.mxu0 0.0
    %4612 = vmatprep.subr.mxu0 0.0
    %4613 = vmatpush2.msra.mxu0 0.0
    %4614 = vmatprep.subr.mxu0 0.0
    %4615 = vmatpush2.msra.mxu0 0.0
    %4616 = vmatprep.subr.mxu0 0.0
    %4617 = vmatpush2.msra.mxu0 0.0
    %4618 = vmatprep.subr.mxu0 0.0
    %4619 = vmatpush2.msra.mxu0 0.0
    %4620 = vmatprep.subr.mxu0 0.0
    %4621 = vmatpush2.msra.mxu0 0.0
    %4622 = vmatprep.subr.mxu0 0.0
    %4623 = vmatpush2.msra.mxu0 0.0
    %4624 = vmatprep.subr.mxu0 0.0
    %4625 = vmatpush2.msra.mxu0 0.0
    %4626 = vmatprep.mubr.f32.mxu0 0.0
    %4627 = vmatmul.mubr.f32.gmra.mxu0 %v4560
    %v4628 = vpop.f32.mrf.mxu0
    %v4629 = vadd.f32 0.0, %v4628
    %v4630 = vpop.f32.mrf.mxu0
    %v4631 = vadd.f32 0.0, %v4630
    %4632 = vdwg.mxu0
    %4633 = vmatprep.subr.mxu0 0.0
    %4634 = vmatpush1.msra.mxu0 0.0
    %4635 = vmatprep.subr.mxu0 0.0
    %4636 = vmatpush1.msra.mxu0 0.0
    %4637 = vmatprep.subr.mxu0 0.0
    %4638 = vmatpush1.msra.mxu0 0.0
    %4639 = vmatprep.subr.mxu0 0.0
    %4640 = vmatpush1.msra.mxu0 0.0
    %4641 = vmatprep.subr.mxu0 0.0
    %4642 = vmatpush1.msra.mxu0 0.0
    %4643 = vmatprep.subr.mxu0 0.0
    %4644 = vmatpush1.msra.mxu0 0.0
    %4645 = vmatprep.subr.mxu0 0.0
    %4646 = vmatpush1.msra.mxu0 0.0
    %4647 = vmatprep.subr.mxu0 0.0
    %4648 = vmatpush1.msra.mxu0 0.0
    %4649 = vmatprep.subr.mxu0 0.0
    %4650 = vmatpush1.msra.mxu0 0.0
    %4651 = vmatprep.subr.mxu0 0.0
    %4652 = vmatpush1.msra.mxu0 0.0
    %4653 = vmatprep.subr.mxu0 0.0
    %4654 = vmatpush1.msra.mxu0 0.0
    %4655 = vmatprep.subr.mxu0 0.0
    %4656 = vmatpush1.msra.mxu0 0.0
    %4657 = vmatprep.subr.mxu0 0.0
    %4658 = vmatpush1.msra.mxu0 0.0
    %4659 = vmatprep.subr.mxu0 0.0
    %4660 = vmatpush1.msra.mxu0 0.0
    %4661 = vmatprep.subr.mxu0 %v4549
    %4662 = vmatpush1.msra.mxu0 %v4551
    %4663 = vmatprep.subr.mxu0 %v4548
    %4664 = vmatpush1.msra.mxu0 %v4550
    %4665 = vmatprep.subr.mxu0 0.0
    %4666 = vmatpush2.msra.mxu0 0.0
    %4667 = vmatprep.subr.mxu0 0.0
    %4668 = vmatpush2.msra.mxu0 0.0
    %4669 = vmatprep.subr.mxu0 0.0
    %4670 = vmatpush2.msra.mxu0 0.0
    %4671 = vmatprep.subr.mxu0 0.0
    %4672 = vmatpush2.msra.mxu0 0.0
    %4673 = vmatprep.subr.mxu0 0.0
    %4674 = vmatpush2.msra.mxu0 0.0
    %4675 = vmatprep.subr.mxu0 0.0
    %4676 = vmatpush2.msra.mxu0 0.0
    %4677 = vmatprep.subr.mxu0 0.0
    %4678 = vmatpush2.msra.mxu0 0.0
    %4679 = vmatprep.subr.mxu0 0.0
    %4680 = vmatpush2.msra.mxu0 0.0
    %4681 = vmatprep.subr.mxu0 0.0
    %4682 = vmatpush2.msra.mxu0 0.0
    %4683 = vmatprep.subr.mxu0 0.0
    %4684 = vmatpush2.msra.mxu0 0.0
    %4685 = vmatprep.subr.mxu0 0.0
    %4686 = vmatpush2.msra.mxu0 0.0
    %4687 = vmatprep.subr.mxu0 0.0
    %4688 = vmatpush2.msra.mxu0 0.0
    %4689 = vmatprep.subr.mxu0 0.0
    %4690 = vmatpush2.msra.mxu0 0.0
    %4691 = vmatprep.subr.mxu0 0.0
    %4692 = vmatpush2.msra.mxu0 0.0
    %4693 = vmatprep.subr.mxu0 0.0
    %4694 = vmatpush2.msra.mxu0 0.0
    %4695 = vmatprep.subr.mxu0 0.0
    %4696 = vmatpush2.msra.mxu0 0.0
    %4697 = vmatprep.mubr.f32.mxu0 0.0
    %4698 = vmatmul.mubr.f32.gmra.mxu0 %v4560
    %v4699 = vpop.f32.mrf.mxu0
    %v4700 = vadd.f32 0.0, %v4699
    %v4701 = vpop.f32.mrf.mxu0
    %v4702 = vadd.f32 0.0, %v4701
    %4703 = vdwg.mxu0
    %4704 = vmatprep.subr.mxu0 0.0
    %4705 = vmatpush1.msra.mxu0 0.0
    %4706 = vmatprep.subr.mxu0 0.0
    %4707 = vmatpush1.msra.mxu0 0.0
    %4708 = vmatprep.subr.mxu0 0.0
    %4709 = vmatpush1.msra.mxu0 0.0
    %4710 = vmatprep.subr.mxu0 0.0
    %4711 = vmatpush1.msra.mxu0 0.0
    %4712 = vmatprep.subr.mxu0 0.0
    %4713 = vmatpush1.msra.mxu0 0.0
    %4714 = vmatprep.subr.mxu0 0.0
    %4715 = vmatpush1.msra.mxu0 0.0
    %4716 = vmatprep.subr.mxu0 0.0
    %4717 = vmatpush1.msra.mxu0 0.0
    %4718 = vmatprep.subr.mxu0 0.0
    %4719 = vmatpush1.msra.mxu0 0.0
    %4720 = vmatprep.subr.mxu0 0.0
    %4721 = vmatpush1.msra.mxu0 0.0
    %4722 = vmatprep.subr.mxu0 0.0
    %4723 = vmatpush1.msra.mxu0 0.0
    %4724 = vmatprep.subr.mxu0 0.0
    %4725 = vmatpush1.msra.mxu0 0.0
    %4726 = vmatprep.subr.mxu0 0.0
    %4727 = vmatpush1.msra.mxu0 0.0
    %4728 = vmatprep.subr.mxu0 0.0
    %4729 = vmatpush1.msra.mxu0 0.0
    %4730 = vmatprep.subr.mxu0 0.0
    %4731 = vmatpush1.msra.mxu0 0.0
    %4732 = vmatprep.subr.mxu0 %v4557
    %4733 = vmatpush1.msra.mxu0 %v4547
    %4734 = vmatprep.subr.mxu0 %v4556
    %4735 = vmatpush1.msra.mxu0 %v4546
    %4736 = vmatprep.subr.mxu0 0.0
    %4737 = vmatpush2.msra.mxu0 0.0
    %4738 = vmatprep.subr.mxu0 0.0
    %4739 = vmatpush2.msra.mxu0 0.0
    %4740 = vmatprep.subr.mxu0 0.0
    %4741 = vmatpush2.msra.mxu0 0.0
    %4742 = vmatprep.subr.mxu0 0.0
    %4743 = vmatpush2.msra.mxu0 0.0
    %4744 = vmatprep.subr.mxu0 0.0
    %4745 = vmatpush2.msra.mxu0 0.0
    %4746 = vmatprep.subr.mxu0 0.0
    %4747 = vmatpush2.msra.mxu0 0.0
    %4748 = vmatprep.subr.mxu0 0.0
    %4749 = vmatpush2.msra.mxu0 0.0
    %4750 = vmatprep.subr.mxu0 0.0
    %4751 = vmatpush2.msra.mxu0 0.0
    %4752 = vmatprep.subr.mxu0 0.0
    %4753 = vmatpush2.msra.mxu0 0.0
    %4754 = vmatprep.subr.mxu0 0.0
    %4755 = vmatpush2.msra.mxu0 0.0
    %4756 = vmatprep.subr.mxu0 0.0
    %4757 = vmatpush2.msra.mxu0 0.0
    %4758 = vmatprep.subr.mxu0 0.0
    %4759 = vmatpush2.msra.mxu0 0.0
    %4760 = vmatprep.subr.mxu0 0.0
    %4761 = vmatpush2.msra.mxu0 0.0
    %4762 = vmatprep.subr.mxu0 0.0
    %4763 = vmatpush2.msra.mxu0 0.0
    %4764 = vmatprep.subr.mxu0 0.0
    %4765 = vmatpush2.msra.mxu0 0.0
    %4766 = vmatprep.subr.mxu0 0.0
    %4767 = vmatpush2.msra.mxu0 0.0
    %4768 = vmatprep.mubr.f32.mxu0 0.0
    %4769 = vmatmul.mubr.f32.gmra.mxu0 %v4560
    %v4770 = vpop.f32.mrf.mxu0
    %v4771 = vadd.f32 0.0, %v4770
    %v4772 = vpop.f32.mrf.mxu0
    %v4773 = vadd.f32 0.0, %v4772
    %4774 = vdwg.mxu0
    %v4775 = vadd.f32 %v4516, %v4629
    %v4776 = vadd.f32 %v4517, %v4631
    %v4777 = vadd.f32 %v4518, %v4700
    %v4778 = vadd.f32 %v4519, %v4702
    %v4779 = vadd.f32 %v4520, %v4771
    %v4780 = vadd.f32 %v4521, %v4773
    %v4781 = vld [vmem:[%s9] sm:$0xff]
    %4783 = vset.pattern.permute.xlu0 0
    %4784 = vperm.xlu0 %4783, %v4781
    %v4785 = vpop.permute.xlu0 %4784
    %v4787 = vadd.f32 %v4775, %v4785
    %v4788 = vadd.f32 %v4776, %v4785
    %v4789 = vadd.f32 %v4777, %v4785
    %v4790 = vadd.f32 %v4778, %v4785
    %v4791 = vadd.f32 %v4779, %v4785
    %v4792 = vadd.f32 %v4780, %v4785
    %v4793 = vmul.f32 %v4787, %v124
    %v4794 = vmul.f32 %v4788, %v128
    %v4795 = vmul.f32 %v4789, %v132
    %v4796 = vmul.f32 %v4790, %v136
    %v4797 = vmul.f32 %v4791, %v140
    %v4798 = vmul.f32 %v4792, %v144
    %4799 = vst [vmem:[#allocation5 + $0x60] sm:$0xff] %v4793
    %4800 = vst [vmem:[#allocation5 + $0x68] sm:$0xff] %v4794
    %4801 = vst [vmem:[#allocation5 + $0x70] sm:$0xff] %v4795
    %4802 = vst [vmem:[#allocation5 + $0x78] sm:$0xff] %v4796
    %4803 = vst [vmem:[#allocation5 + $0x80] sm:$0xff] %v4797
    %4804 = vst [vmem:[#allocation5 + $0x88] sm:$0xff] %v4798
    // Predicated region
    $region42: #{tpu_custom_call.1} parent=1 // pred_check
      _
    $region43: #{tpu_custom_call.1} parent=1 // pred_check_branch
      %4806 = sbr.rel (0) target = $region45
    $region44: #{tpu_custom_call.1} parent=1 // pred_region
      %s4808 = ssub.s32 2304, 2304
      %4809 = vsyncadd [#allocation6], %s4808
      %s4810 = sshll.u32 [#allocation5], 4
      %s4811 = int_to_ptr.vmem [resolvable:$true] %s4810
      %4816 = dma.vmem_to_hbm [thread:$0]  %s4811, 2304, %s10, [#allocation6], 768, 768, 48
    $region45: #{tpu_custom_call.1} parent=1 // pred_fallthru
      _
    // Predicated region
    $region46: #{tpu_custom_call.1} parent=1 // pred_check
      _
    $region47: #{tpu_custom_call.1} parent=1 // pred_check_branch
      %4818 = sbr.rel (0) target = $region49
    $region48: #{tpu_custom_call.1} parent=1 // pred_region
      %4819 = dma.done [#allocation6], 2304
    $region49: #{tpu_custom_call.1} parent=1 // pred_fallthru
      _
    %4820 = vsyncpa [#allocation6], 1

</llo_original>
